<compile_context>
chip_gen: v7x
topology: tpu7x:2x2x1
jax: 0.10.0
libtpu: 0.0.40
codegen_flags: <defaults>
</compile_context>

<pallas_src>
import jax
import jax.numpy as jnp
from jax.experimental import pallas as pl
from jax.experimental.pallas import tpu as pltpu

BN_EPS = 1e-5
NUM_HEADS = 8


def _full_spec(a):
    nd = a.ndim
    return pl.BlockSpec(a.shape, lambda i, _nd=nd: (0,) * _nd)


# ---------------------------------------------------------------------------
# Fused kernel: conv1/2/3 (+folded BN, ReLU) -> pool -> MHA -> fc1 -> fc2,
# B_TILE batch elements per grid step, all intermediates in VMEM/vregs.
# ---------------------------------------------------------------------------
def _fused_kernel(x_ref, w1_ref, b1_ref, w2_ref, b2_ref, w3_ref, b3_ref,
                  wqkv_ref, bqkv_ref, wtail_ref, btail_ref,
                  out_ref, attn_ref):
    BT, L, cin = x_ref.shape
    E = wqkv_ref.shape[0]
    out_dim = out_ref.shape[1]
    H = NUM_HEADS
    D = E // H
    M = BT * L
    inv_l = 1.0 / float(L)
    scale = 1.0 / float(D) ** 0.5

    # Local (within-sequence) index of every flattened row, for the conv
    # boundary masks (rows with no valid previous / next row inside their
    # own sequence).
    local = jax.lax.broadcasted_iota(jnp.int32, (BT, L, 1), 1).reshape(M, 1)
    has_prev = local != 0
    has_next = local != (L - 1)

    def conv_bn_relu(h, w_ref, b_ref):
        # Conv1d(kernel=3, padding=1) + folded BN + ReLU on the stacked M
        # rows: three accumulating matmuls against the per-tap (C, Cout)
        # weights (no (M, 3C) window materialization).
        C = h.shape[1]
        zrow = jnp.zeros((1, C), jnp.float32)
        h_prev = jnp.where(has_prev,
                           jnp.concatenate([zrow, h[:M - 1]], axis=0), 0.0)
        h_next = jnp.where(has_next,
                           jnp.concatenate([h[1:M], zrow], axis=0), 0.0)
        y = jnp.dot(h_prev.astype(jnp.bfloat16), w_ref[0],
                    preferred_element_type=jnp.float32)
        y = y + jnp.dot(h.astype(jnp.bfloat16), w_ref[1],
                        preferred_element_type=jnp.float32)
        y = y + jnp.dot(h_next.astype(jnp.bfloat16), w_ref[2],
                        preferred_element_type=jnp.float32)
        return jnp.maximum(y + b_ref[...], 0.0)          # bias + ReLU in f32

    h = x_ref[...].astype(jnp.float32).reshape(M, cin)   # (M, Cin)
    h = conv_bn_relu(h, w1_ref, b1_ref)                  # (M, 64)
    h = conv_bn_relu(h, w2_ref, b2_ref)                  # (M, 128)
    feat = conv_bn_relu(h, w3_ref, b3_ref)               # (M, 256) f32

    # AdaptiveAvgPool1d(1).squeeze(-1): per-element mean over the sequence.
    pooled = jnp.sum(feat.reshape(BT, L, E), axis=1) * inv_l         # (BT, E)

    # Packed QKV projection: one (M, E) @ (E, 3E) matmul over the whole tile.
    qkv = jnp.dot(feat.astype(jnp.bfloat16), wqkv_ref[...],
                  preferred_element_type=jnp.float32) + bqkv_ref[...]
    qkv_bf = qkv.astype(jnp.bfloat16)
    q = qkv_bf[:, 0:E].reshape(BT, L, E)
    k = qkv_bf[:, E:2 * E].reshape(BT, L, E)
    v = qkv_bf[:, 2 * E:3 * E].reshape(BT, L, E)

    # Multi-head attention, batched over the B_TILE axis inside each head.
    # The per-head context is pooled over queries BEFORE out_proj (the mean
    # over the sequence commutes with the linear output projection).
    attn_sum = jnp.zeros((BT, L, L), jnp.float32)
    ctx_parts = []
    for hh in range(H):
        sl = slice(hh * D, (hh + 1) * D)
        s = jnp.einsum('bqd,bkd->bqk', q[:, :, sl], k[:, :, sl],
                       preferred_element_type=jnp.float32) * scale  # (BT,L,L)
        s = s - jnp.max(s, axis=-1, keepdims=True)
        es = jnp.exp(s)
        p = es / jnp.sum(es, axis=-1, keepdims=True)                 # exact softmax
        attn_sum = attn_sum + p
        p_mean = jnp.sum(p, axis=1, keepdims=True) * inv_l           # (BT,1,L)
        ctx_parts.append(jnp.einsum('bqk,bkd->bqd',
                                    p_mean.astype(jnp.bfloat16), v[:, :, sl],
                                    preferred_element_type=jnp.float32))
    ctx = jnp.concatenate(ctx_parts, axis=-1).reshape(BT, E)         # (BT, E)

    # Packed tail: [out_proj | fc1 | fc2] at 128-aligned lane offsets.
    wo = wtail_ref[:, 0:E]
    wf1 = wtail_ref[:, E:2 * E]
    wf2 = wtail_ref[:, 2 * E:2 * E + out_dim]
    bo = btail_ref[:, 0:E]
    bf1 = btail_ref[:, E:2 * E]
    bf2 = btail_ref[:, 2 * E:2 * E + out_dim]

    attended_pooled = jnp.dot(ctx.astype(jnp.bfloat16), wo,
                              preferred_element_type=jnp.float32) + bo
    combined = pooled + attended_pooled                              # (BT, E)
    h1 = jnp.maximum(jnp.dot(combined.astype(jnp.bfloat16), wf1,
                             preferred_element_type=jnp.float32) + bf1, 0.0)
    # Dropout(0.3) is identity in inference mode.
    out = jnp.dot(h1.astype(jnp.bfloat16), wf2,
                  preferred_element_type=jnp.float32) + bf2          # (BT, out)

    out_ref[...] = out                                   # lane-dense (BT, 128)
    attn_ref[...] = attn_sum * (1.0 / H)     # head-averaged (PyTorch default)


# ---------------------------------------------------------------------------
# Wrapper: parameter folding / packing (trace-time) + batch tiling.
# ---------------------------------------------------------------------------
def _fold_conv(w, b, gamma, beta, mean, var):
    # w: (Cout, Cin, 3) PyTorch Conv1d layout -> (3, Cin, Cout) bf16 with the
    # BN scale folded in; bias' = (b - mean) * s + beta kept in f32.
    s = (gamma * jax.lax.rsqrt(var + BN_EPS)).astype(jnp.float32)
    wp = jnp.transpose(w, (2, 1, 0)).astype(jnp.float32) * s[None, None, :]
    bp = ((b - mean) * s + beta).reshape(1, -1).astype(jnp.float32)
    return wp.astype(jnp.bfloat16), bp


def financial_cnn_forward(x_ncl, p, b_tile=16):
    """x_ncl: (B, C_in, L) -- the PyTorch Conv1d input layout."""
    B, cin, L = x_ncl.shape
    E = p["out_proj_w"].shape[0]
    out_dim = p["fc2_w"].shape[0]

    # Batch tile: B_TILE*L rows per grid step (default 16*16 = 256 rows ->
    # full MXU row utilization on v6e/v7x, 2x128 rows on v5e).  b_tile should
    # be a multiple of 8 whenever B > b_tile.
    bt = B if B <= b_tile else b_tile
    n_tiles = pl.cdiv(B, bt)
    b_pad = n_tiles * bt

    # TODO(synk): supply x as (B, L, C) upstream to drop this extra HBM pass
    # over the (small) input tensor.
    x = jnp.transpose(x_ncl, (0, 2, 1)).astype(jnp.float32)          # (B,L,C)
    if b_pad != B:
        x = jnp.pad(x, ((0, b_pad - B), (0, 0), (0, 0)))

    w1p, b1p = _fold_conv(p["conv1_w"], p["conv1_b"], p["bn1_gamma"],
                          p["bn1_beta"], p["bn1_mean"], p["bn1_var"])
    w2p, b2p = _fold_conv(p["conv2_w"], p["conv2_b"], p["bn2_gamma"],
                          p["bn2_beta"], p["bn2_mean"], p["bn2_var"])
    w3p, b3p = _fold_conv(p["conv3_w"], p["conv3_b"], p["bn3_gamma"],
                          p["bn3_beta"], p["bn3_mean"], p["bn3_var"])

    wqkv = p["in_proj_w"].T.astype(jnp.bfloat16)                     # (E, 3E)
    bqkv = p["in_proj_b"].reshape(1, 3 * E).astype(jnp.float32)
    wtail = jnp.concatenate([p["out_proj_w"].T, p["fc1_w"].T, p["fc2_w"].T],
                            axis=1).astype(jnp.bfloat16)             # (E, 2E+out)
    btail = jnp.concatenate([p["out_proj_b"], p["fc1_b"], p["fc2_b"]]
                            ).reshape(1, 2 * E + out_dim).astype(jnp.float32)

    args = [x, w1p, b1p, w2p, b2p, w3p, b3p, wqkv, bqkv, wtail, btail]
    in_specs = ([pl.BlockSpec((bt, L, cin), lambda i: (i, 0, 0))]
                + [_full_spec(a) for a in args[1:]])

    out, attn = pl.pallas_call(
        _fused_kernel,
        out_shape=(jax.ShapeDtypeStruct((b_pad, out_dim), jnp.float32),
                   jax.ShapeDtypeStruct((b_pad, L, L), jnp.float32)),
        grid=(n_tiles,),
        in_specs=in_specs,
        out_specs=(pl.BlockSpec((bt, out_dim), lambda i: (i, 0)),
                   pl.BlockSpec((bt, L, L), lambda i: (i, 0, 0))),
        compiler_params=pltpu.CompilerParams(
            dimension_semantics=("parallel",)),
    )(*args)
    return out[:B], attn[:B]


# ---------------------------------------------------------------------------
# Parameter init (deterministic, shapes match the PyTorch module).
# ---------------------------------------------------------------------------
def init_params(key, input_channels, output_dim=128):
    ks = jax.random.split(key, 16)
    n = lambda k, shp, std=0.05: jax.random.normal(k, shp, jnp.float32) * std
    p = {
        "conv1_w": n(ks[0], (64, input_channels, 3)), "conv1_b": n(ks[1], (64,)),
        "conv2_w": n(ks[2], (128, 64, 3)),            "conv2_b": n(ks[3], (128,)),
        "conv3_w": n(ks[4], (256, 128, 3)),           "conv3_b": n(ks[5], (256,)),
        "in_proj_w": n(ks[6], (3 * 256, 256)), "in_proj_b": n(ks[7], (3 * 256,)),
        "out_proj_w": n(ks[8], (256, 256)),    "out_proj_b": n(ks[9], (256,)),
        "fc1_w": n(ks[10], (256, 256)),        "fc1_b": n(ks[11], (256,)),
        "fc2_w": n(ks[12], (output_dim, 256)), "fc2_b": n(ks[13], (output_dim,)),
    }
    for i, c in zip((1, 2, 3), (64, 128, 256)):
        p[f"bn{i}_gamma"] = jnp.ones((c,), jnp.float32)
        p[f"bn{i}_beta"] = jnp.zeros((c,), jnp.float32)
        p[f"bn{i}_mean"] = jnp.zeros((c,), jnp.float32)
        p[f"bn{i}_var"] = jnp.ones((c,), jnp.float32)
    return p


if __name__ == "__main__":
    B, C_IN, L, OUT_DIM = 2, 4, 16, 128
    key = jax.random.PRNGKey(0)
    k_x, k_p = jax.random.split(key)
    params = init_params(k_p, C_IN, OUT_DIM)
    x = jax.random.normal(k_x, (B, C_IN, L), jnp.float32)

    out, attn = jax.jit(financial_cnn_forward)(x, params)
    jax.block_until_ready((out, attn))

    assert out.shape == (B, OUT_DIM)
    assert attn.shape == (B, L, L)
    assert bool(jnp.all(jnp.isfinite(out))) and bool(jnp.all(jnp.isfinite(attn)))
    print("KERNEL_OK")
</pallas_src>

<mosaic_0001>
module attributes {stable_mosaic.version = 11 : i64} {
  func.func @_fused_kernel(%arg0: i32, %arg1: memref<2x16x4xf32, #tpu.memory_space<vmem>>, %arg2: memref<3x4x64xbf16, #tpu.memory_space<vmem>>, %arg3: memref<1x64xf32, #tpu.memory_space<vmem>>, %arg4: memref<3x64x128xbf16, #tpu.memory_space<vmem>>, %arg5: memref<1x128xf32, #tpu.memory_space<vmem>>, %arg6: memref<3x128x256xbf16, #tpu.memory_space<vmem>>, %arg7: memref<1x256xf32, #tpu.memory_space<vmem>>, %arg8: memref<256x768xbf16, #tpu.memory_space<vmem>>, %arg9: memref<1x768xf32, #tpu.memory_space<vmem>>, %arg10: memref<256x640xbf16, #tpu.memory_space<vmem>>, %arg11: memref<1x640xf32, #tpu.memory_space<vmem>>, %arg12: memref<2x128xf32, #tpu.memory_space<vmem>>, %arg13: memref<2x16x16xf32, #tpu.memory_space<vmem>>) attributes {dimension_semantics = [#tpu.dimension_semantics<parallel>], iteration_bounds = array<i64: 1>, scalar_prefetch = 0 : i64, scratch_operands = 0 : i64, tpu.core_type = #tpu.core_type<tc>, window_params = [{transform_indices = @transform_0, window_bounds = array<i64: 2, 16, 4>}, {pipeline_mode = #tpu.pipeline_mode<synchronous>, transform_indices = @transform_1, window_bounds = array<i64: 3, 4, 64>}, {pipeline_mode = #tpu.pipeline_mode<synchronous>, transform_indices = @transform_2, window_bounds = array<i64: 1, 64>}, {pipeline_mode = #tpu.pipeline_mode<synchronous>, transform_indices = @transform_3, window_bounds = array<i64: 3, 64, 128>}, {pipeline_mode = #tpu.pipeline_mode<synchronous>, transform_indices = @transform_4, window_bounds = array<i64: 1, 128>}, {pipeline_mode = #tpu.pipeline_mode<synchronous>, transform_indices = @transform_5, window_bounds = array<i64: 3, 128, 256>}, {pipeline_mode = #tpu.pipeline_mode<synchronous>, transform_indices = @transform_6, window_bounds = array<i64: 1, 256>}, {pipeline_mode = #tpu.pipeline_mode<synchronous>, transform_indices = @transform_7, window_bounds = array<i64: 256, 768>}, {pipeline_mode = #tpu.pipeline_mode<synchronous>, transform_indices = @transform_8, window_bounds = array<i64: 1, 768>}, {pipeline_mode = #tpu.pipeline_mode<synchronous>, transform_indices = @transform_9, window_bounds = array<i64: 256, 640>}, {pipeline_mode = #tpu.pipeline_mode<synchronous>, transform_indices = @transform_10, window_bounds = array<i64: 1, 640>}, {transform_indices = @transform_11, window_bounds = array<i64: 2, 128>}, {transform_indices = @transform_12, window_bounds = array<i64: 2, 16, 16>}]} {
    %0 = tpu.iota {dimensions = array<i32: 1>} : vector<2x16x1xi32>
    %1 = vector.shape_cast %0 : vector<2x16x1xi32> to vector<32x1xi32>
    %c0_i32 = arith.constant 0 : i32
    %2 = vector.broadcast %c0_i32 : i32 to vector<32x1xi32>
    %3 = arith.cmpi ne, %1, %2 : vector<32x1xi32>
    %c15_i32 = arith.constant 15 : i32
    %4 = vector.broadcast %c15_i32 : i32 to vector<32x1xi32>
    %5 = arith.cmpi ne, %1, %4 : vector<32x1xi32>
    %c0 = arith.constant 0 : index
    %c0_0 = arith.constant 0 : index
    %c0_1 = arith.constant 0 : index
    %6 = vector.load %arg1[%c0, %c0_0, %c0_1] : memref<2x16x4xf32, #tpu.memory_space<vmem>>, vector<2x16x4xf32>
    %7 = vector.shape_cast %6 : vector<2x16x4xf32> to vector<32x4xf32>
    %cst = arith.constant 0.000000e+00 : f32
    %8 = vector.broadcast %cst : f32 to vector<1x4xf32>
    %9 = vector.extract_strided_slice %7 {offsets = [0, 0], sizes = [31, 4], strides = [1, 1]} : vector<32x4xf32> to vector<31x4xf32>
    %10 = tpu.concatenate %8, %9 in 0 : vector<1x4xf32>, vector<31x4xf32> -> vector<32x4xf32>
    %cst_2 = arith.constant 0.000000e+00 : f32
    %11 = vector.shape_cast %3 : vector<32x1xi1> to vector<32x1xi1>
    %12 = vector.broadcast %11 : vector<32x1xi1> to vector<32x4xi1>
    %13 = vector.broadcast %cst_2 : f32 to vector<32x4xf32>
    %14 = arith.select %12, %10, %13 : vector<32x4xi1>, vector<32x4xf32>
    %15 = vector.extract_strided_slice %7 {offsets = [1, 0], sizes = [31, 4], strides = [1, 1]} : vector<32x4xf32> to vector<31x4xf32>
    %16 = tpu.concatenate %15, %8 in 0 : vector<31x4xf32>, vector<1x4xf32> -> vector<32x4xf32>
    %cst_3 = arith.constant 0.000000e+00 : f32
    %17 = vector.shape_cast %5 : vector<32x1xi1> to vector<32x1xi1>
    %18 = vector.broadcast %17 : vector<32x1xi1> to vector<32x4xi1>
    %19 = vector.broadcast %cst_3 : f32 to vector<32x4xf32>
    %20 = arith.select %18, %16, %19 : vector<32x4xi1>, vector<32x4xf32>
    %21 = arith.truncf %14 : vector<32x4xf32> to vector<32x4xbf16>
    %c0_4 = arith.constant 0 : index
    %c0_5 = arith.constant 0 : index
    %c0_6 = arith.constant 0 : index
    %22 = vector.load %arg2[%c0_4, %c0_5, %c0_6] : memref<3x4x64xbf16, #tpu.memory_space<vmem>>, vector<1x4x64xbf16>
    %23 = vector.shape_cast %22 : vector<1x4x64xbf16> to vector<4x64xbf16>
    %cst_7 = arith.constant dense<0.000000e+00> : vector<32x64xf32>
    %24 = tpu.matmul %21, %23, %cst_7 {dimension_numbers = #tpu.dot_dimension_numbers<[1], [0], [0], [1], [0, 0, 1, 1], [], []>} : vector<32x4xbf16>, vector<4x64xbf16>, vector<32x64xf32> -> vector<32x64xf32>
    %25 = arith.truncf %7 : vector<32x4xf32> to vector<32x4xbf16>
    %c1 = arith.constant 1 : index
    %c0_8 = arith.constant 0 : index
    %c0_9 = arith.constant 0 : index
    %26 = vector.load %arg2[%c1, %c0_8, %c0_9] : memref<3x4x64xbf16, #tpu.memory_space<vmem>>, vector<1x4x64xbf16>
    %27 = vector.shape_cast %26 : vector<1x4x64xbf16> to vector<4x64xbf16>
    %cst_10 = arith.constant dense<0.000000e+00> : vector<32x64xf32>
    %28 = tpu.matmul %25, %27, %cst_10 {dimension_numbers = #tpu.dot_dimension_numbers<[1], [0], [0], [1], [0, 0, 1, 1], [], []>} : vector<32x4xbf16>, vector<4x64xbf16>, vector<32x64xf32> -> vector<32x64xf32>
    %29 = arith.addf %24, %28 : vector<32x64xf32>
    %30 = arith.truncf %20 : vector<32x4xf32> to vector<32x4xbf16>
    %c2 = arith.constant 2 : index
    %c0_11 = arith.constant 0 : index
    %c0_12 = arith.constant 0 : index
    %31 = vector.load %arg2[%c2, %c0_11, %c0_12] : memref<3x4x64xbf16, #tpu.memory_space<vmem>>, vector<1x4x64xbf16>
    %32 = vector.shape_cast %31 : vector<1x4x64xbf16> to vector<4x64xbf16>
    %cst_13 = arith.constant dense<0.000000e+00> : vector<32x64xf32>
    %33 = tpu.matmul %30, %32, %cst_13 {dimension_numbers = #tpu.dot_dimension_numbers<[1], [0], [0], [1], [0, 0, 1, 1], [], []>} : vector<32x4xbf16>, vector<4x64xbf16>, vector<32x64xf32> -> vector<32x64xf32>
    %34 = arith.addf %29, %33 : vector<32x64xf32>
    %c0_14 = arith.constant 0 : index
    %c0_15 = arith.constant 0 : index
    %35 = vector.load %arg3[%c0_14, %c0_15] : memref<1x64xf32, #tpu.memory_space<vmem>>, vector<1x64xf32>
    %36 = vector.broadcast %35 : vector<1x64xf32> to vector<32x64xf32>
    %37 = arith.addf %34, %36 : vector<32x64xf32>
    %cst_16 = arith.constant 0.000000e+00 : f32
    %38 = vector.broadcast %cst_16 : f32 to vector<32x64xf32>
    %39 = arith.maximumf %37, %38 : vector<32x64xf32>
    %cst_17 = arith.constant 0.000000e+00 : f32
    %40 = vector.broadcast %cst_17 : f32 to vector<1x64xf32>
    %41 = vector.extract_strided_slice %39 {offsets = [0, 0], sizes = [31, 64], strides = [1, 1]} : vector<32x64xf32> to vector<31x64xf32>
    %42 = tpu.concatenate %40, %41 in 0 : vector<1x64xf32>, vector<31x64xf32> -> vector<32x64xf32>
    %cst_18 = arith.constant 0.000000e+00 : f32
    %43 = vector.shape_cast %3 : vector<32x1xi1> to vector<32x1xi1>
    %44 = vector.broadcast %43 : vector<32x1xi1> to vector<32x64xi1>
    %45 = vector.broadcast %cst_18 : f32 to vector<32x64xf32>
    %46 = arith.select %44, %42, %45 : vector<32x64xi1>, vector<32x64xf32>
    %47 = vector.extract_strided_slice %39 {offsets = [1, 0], sizes = [31, 64], strides = [1, 1]} : vector<32x64xf32> to vector<31x64xf32>
    %48 = tpu.concatenate %47, %40 in 0 : vector<31x64xf32>, vector<1x64xf32> -> vector<32x64xf32>
    %cst_19 = arith.constant 0.000000e+00 : f32
    %49 = vector.shape_cast %5 : vector<32x1xi1> to vector<32x1xi1>
    %50 = vector.broadcast %49 : vector<32x1xi1> to vector<32x64xi1>
    %51 = vector.broadcast %cst_19 : f32 to vector<32x64xf32>
    %52 = arith.select %50, %48, %51 : vector<32x64xi1>, vector<32x64xf32>
    %53 = arith.truncf %46 : vector<32x64xf32> to vector<32x64xbf16>
    %c0_20 = arith.constant 0 : index
    %c0_21 = arith.constant 0 : index
    %c0_22 = arith.constant 0 : index
    %54 = vector.load %arg4[%c0_20, %c0_21, %c0_22] : memref<3x64x128xbf16, #tpu.memory_space<vmem>>, vector<1x64x128xbf16>
    %55 = vector.shape_cast %54 : vector<1x64x128xbf16> to vector<64x128xbf16>
    %cst_23 = arith.constant dense<0.000000e+00> : vector<32x128xf32>
    %56 = tpu.matmul %53, %55, %cst_23 {dimension_numbers = #tpu.dot_dimension_numbers<[1], [0], [0], [1], [0, 0, 1, 1], [], []>} : vector<32x64xbf16>, vector<64x128xbf16>, vector<32x128xf32> -> vector<32x128xf32>
    %57 = arith.truncf %39 : vector<32x64xf32> to vector<32x64xbf16>
    %c1_24 = arith.constant 1 : index
    %c0_25 = arith.constant 0 : index
    %c0_26 = arith.constant 0 : index
    %58 = vector.load %arg4[%c1_24, %c0_25, %c0_26] : memref<3x64x128xbf16, #tpu.memory_space<vmem>>, vector<1x64x128xbf16>
    %59 = vector.shape_cast %58 : vector<1x64x128xbf16> to vector<64x128xbf16>
    %cst_27 = arith.constant dense<0.000000e+00> : vector<32x128xf32>
    %60 = tpu.matmul %57, %59, %cst_27 {dimension_numbers = #tpu.dot_dimension_numbers<[1], [0], [0], [1], [0, 0, 1, 1], [], []>} : vector<32x64xbf16>, vector<64x128xbf16>, vector<32x128xf32> -> vector<32x128xf32>
    %61 = arith.addf %56, %60 : vector<32x128xf32>
    %62 = arith.truncf %52 : vector<32x64xf32> to vector<32x64xbf16>
    %c2_28 = arith.constant 2 : index
    %c0_29 = arith.constant 0 : index
    %c0_30 = arith.constant 0 : index
    %63 = vector.load %arg4[%c2_28, %c0_29, %c0_30] : memref<3x64x128xbf16, #tpu.memory_space<vmem>>, vector<1x64x128xbf16>
    %64 = vector.shape_cast %63 : vector<1x64x128xbf16> to vector<64x128xbf16>
    %cst_31 = arith.constant dense<0.000000e+00> : vector<32x128xf32>
    %65 = tpu.matmul %62, %64, %cst_31 {dimension_numbers = #tpu.dot_dimension_numbers<[1], [0], [0], [1], [0, 0, 1, 1], [], []>} : vector<32x64xbf16>, vector<64x128xbf16>, vector<32x128xf32> -> vector<32x128xf32>
    %66 = arith.addf %61, %65 : vector<32x128xf32>
    %c0_32 = arith.constant 0 : index
    %c0_33 = arith.constant 0 : index
    %67 = vector.load %arg5[%c0_32, %c0_33] : memref<1x128xf32, #tpu.memory_space<vmem>>, vector<1x128xf32>
    %68 = vector.broadcast %67 : vector<1x128xf32> to vector<32x128xf32>
    %69 = arith.addf %66, %68 : vector<32x128xf32>
    %cst_34 = arith.constant 0.000000e+00 : f32
    %70 = vector.broadcast %cst_34 : f32 to vector<32x128xf32>
    %71 = arith.maximumf %69, %70 : vector<32x128xf32>
    %cst_35 = arith.constant 0.000000e+00 : f32
    %72 = vector.broadcast %cst_35 : f32 to vector<1x128xf32>
    %73 = vector.extract_strided_slice %71 {offsets = [0, 0], sizes = [31, 128], strides = [1, 1]} : vector<32x128xf32> to vector<31x128xf32>
    %74 = tpu.concatenate %72, %73 in 0 : vector<1x128xf32>, vector<31x128xf32> -> vector<32x128xf32>
    %cst_36 = arith.constant 0.000000e+00 : f32
    %75 = vector.shape_cast %3 : vector<32x1xi1> to vector<32x1xi1>
    %76 = vector.broadcast %75 : vector<32x1xi1> to vector<32x128xi1>
    %77 = vector.broadcast %cst_36 : f32 to vector<32x128xf32>
    %78 = arith.select %76, %74, %77 : vector<32x128xi1>, vector<32x128xf32>
    %79 = vector.extract_strided_slice %71 {offsets = [1, 0], sizes = [31, 128], strides = [1, 1]} : vector<32x128xf32> to vector<31x128xf32>
    %80 = tpu.concatenate %79, %72 in 0 : vector<31x128xf32>, vector<1x128xf32> -> vector<32x128xf32>
    %cst_37 = arith.constant 0.000000e+00 : f32
    %81 = vector.shape_cast %5 : vector<32x1xi1> to vector<32x1xi1>
    %82 = vector.broadcast %81 : vector<32x1xi1> to vector<32x128xi1>
    %83 = vector.broadcast %cst_37 : f32 to vector<32x128xf32>
    %84 = arith.select %82, %80, %83 : vector<32x128xi1>, vector<32x128xf32>
    %85 = arith.truncf %78 : vector<32x128xf32> to vector<32x128xbf16>
    %c0_38 = arith.constant 0 : index
    %c0_39 = arith.constant 0 : index
    %c0_40 = arith.constant 0 : index
    %86 = vector.load %arg6[%c0_38, %c0_39, %c0_40] : memref<3x128x256xbf16, #tpu.memory_space<vmem>>, vector<1x128x256xbf16>
    %87 = vector.shape_cast %86 : vector<1x128x256xbf16> to vector<128x256xbf16>
    %cst_41 = arith.constant dense<0.000000e+00> : vector<32x256xf32>
    %88 = tpu.matmul %85, %87, %cst_41 {dimension_numbers = #tpu.dot_dimension_numbers<[1], [0], [0], [1], [0, 0, 1, 1], [], []>} : vector<32x128xbf16>, vector<128x256xbf16>, vector<32x256xf32> -> vector<32x256xf32>
    %89 = arith.truncf %71 : vector<32x128xf32> to vector<32x128xbf16>
    %c1_42 = arith.constant 1 : index
    %c0_43 = arith.constant 0 : index
    %c0_44 = arith.constant 0 : index
    %90 = vector.load %arg6[%c1_42, %c0_43, %c0_44] : memref<3x128x256xbf16, #tpu.memory_space<vmem>>, vector<1x128x256xbf16>
    %91 = vector.shape_cast %90 : vector<1x128x256xbf16> to vector<128x256xbf16>
    %cst_45 = arith.constant dense<0.000000e+00> : vector<32x256xf32>
    %92 = tpu.matmul %89, %91, %cst_45 {dimension_numbers = #tpu.dot_dimension_numbers<[1], [0], [0], [1], [0, 0, 1, 1], [], []>} : vector<32x128xbf16>, vector<128x256xbf16>, vector<32x256xf32> -> vector<32x256xf32>
    %93 = arith.addf %88, %92 : vector<32x256xf32>
    %94 = arith.truncf %84 : vector<32x128xf32> to vector<32x128xbf16>
    %c2_46 = arith.constant 2 : index
    %c0_47 = arith.constant 0 : index
    %c0_48 = arith.constant 0 : index
    %95 = vector.load %arg6[%c2_46, %c0_47, %c0_48] : memref<3x128x256xbf16, #tpu.memory_space<vmem>>, vector<1x128x256xbf16>
    %96 = vector.shape_cast %95 : vector<1x128x256xbf16> to vector<128x256xbf16>
    %cst_49 = arith.constant dense<0.000000e+00> : vector<32x256xf32>
    %97 = tpu.matmul %94, %96, %cst_49 {dimension_numbers = #tpu.dot_dimension_numbers<[1], [0], [0], [1], [0, 0, 1, 1], [], []>} : vector<32x128xbf16>, vector<128x256xbf16>, vector<32x256xf32> -> vector<32x256xf32>
    %98 = arith.addf %93, %97 : vector<32x256xf32>
    %c0_50 = arith.constant 0 : index
    %c0_51 = arith.constant 0 : index
    %99 = vector.load %arg7[%c0_50, %c0_51] : memref<1x256xf32, #tpu.memory_space<vmem>>, vector<1x256xf32>
    %100 = vector.broadcast %99 : vector<1x256xf32> to vector<32x256xf32>
    %101 = arith.addf %98, %100 : vector<32x256xf32>
    %cst_52 = arith.constant 0.000000e+00 : f32
    %102 = vector.broadcast %cst_52 : f32 to vector<32x256xf32>
    %103 = arith.maximumf %101, %102 : vector<32x256xf32>
    %104 = vector.shape_cast %103 : vector<32x256xf32> to vector<2x16x256xf32>
    %cst_53 = arith.constant dense<0.000000e+00> : vector<2x256xf32>
    %105 = vector.multi_reduction <add>, %104, %cst_53 [1] : vector<2x16x256xf32> to vector<2x256xf32>
    %cst_54 = arith.constant 6.250000e-02 : f32
    %106 = vector.broadcast %cst_54 : f32 to vector<2x256xf32>
    %107 = arith.mulf %105, %106 : vector<2x256xf32>
    %108 = arith.truncf %103 : vector<32x256xf32> to vector<32x256xbf16>
    %c0_55 = arith.constant 0 : index
    %c0_56 = arith.constant 0 : index
    %109 = vector.load %arg8[%c0_55, %c0_56] : memref<256x768xbf16, #tpu.memory_space<vmem>>, vector<256x768xbf16>
    %cst_57 = arith.constant dense<0.000000e+00> : vector<32x768xf32>
    %110 = tpu.matmul %108, %109, %cst_57 {dimension_numbers = #tpu.dot_dimension_numbers<[1], [0], [0], [1], [0, 0, 1, 1], [], []>} : vector<32x256xbf16>, vector<256x768xbf16>, vector<32x768xf32> -> vector<32x768xf32>
    %c0_58 = arith.constant 0 : index
    %c0_59 = arith.constant 0 : index
    %111 = vector.load %arg9[%c0_58, %c0_59] : memref<1x768xf32, #tpu.memory_space<vmem>>, vector<1x768xf32>
    %112 = vector.broadcast %111 : vector<1x768xf32> to vector<32x768xf32>
    %113 = arith.addf %110, %112 : vector<32x768xf32>
    %114 = arith.truncf %113 : vector<32x768xf32> to vector<32x768xbf16>
    %115 = vector.extract_strided_slice %114 {offsets = [0, 0], sizes = [32, 256], strides = [1, 1]} : vector<32x768xbf16> to vector<32x256xbf16>
    %116 = vector.shape_cast %115 : vector<32x256xbf16> to vector<2x16x256xbf16>
    %117 = vector.extract_strided_slice %114 {offsets = [0, 256], sizes = [32, 256], strides = [1, 1]} : vector<32x768xbf16> to vector<32x256xbf16>
    %118 = vector.shape_cast %117 : vector<32x256xbf16> to vector<2x16x256xbf16>
    %119 = vector.extract_strided_slice %114 {offsets = [0, 512], sizes = [32, 256], strides = [1, 1]} : vector<32x768xbf16> to vector<32x256xbf16>
    %120 = vector.shape_cast %119 : vector<32x256xbf16> to vector<2x16x256xbf16>
    %cst_60 = arith.constant 0.000000e+00 : f32
    %121 = vector.broadcast %cst_60 : f32 to vector<2x16x16xf32>
    %122 = vector.extract_strided_slice %116 {offsets = [0, 0, 0], sizes = [2, 16, 32], strides = [1, 1, 1]} : vector<2x16x256xbf16> to vector<2x16x32xbf16>
    %123 = vector.extract_strided_slice %118 {offsets = [0, 0, 0], sizes = [2, 16, 32], strides = [1, 1, 1]} : vector<2x16x256xbf16> to vector<2x16x32xbf16>
    "tpu.trace_start"() <{level = 10 : i32, message = "bqd,bkd->bqk"}> : () -> ()
    %cst_61 = arith.constant dense<0.000000e+00> : vector<2x16x16xf32>
    %124 = tpu.matmul %122, %123, %cst_61 {dimension_numbers = #tpu.dot_dimension_numbers<[2], [2], [1], [1], [0, 0, 0, 1, 1, 1], [0], [0]>} : vector<2x16x32xbf16>, vector<2x16x32xbf16>, vector<2x16x16xf32> -> vector<2x16x16xf32>
    "tpu.trace_stop"() : () -> ()
    %cst_62 = arith.constant 0.176776692 : f32
    %125 = vector.broadcast %cst_62 : f32 to vector<2x16x16xf32>
    %126 = arith.mulf %124, %125 : vector<2x16x16xf32>
    %cst_63 = arith.constant dense<0xFF800000> : vector<2x16xf32>
    %127 = vector.multi_reduction <maximumf>, %126, %cst_63 [2] : vector<2x16x16xf32> to vector<2x16xf32>
    %128 = vector.shape_cast %127 : vector<2x16xf32> to vector<2x16x1xf32>
    %129 = vector.broadcast %128 : vector<2x16x1xf32> to vector<2x16x16xf32>
    %130 = arith.subf %126, %129 : vector<2x16x16xf32>
    %131 = math.exp %130 : vector<2x16x16xf32>
    %cst_64 = arith.constant dense<0.000000e+00> : vector<2x16xf32>
    %132 = vector.multi_reduction <add>, %131, %cst_64 [2] : vector<2x16x16xf32> to vector<2x16xf32>
    %133 = vector.shape_cast %132 : vector<2x16xf32> to vector<2x16x1xf32>
    %134 = vector.broadcast %133 : vector<2x16x1xf32> to vector<2x16x16xf32>
    %135 = arith.divf %131, %134 : vector<2x16x16xf32>
    %136 = arith.addf %121, %135 : vector<2x16x16xf32>
    %cst_65 = arith.constant dense<0.000000e+00> : vector<2x16xf32>
    %137 = vector.multi_reduction <add>, %135, %cst_65 [1] : vector<2x16x16xf32> to vector<2x16xf32>
    %138 = vector.shape_cast %137 : vector<2x16xf32> to vector<2x1x16xf32>
    %cst_66 = arith.constant 6.250000e-02 : f32
    %139 = vector.broadcast %cst_66 : f32 to vector<2x1x16xf32>
    %140 = arith.mulf %138, %139 : vector<2x1x16xf32>
    %141 = arith.truncf %140 : vector<2x1x16xf32> to vector<2x1x16xbf16>
    %142 = vector.extract_strided_slice %120 {offsets = [0, 0, 0], sizes = [2, 16, 32], strides = [1, 1, 1]} : vector<2x16x256xbf16> to vector<2x16x32xbf16>
    "tpu.trace_start"() <{level = 10 : i32, message = "bqk,bkd->bqd"}> : () -> ()
    %cst_67 = arith.constant dense<0.000000e+00> : vector<2x1x32xf32>
    %143 = tpu.matmul %141, %142, %cst_67 {dimension_numbers = #tpu.dot_dimension_numbers<[2], [1], [1], [2], [0, 0, 0, 1, 1, 2], [0], [0]>} : vector<2x1x16xbf16>, vector<2x16x32xbf16>, vector<2x1x32xf32> -> vector<2x1x32xf32>
    "tpu.trace_stop"() : () -> ()
    %144 = vector.extract_strided_slice %116 {offsets = [0, 0, 32], sizes = [2, 16, 32], strides = [1, 1, 1]} : vector<2x16x256xbf16> to vector<2x16x32xbf16>
    %145 = vector.extract_strided_slice %118 {offsets = [0, 0, 32], sizes = [2, 16, 32], strides = [1, 1, 1]} : vector<2x16x256xbf16> to vector<2x16x32xbf16>
    "tpu.trace_start"() <{level = 10 : i32, message = "bqd,bkd->bqk"}> : () -> ()
    %cst_68 = arith.constant dense<0.000000e+00> : vector<2x16x16xf32>
    %146 = tpu.matmul %144, %145, %cst_68 {dimension_numbers = #tpu.dot_dimension_numbers<[2], [2], [1], [1], [0, 0, 0, 1, 1, 1], [0], [0]>} : vector<2x16x32xbf16>, vector<2x16x32xbf16>, vector<2x16x16xf32> -> vector<2x16x16xf32>
    "tpu.trace_stop"() : () -> ()
    %cst_69 = arith.constant 0.176776692 : f32
    %147 = vector.broadcast %cst_69 : f32 to vector<2x16x16xf32>
    %148 = arith.mulf %146, %147 : vector<2x16x16xf32>
    %cst_70 = arith.constant dense<0xFF800000> : vector<2x16xf32>
    %149 = vector.multi_reduction <maximumf>, %148, %cst_70 [2] : vector<2x16x16xf32> to vector<2x16xf32>
    %150 = vector.shape_cast %149 : vector<2x16xf32> to vector<2x16x1xf32>
    %151 = vector.broadcast %150 : vector<2x16x1xf32> to vector<2x16x16xf32>
    %152 = arith.subf %148, %151 : vector<2x16x16xf32>
    %153 = math.exp %152 : vector<2x16x16xf32>
    %cst_71 = arith.constant dense<0.000000e+00> : vector<2x16xf32>
    %154 = vector.multi_reduction <add>, %153, %cst_71 [2] : vector<2x16x16xf32> to vector<2x16xf32>
    %155 = vector.shape_cast %154 : vector<2x16xf32> to vector<2x16x1xf32>
    %156 = vector.broadcast %155 : vector<2x16x1xf32> to vector<2x16x16xf32>
    %157 = arith.divf %153, %156 : vector<2x16x16xf32>
    %158 = arith.addf %136, %157 : vector<2x16x16xf32>
    %cst_72 = arith.constant dense<0.000000e+00> : vector<2x16xf32>
    %159 = vector.multi_reduction <add>, %157, %cst_72 [1] : vector<2x16x16xf32> to vector<2x16xf32>
    %160 = vector.shape_cast %159 : vector<2x16xf32> to vector<2x1x16xf32>
    %cst_73 = arith.constant 6.250000e-02 : f32
    %161 = vector.broadcast %cst_73 : f32 to vector<2x1x16xf32>
    %162 = arith.mulf %160, %161 : vector<2x1x16xf32>
    %163 = arith.truncf %162 : vector<2x1x16xf32> to vector<2x1x16xbf16>
    %164 = vector.extract_strided_slice %120 {offsets = [0, 0, 32], sizes = [2, 16, 32], strides = [1, 1, 1]} : vector<2x16x256xbf16> to vector<2x16x32xbf16>
    "tpu.trace_start"() <{level = 10 : i32, message = "bqk,bkd->bqd"}> : () -> ()
    %cst_74 = arith.constant dense<0.000000e+00> : vector<2x1x32xf32>
    %165 = tpu.matmul %163, %164, %cst_74 {dimension_numbers = #tpu.dot_dimension_numbers<[2], [1], [1], [2], [0, 0, 0, 1, 1, 2], [0], [0]>} : vector<2x1x16xbf16>, vector<2x16x32xbf16>, vector<2x1x32xf32> -> vector<2x1x32xf32>
    "tpu.trace_stop"() : () -> ()
    %166 = vector.extract_strided_slice %116 {offsets = [0, 0, 64], sizes = [2, 16, 32], strides = [1, 1, 1]} : vector<2x16x256xbf16> to vector<2x16x32xbf16>
    %167 = vector.extract_strided_slice %118 {offsets = [0, 0, 64], sizes = [2, 16, 32], strides = [1, 1, 1]} : vector<2x16x256xbf16> to vector<2x16x32xbf16>
    "tpu.trace_start"() <{level = 10 : i32, message = "bqd,bkd->bqk"}> : () -> ()
    %cst_75 = arith.constant dense<0.000000e+00> : vector<2x16x16xf32>
    %168 = tpu.matmul %166, %167, %cst_75 {dimension_numbers = #tpu.dot_dimension_numbers<[2], [2], [1], [1], [0, 0, 0, 1, 1, 1], [0], [0]>} : vector<2x16x32xbf16>, vector<2x16x32xbf16>, vector<2x16x16xf32> -> vector<2x16x16xf32>
    "tpu.trace_stop"() : () -> ()
    %cst_76 = arith.constant 0.176776692 : f32
    %169 = vector.broadcast %cst_76 : f32 to vector<2x16x16xf32>
    %170 = arith.mulf %168, %169 : vector<2x16x16xf32>
    %cst_77 = arith.constant dense<0xFF800000> : vector<2x16xf32>
    %171 = vector.multi_reduction <maximumf>, %170, %cst_77 [2] : vector<2x16x16xf32> to vector<2x16xf32>
    %172 = vector.shape_cast %171 : vector<2x16xf32> to vector<2x16x1xf32>
    %173 = vector.broadcast %172 : vector<2x16x1xf32> to vector<2x16x16xf32>
    %174 = arith.subf %170, %173 : vector<2x16x16xf32>
    %175 = math.exp %174 : vector<2x16x16xf32>
    %cst_78 = arith.constant dense<0.000000e+00> : vector<2x16xf32>
    %176 = vector.multi_reduction <add>, %175, %cst_78 [2] : vector<2x16x16xf32> to vector<2x16xf32>
    %177 = vector.shape_cast %176 : vector<2x16xf32> to vector<2x16x1xf32>
    %178 = vector.broadcast %177 : vector<2x16x1xf32> to vector<2x16x16xf32>
    %179 = arith.divf %175, %178 : vector<2x16x16xf32>
    %180 = arith.addf %158, %179 : vector<2x16x16xf32>
    %cst_79 = arith.constant dense<0.000000e+00> : vector<2x16xf32>
    %181 = vector.multi_reduction <add>, %179, %cst_79 [1] : vector<2x16x16xf32> to vector<2x16xf32>
    %182 = vector.shape_cast %181 : vector<2x16xf32> to vector<2x1x16xf32>
    %cst_80 = arith.constant 6.250000e-02 : f32
    %183 = vector.broadcast %cst_80 : f32 to vector<2x1x16xf32>
    %184 = arith.mulf %182, %183 : vector<2x1x16xf32>
    %185 = arith.truncf %184 : vector<2x1x16xf32> to vector<2x1x16xbf16>
    %186 = vector.extract_strided_slice %120 {offsets = [0, 0, 64], sizes = [2, 16, 32], strides = [1, 1, 1]} : vector<2x16x256xbf16> to vector<2x16x32xbf16>
    "tpu.trace_start"() <{level = 10 : i32, message = "bqk,bkd->bqd"}> : () -> ()
    %cst_81 = arith.constant dense<0.000000e+00> : vector<2x1x32xf32>
    %187 = tpu.matmul %185, %186, %cst_81 {dimension_numbers = #tpu.dot_dimension_numbers<[2], [1], [1], [2], [0, 0, 0, 1, 1, 2], [0], [0]>} : vector<2x1x16xbf16>, vector<2x16x32xbf16>, vector<2x1x32xf32> -> vector<2x1x32xf32>
    "tpu.trace_stop"() : () -> ()
    %188 = vector.extract_strided_slice %116 {offsets = [0, 0, 96], sizes = [2, 16, 32], strides = [1, 1, 1]} : vector<2x16x256xbf16> to vector<2x16x32xbf16>
    %189 = vector.extract_strided_slice %118 {offsets = [0, 0, 96], sizes = [2, 16, 32], strides = [1, 1, 1]} : vector<2x16x256xbf16> to vector<2x16x32xbf16>
    "tpu.trace_start"() <{level = 10 : i32, message = "bqd,bkd->bqk"}> : () -> ()
    %cst_82 = arith.constant dense<0.000000e+00> : vector<2x16x16xf32>
    %190 = tpu.matmul %188, %189, %cst_82 {dimension_numbers = #tpu.dot_dimension_numbers<[2], [2], [1], [1], [0, 0, 0, 1, 1, 1], [0], [0]>} : vector<2x16x32xbf16>, vector<2x16x32xbf16>, vector<2x16x16xf32> -> vector<2x16x16xf32>
    "tpu.trace_stop"() : () -> ()
    %cst_83 = arith.constant 0.176776692 : f32
    %191 = vector.broadcast %cst_83 : f32 to vector<2x16x16xf32>
    %192 = arith.mulf %190, %191 : vector<2x16x16xf32>
    %cst_84 = arith.constant dense<0xFF800000> : vector<2x16xf32>
    %193 = vector.multi_reduction <maximumf>, %192, %cst_84 [2] : vector<2x16x16xf32> to vector<2x16xf32>
    %194 = vector.shape_cast %193 : vector<2x16xf32> to vector<2x16x1xf32>
    %195 = vector.broadcast %194 : vector<2x16x1xf32> to vector<2x16x16xf32>
    %196 = arith.subf %192, %195 : vector<2x16x16xf32>
    %197 = math.exp %196 : vector<2x16x16xf32>
    %cst_85 = arith.constant dense<0.000000e+00> : vector<2x16xf32>
    %198 = vector.multi_reduction <add>, %197, %cst_85 [2] : vector<2x16x16xf32> to vector<2x16xf32>
    %199 = vector.shape_cast %198 : vector<2x16xf32> to vector<2x16x1xf32>
    %200 = vector.broadcast %199 : vector<2x16x1xf32> to vector<2x16x16xf32>
    %201 = arith.divf %197, %200 : vector<2x16x16xf32>
    %202 = arith.addf %180, %201 : vector<2x16x16xf32>
    %cst_86 = arith.constant dense<0.000000e+00> : vector<2x16xf32>
    %203 = vector.multi_reduction <add>, %201, %cst_86 [1] : vector<2x16x16xf32> to vector<2x16xf32>
    %204 = vector.shape_cast %203 : vector<2x16xf32> to vector<2x1x16xf32>
    %cst_87 = arith.constant 6.250000e-02 : f32
    %205 = vector.broadcast %cst_87 : f32 to vector<2x1x16xf32>
    %206 = arith.mulf %204, %205 : vector<2x1x16xf32>
    %207 = arith.truncf %206 : vector<2x1x16xf32> to vector<2x1x16xbf16>
    %208 = vector.extract_strided_slice %120 {offsets = [0, 0, 96], sizes = [2, 16, 32], strides = [1, 1, 1]} : vector<2x16x256xbf16> to vector<2x16x32xbf16>
    "tpu.trace_start"() <{level = 10 : i32, message = "bqk,bkd->bqd"}> : () -> ()
    %cst_88 = arith.constant dense<0.000000e+00> : vector<2x1x32xf32>
    %209 = tpu.matmul %207, %208, %cst_88 {dimension_numbers = #tpu.dot_dimension_numbers<[2], [1], [1], [2], [0, 0, 0, 1, 1, 2], [0], [0]>} : vector<2x1x16xbf16>, vector<2x16x32xbf16>, vector<2x1x32xf32> -> vector<2x1x32xf32>
    "tpu.trace_stop"() : () -> ()
    %210 = vector.extract_strided_slice %116 {offsets = [0, 0, 128], sizes = [2, 16, 32], strides = [1, 1, 1]} : vector<2x16x256xbf16> to vector<2x16x32xbf16>
    %211 = vector.extract_strided_slice %118 {offsets = [0, 0, 128], sizes = [2, 16, 32], strides = [1, 1, 1]} : vector<2x16x256xbf16> to vector<2x16x32xbf16>
    "tpu.trace_start"() <{level = 10 : i32, message = "bqd,bkd->bqk"}> : () -> ()
    %cst_89 = arith.constant dense<0.000000e+00> : vector<2x16x16xf32>
    %212 = tpu.matmul %210, %211, %cst_89 {dimension_numbers = #tpu.dot_dimension_numbers<[2], [2], [1], [1], [0, 0, 0, 1, 1, 1], [0], [0]>} : vector<2x16x32xbf16>, vector<2x16x32xbf16>, vector<2x16x16xf32> -> vector<2x16x16xf32>
    "tpu.trace_stop"() : () -> ()
    %cst_90 = arith.constant 0.176776692 : f32
    %213 = vector.broadcast %cst_90 : f32 to vector<2x16x16xf32>
    %214 = arith.mulf %212, %213 : vector<2x16x16xf32>
    %cst_91 = arith.constant dense<0xFF800000> : vector<2x16xf32>
    %215 = vector.multi_reduction <maximumf>, %214, %cst_91 [2] : vector<2x16x16xf32> to vector<2x16xf32>
    %216 = vector.shape_cast %215 : vector<2x16xf32> to vector<2x16x1xf32>
    %217 = vector.broadcast %216 : vector<2x16x1xf32> to vector<2x16x16xf32>
    %218 = arith.subf %214, %217 : vector<2x16x16xf32>
    %219 = math.exp %218 : vector<2x16x16xf32>
    %cst_92 = arith.constant dense<0.000000e+00> : vector<2x16xf32>
    %220 = vector.multi_reduction <add>, %219, %cst_92 [2] : vector<2x16x16xf32> to vector<2x16xf32>
    %221 = vector.shape_cast %220 : vector<2x16xf32> to vector<2x16x1xf32>
    %222 = vector.broadcast %221 : vector<2x16x1xf32> to vector<2x16x16xf32>
    %223 = arith.divf %219, %222 : vector<2x16x16xf32>
    %224 = arith.addf %202, %223 : vector<2x16x16xf32>
    %cst_93 = arith.constant dense<0.000000e+00> : vector<2x16xf32>
    %225 = vector.multi_reduction <add>, %223, %cst_93 [1] : vector<2x16x16xf32> to vector<2x16xf32>
    %226 = vector.shape_cast %225 : vector<2x16xf32> to vector<2x1x16xf32>
    %cst_94 = arith.constant 6.250000e-02 : f32
    %227 = vector.broadcast %cst_94 : f32 to vector<2x1x16xf32>
    %228 = arith.mulf %226, %227 : vector<2x1x16xf32>
    %229 = arith.truncf %228 : vector<2x1x16xf32> to vector<2x1x16xbf16>
    %230 = vector.extract_strided_slice %120 {offsets = [0, 0, 128], sizes = [2, 16, 32], strides = [1, 1, 1]} : vector<2x16x256xbf16> to vector<2x16x32xbf16>
    "tpu.trace_start"() <{level = 10 : i32, message = "bqk,bkd->bqd"}> : () -> ()
    %cst_95 = arith.constant dense<0.000000e+00> : vector<2x1x32xf32>
    %231 = tpu.matmul %229, %230, %cst_95 {dimension_numbers = #tpu.dot_dimension_numbers<[2], [1], [1], [2], [0, 0, 0, 1, 1, 2], [0], [0]>} : vector<2x1x16xbf16>, vector<2x16x32xbf16>, vector<2x1x32xf32> -> vector<2x1x32xf32>
    "tpu.trace_stop"() : () -> ()
    %232 = vector.extract_strided_slice %116 {offsets = [0, 0, 160], sizes = [2, 16, 32], strides = [1, 1, 1]} : vector<2x16x256xbf16> to vector<2x16x32xbf16>
    %233 = vector.extract_strided_slice %118 {offsets = [0, 0, 160], sizes = [2, 16, 32], strides = [1, 1, 1]} : vector<2x16x256xbf16> to vector<2x16x32xbf16>
    "tpu.trace_start"() <{level = 10 : i32, message = "bqd,bkd->bqk"}> : () -> ()
    %cst_96 = arith.constant dense<0.000000e+00> : vector<2x16x16xf32>
    %234 = tpu.matmul %232, %233, %cst_96 {dimension_numbers = #tpu.dot_dimension_numbers<[2], [2], [1], [1], [0, 0, 0, 1, 1, 1], [0], [0]>} : vector<2x16x32xbf16>, vector<2x16x32xbf16>, vector<2x16x16xf32> -> vector<2x16x16xf32>
    "tpu.trace_stop"() : () -> ()
    %cst_97 = arith.constant 0.176776692 : f32
    %235 = vector.broadcast %cst_97 : f32 to vector<2x16x16xf32>
    %236 = arith.mulf %234, %235 : vector<2x16x16xf32>
    %cst_98 = arith.constant dense<0xFF800000> : vector<2x16xf32>
    %237 = vector.multi_reduction <maximumf>, %236, %cst_98 [2] : vector<2x16x16xf32> to vector<2x16xf32>
    %238 = vector.shape_cast %237 : vector<2x16xf32> to vector<2x16x1xf32>
    %239 = vector.broadcast %238 : vector<2x16x1xf32> to vector<2x16x16xf32>
    %240 = arith.subf %236, %239 : vector<2x16x16xf32>
    %241 = math.exp %240 : vector<2x16x16xf32>
    %cst_99 = arith.constant dense<0.000000e+00> : vector<2x16xf32>
    %242 = vector.multi_reduction <add>, %241, %cst_99 [2] : vector<2x16x16xf32> to vector<2x16xf32>
    %243 = vector.shape_cast %242 : vector<2x16xf32> to vector<2x16x1xf32>
    %244 = vector.broadcast %243 : vector<2x16x1xf32> to vector<2x16x16xf32>
    %245 = arith.divf %241, %244 : vector<2x16x16xf32>
    %246 = arith.addf %224, %245 : vector<2x16x16xf32>
    %cst_100 = arith.constant dense<0.000000e+00> : vector<2x16xf32>
    %247 = vector.multi_reduction <add>, %245, %cst_100 [1] : vector<2x16x16xf32> to vector<2x16xf32>
    %248 = vector.shape_cast %247 : vector<2x16xf32> to vector<2x1x16xf32>
    %cst_101 = arith.constant 6.250000e-02 : f32
    %249 = vector.broadcast %cst_101 : f32 to vector<2x1x16xf32>
    %250 = arith.mulf %248, %249 : vector<2x1x16xf32>
    %251 = arith.truncf %250 : vector<2x1x16xf32> to vector<2x1x16xbf16>
    %252 = vector.extract_strided_slice %120 {offsets = [0, 0, 160], sizes = [2, 16, 32], strides = [1, 1, 1]} : vector<2x16x256xbf16> to vector<2x16x32xbf16>
    "tpu.trace_start"() <{level = 10 : i32, message = "bqk,bkd->bqd"}> : () -> ()
    %cst_102 = arith.constant dense<0.000000e+00> : vector<2x1x32xf32>
    %253 = tpu.matmul %251, %252, %cst_102 {dimension_numbers = #tpu.dot_dimension_numbers<[2], [1], [1], [2], [0, 0, 0, 1, 1, 2], [0], [0]>} : vector<2x1x16xbf16>, vector<2x16x32xbf16>, vector<2x1x32xf32> -> vector<2x1x32xf32>
    "tpu.trace_stop"() : () -> ()
    %254 = vector.extract_strided_slice %116 {offsets = [0, 0, 192], sizes = [2, 16, 32], strides = [1, 1, 1]} : vector<2x16x256xbf16> to vector<2x16x32xbf16>
    %255 = vector.extract_strided_slice %118 {offsets = [0, 0, 192], sizes = [2, 16, 32], strides = [1, 1, 1]} : vector<2x16x256xbf16> to vector<2x16x32xbf16>
    "tpu.trace_start"() <{level = 10 : i32, message = "bqd,bkd->bqk"}> : () -> ()
    %cst_103 = arith.constant dense<0.000000e+00> : vector<2x16x16xf32>
    %256 = tpu.matmul %254, %255, %cst_103 {dimension_numbers = #tpu.dot_dimension_numbers<[2], [2], [1], [1], [0, 0, 0, 1, 1, 1], [0], [0]>} : vector<2x16x32xbf16>, vector<2x16x32xbf16>, vector<2x16x16xf32> -> vector<2x16x16xf32>
    "tpu.trace_stop"() : () -> ()
    %cst_104 = arith.constant 0.176776692 : f32
    %257 = vector.broadcast %cst_104 : f32 to vector<2x16x16xf32>
    %258 = arith.mulf %256, %257 : vector<2x16x16xf32>
    %cst_105 = arith.constant dense<0xFF800000> : vector<2x16xf32>
    %259 = vector.multi_reduction <maximumf>, %258, %cst_105 [2] : vector<2x16x16xf32> to vector<2x16xf32>
    %260 = vector.shape_cast %259 : vector<2x16xf32> to vector<2x16x1xf32>
    %261 = vector.broadcast %260 : vector<2x16x1xf32> to vector<2x16x16xf32>
    %262 = arith.subf %258, %261 : vector<2x16x16xf32>
    %263 = math.exp %262 : vector<2x16x16xf32>
    %cst_106 = arith.constant dense<0.000000e+00> : vector<2x16xf32>
    %264 = vector.multi_reduction <add>, %263, %cst_106 [2] : vector<2x16x16xf32> to vector<2x16xf32>
    %265 = vector.shape_cast %264 : vector<2x16xf32> to vector<2x16x1xf32>
    %266 = vector.broadcast %265 : vector<2x16x1xf32> to vector<2x16x16xf32>
    %267 = arith.divf %263, %266 : vector<2x16x16xf32>
    %268 = arith.addf %246, %267 : vector<2x16x16xf32>
    %cst_107 = arith.constant dense<0.000000e+00> : vector<2x16xf32>
    %269 = vector.multi_reduction <add>, %267, %cst_107 [1] : vector<2x16x16xf32> to vector<2x16xf32>
    %270 = vector.shape_cast %269 : vector<2x16xf32> to vector<2x1x16xf32>
    %cst_108 = arith.constant 6.250000e-02 : f32
    %271 = vector.broadcast %cst_108 : f32 to vector<2x1x16xf32>
    %272 = arith.mulf %270, %271 : vector<2x1x16xf32>
    %273 = arith.truncf %272 : vector<2x1x16xf32> to vector<2x1x16xbf16>
    %274 = vector.extract_strided_slice %120 {offsets = [0, 0, 192], sizes = [2, 16, 32], strides = [1, 1, 1]} : vector<2x16x256xbf16> to vector<2x16x32xbf16>
    "tpu.trace_start"() <{level = 10 : i32, message = "bqk,bkd->bqd"}> : () -> ()
    %cst_109 = arith.constant dense<0.000000e+00> : vector<2x1x32xf32>
    %275 = tpu.matmul %273, %274, %cst_109 {dimension_numbers = #tpu.dot_dimension_numbers<[2], [1], [1], [2], [0, 0, 0, 1, 1, 2], [0], [0]>} : vector<2x1x16xbf16>, vector<2x16x32xbf16>, vector<2x1x32xf32> -> vector<2x1x32xf32>
    "tpu.trace_stop"() : () -> ()
    %276 = vector.extract_strided_slice %116 {offsets = [0, 0, 224], sizes = [2, 16, 32], strides = [1, 1, 1]} : vector<2x16x256xbf16> to vector<2x16x32xbf16>
    %277 = vector.extract_strided_slice %118 {offsets = [0, 0, 224], sizes = [2, 16, 32], strides = [1, 1, 1]} : vector<2x16x256xbf16> to vector<2x16x32xbf16>
    "tpu.trace_start"() <{level = 10 : i32, message = "bqd,bkd->bqk"}> : () -> ()
    %cst_110 = arith.constant dense<0.000000e+00> : vector<2x16x16xf32>
    %278 = tpu.matmul %276, %277, %cst_110 {dimension_numbers = #tpu.dot_dimension_numbers<[2], [2], [1], [1], [0, 0, 0, 1, 1, 1], [0], [0]>} : vector<2x16x32xbf16>, vector<2x16x32xbf16>, vector<2x16x16xf32> -> vector<2x16x16xf32>
    "tpu.trace_stop"() : () -> ()
    %cst_111 = arith.constant 0.176776692 : f32
    %279 = vector.broadcast %cst_111 : f32 to vector<2x16x16xf32>
    %280 = arith.mulf %278, %279 : vector<2x16x16xf32>
    %cst_112 = arith.constant dense<0xFF800000> : vector<2x16xf32>
    %281 = vector.multi_reduction <maximumf>, %280, %cst_112 [2] : vector<2x16x16xf32> to vector<2x16xf32>
    %282 = vector.shape_cast %281 : vector<2x16xf32> to vector<2x16x1xf32>
    %283 = vector.broadcast %282 : vector<2x16x1xf32> to vector<2x16x16xf32>
    %284 = arith.subf %280, %283 : vector<2x16x16xf32>
    %285 = math.exp %284 : vector<2x16x16xf32>
    %cst_113 = arith.constant dense<0.000000e+00> : vector<2x16xf32>
    %286 = vector.multi_reduction <add>, %285, %cst_113 [2] : vector<2x16x16xf32> to vector<2x16xf32>
    %287 = vector.shape_cast %286 : vector<2x16xf32> to vector<2x16x1xf32>
    %288 = vector.broadcast %287 : vector<2x16x1xf32> to vector<2x16x16xf32>
    %289 = arith.divf %285, %288 : vector<2x16x16xf32>
    %290 = arith.addf %268, %289 : vector<2x16x16xf32>
    %cst_114 = arith.constant dense<0.000000e+00> : vector<2x16xf32>
    %291 = vector.multi_reduction <add>, %289, %cst_114 [1] : vector<2x16x16xf32> to vector<2x16xf32>
    %292 = vector.shape_cast %291 : vector<2x16xf32> to vector<2x1x16xf32>
    %cst_115 = arith.constant 6.250000e-02 : f32
    %293 = vector.broadcast %cst_115 : f32 to vector<2x1x16xf32>
    %294 = arith.mulf %292, %293 : vector<2x1x16xf32>
    %295 = arith.truncf %294 : vector<2x1x16xf32> to vector<2x1x16xbf16>
    %296 = vector.extract_strided_slice %120 {offsets = [0, 0, 224], sizes = [2, 16, 32], strides = [1, 1, 1]} : vector<2x16x256xbf16> to vector<2x16x32xbf16>
    "tpu.trace_start"() <{level = 10 : i32, message = "bqk,bkd->bqd"}> : () -> ()
    %cst_116 = arith.constant dense<0.000000e+00> : vector<2x1x32xf32>
    %297 = tpu.matmul %295, %296, %cst_116 {dimension_numbers = #tpu.dot_dimension_numbers<[2], [1], [1], [2], [0, 0, 0, 1, 1, 2], [0], [0]>} : vector<2x1x16xbf16>, vector<2x16x32xbf16>, vector<2x1x32xf32> -> vector<2x1x32xf32>
    "tpu.trace_stop"() : () -> ()
    %298 = tpu.concatenate %143, %165, %187, %209, %231, %253, %275, %297 in 2 : vector<2x1x32xf32>, vector<2x1x32xf32>, vector<2x1x32xf32>, vector<2x1x32xf32>, vector<2x1x32xf32>, vector<2x1x32xf32>, vector<2x1x32xf32>, vector<2x1x32xf32> -> vector<2x1x256xf32>
    %299 = vector.shape_cast %298 : vector<2x1x256xf32> to vector<2x256xf32>
    %c0_117 = arith.constant 0 : index
    %c0_118 = arith.constant 0 : index
    %300 = vector.load %arg10[%c0_117, %c0_118] : memref<256x640xbf16, #tpu.memory_space<vmem>>, vector<256x256xbf16>
    %c0_119 = arith.constant 0 : index
    %c256 = arith.constant 256 : index
    %301 = vector.load %arg10[%c0_119, %c256] : memref<256x640xbf16, #tpu.memory_space<vmem>>, vector<256x256xbf16>
    %c0_120 = arith.constant 0 : index
    %c512 = arith.constant 512 : index
    %302 = vector.load %arg10[%c0_120, %c512] : memref<256x640xbf16, #tpu.memory_space<vmem>>, vector<256x128xbf16>
    %c0_121 = arith.constant 0 : index
    %c0_122 = arith.constant 0 : index
    %303 = vector.load %arg11[%c0_121, %c0_122] : memref<1x640xf32, #tpu.memory_space<vmem>>, vector<1x256xf32>
    %c0_123 = arith.constant 0 : index
    %c256_124 = arith.constant 256 : index
    %304 = vector.load %arg11[%c0_123, %c256_124] : memref<1x640xf32, #tpu.memory_space<vmem>>, vector<1x256xf32>
    %c0_125 = arith.constant 0 : index
    %c512_126 = arith.constant 512 : index
    %305 = vector.load %arg11[%c0_125, %c512_126] : memref<1x640xf32, #tpu.memory_space<vmem>>, vector<1x128xf32>
    %306 = arith.truncf %299 : vector<2x256xf32> to vector<2x256xbf16>
    %cst_127 = arith.constant dense<0.000000e+00> : vector<2x256xf32>
    %307 = tpu.matmul %306, %300, %cst_127 {dimension_numbers = #tpu.dot_dimension_numbers<[1], [0], [0], [1], [0, 0, 1, 1], [], []>} : vector<2x256xbf16>, vector<256x256xbf16>, vector<2x256xf32> -> vector<2x256xf32>
    %308 = vector.broadcast %303 : vector<1x256xf32> to vector<2x256xf32>
    %309 = arith.addf %307, %308 : vector<2x256xf32>
    %310 = arith.addf %107, %309 : vector<2x256xf32>
    %311 = arith.truncf %310 : vector<2x256xf32> to vector<2x256xbf16>
    %cst_128 = arith.constant dense<0.000000e+00> : vector<2x256xf32>
    %312 = tpu.matmul %311, %301, %cst_128 {dimension_numbers = #tpu.dot_dimension_numbers<[1], [0], [0], [1], [0, 0, 1, 1], [], []>} : vector<2x256xbf16>, vector<256x256xbf16>, vector<2x256xf32> -> vector<2x256xf32>
    %313 = vector.broadcast %304 : vector<1x256xf32> to vector<2x256xf32>
    %314 = arith.addf %312, %313 : vector<2x256xf32>
    %cst_129 = arith.constant 0.000000e+00 : f32
    %315 = vector.broadcast %cst_129 : f32 to vector<2x256xf32>
    %316 = arith.maximumf %314, %315 : vector<2x256xf32>
    %317 = arith.truncf %316 : vector<2x256xf32> to vector<2x256xbf16>
    %cst_130 = arith.constant dense<0.000000e+00> : vector<2x128xf32>
    %318 = tpu.matmul %317, %302, %cst_130 {dimension_numbers = #tpu.dot_dimension_numbers<[1], [0], [0], [1], [0, 0, 1, 1], [], []>} : vector<2x256xbf16>, vector<256x128xbf16>, vector<2x128xf32> -> vector<2x128xf32>
    %319 = vector.broadcast %305 : vector<1x128xf32> to vector<2x128xf32>
    %320 = arith.addf %318, %319 : vector<2x128xf32>
    %c0_131 = arith.constant 0 : index
    %c0_132 = arith.constant 0 : index
    %321 = vector.load %arg12[%c0_131, %c0_132] : memref<2x128xf32, #tpu.memory_space<vmem>>, vector<2x128xf32>
    tpu.vector_store %arg12[%c0_131, %c0_132], %320 {strides = array<i32>} : memref<2x128xf32, #tpu.memory_space<vmem>>, vector<2x128xf32>,
    %cst_133 = arith.constant 1.250000e-01 : f32
    %322 = vector.broadcast %cst_133 : f32 to vector<2x16x16xf32>
    %323 = arith.mulf %290, %322 : vector<2x16x16xf32>
    %c0_134 = arith.constant 0 : index
    %c0_135 = arith.constant 0 : index
    %c0_136 = arith.constant 0 : index
    %324 = vector.load %arg13[%c0_134, %c0_135, %c0_136] : memref<2x16x16xf32, #tpu.memory_space<vmem>>, vector<2x16x16xf32>
    tpu.vector_store %arg13[%c0_134, %c0_135, %c0_136], %323 {strides = array<i32>} : memref<2x16x16xf32, #tpu.memory_space<vmem>>, vector<2x16x16xf32>,
    return
  }
  func.func @transform_0(%arg0: i32) -> (i32, i32, i32) {
    %c0_i32 = arith.constant 0 : i32
    %c0_i32_0 = arith.constant 0 : i32
    %c0_i32_1 = arith.constant 0 : i32
    return %arg0, %c0_i32, %c0_i32_0 : i32, i32, i32
  }
  func.func @transform_1(%arg0: i32) -> (i32, i32, i32) {
    %c0_i32 = arith.constant 0 : i32
    %c0_i32_0 = arith.constant 0 : i32
    %c0_i32_1 = arith.constant 0 : i32
    %c0_i32_2 = arith.constant 0 : i32
    return %c0_i32, %c0_i32_0, %c0_i32_1 : i32, i32, i32
  }
  func.func @transform_2(%arg0: i32) -> (i32, i32) {
    %c0_i32 = arith.constant 0 : i32
    %c0_i32_0 = arith.constant 0 : i32
    %c0_i32_1 = arith.constant 0 : i32
    return %c0_i32, %c0_i32_0 : i32, i32
  }
  func.func @transform_3(%arg0: i32) -> (i32, i32, i32) {
    %c0_i32 = arith.constant 0 : i32
    %c0_i32_0 = arith.constant 0 : i32
    %c0_i32_1 = arith.constant 0 : i32
    %c0_i32_2 = arith.constant 0 : i32
    return %c0_i32, %c0_i32_0, %c0_i32_1 : i32, i32, i32
  }
  func.func @transform_4(%arg0: i32) -> (i32, i32) {
    %c0_i32 = arith.constant 0 : i32
    %c0_i32_0 = arith.constant 0 : i32
    %c0_i32_1 = arith.constant 0 : i32
    return %c0_i32, %c0_i32_0 : i32, i32
  }
  func.func @transform_5(%arg0: i32) -> (i32, i32, i32) {
    %c0_i32 = arith.constant 0 : i32
    %c0_i32_0 = arith.constant 0 : i32
    %c0_i32_1 = arith.constant 0 : i32
    %c0_i32_2 = arith.constant 0 : i32
    return %c0_i32, %c0_i32_0, %c0_i32_1 : i32, i32, i32
  }
  func.func @transform_6(%arg0: i32) -> (i32, i32) {
    %c0_i32 = arith.constant 0 : i32
    %c0_i32_0 = arith.constant 0 : i32
    %c0_i32_1 = arith.constant 0 : i32
    return %c0_i32, %c0_i32_0 : i32, i32
  }
  func.func @transform_7(%arg0: i32) -> (i32, i32) {
    %c0_i32 = arith.constant 0 : i32
    %c0_i32_0 = arith.constant 0 : i32
    %c0_i32_1 = arith.constant 0 : i32
    return %c0_i32, %c0_i32_0 : i32, i32
  }
  func.func @transform_8(%arg0: i32) -> (i32, i32) {
    %c0_i32 = arith.constant 0 : i32
    %c0_i32_0 = arith.constant 0 : i32
    %c0_i32_1 = arith.constant 0 : i32
    return %c0_i32, %c0_i32_0 : i32, i32
  }
  func.func @transform_9(%arg0: i32) -> (i32, i32) {
    %c0_i32 = arith.constant 0 : i32
    %c0_i32_0 = arith.constant 0 : i32
    %c0_i32_1 = arith.constant 0 : i32
    return %c0_i32, %c0_i32_0 : i32, i32
  }
  func.func @transform_10(%arg0: i32) -> (i32, i32) {
    %c0_i32 = arith.constant 0 : i32
    %c0_i32_0 = arith.constant 0 : i32
    %c0_i32_1 = arith.constant 0 : i32
    return %c0_i32, %c0_i32_0 : i32, i32
  }
  func.func @transform_11(%arg0: i32) -> (i32, i32) {
    %c0_i32 = arith.constant 0 : i32
    %c0_i32_0 = arith.constant 0 : i32
    return %arg0, %c0_i32 : i32, i32
  }
  func.func @transform_12(%arg0: i32) -> (i32, i32, i32) {
    %c0_i32 = arith.constant 0 : i32
    %c0_i32_0 = arith.constant 0 : i32
    %c0_i32_1 = arith.constant 0 : i32
    return %arg0, %c0_i32, %c0_i32_0 : i32, i32, i32
  }
}

</mosaic_0001>

<llo_original>
// kernel: financial_cnn_forward.1
$region0: #{financial_cnn_forward.1}
  #allocation0 [shape = 'u32[]', space=smem, size = 0x4, offset = 0x4, fixed_abs, tag = 'smem constant byte address 0x4 - core index']
  #allocation1 [shape = 'u32[144,128]{1,0:T(1,128)}', space=vmem, size = 0x12000, scoped, tag = 'internal scratch']
  %s0 = inlined_call_operand.vmem [shape: f32[2,16,4], index: 0, kind: input, shape index: {}]
  %s1 = inlined_call_operand.vmem [shape: bf16[3,4,64], index: 1, kind: input, shape index: {}]
  %s2 = inlined_call_operand.vmem [shape: f32[1,64], index: 2, kind: input, shape index: {}]
  %s3 = inlined_call_operand.vmem [shape: bf16[3,64,128], index: 3, kind: input, shape index: {}]
  %s4 = inlined_call_operand.vmem [shape: f32[1,128], index: 4, kind: input, shape index: {}]
  %s5 = inlined_call_operand.vmem [shape: bf16[3,128,256], index: 5, kind: input, shape index: {}]
  %s6 = inlined_call_operand.vmem [shape: f32[1,256], index: 6, kind: input, shape index: {}]
  %s7 = inlined_call_operand.vmem [shape: bf16[256,768], index: 7, kind: input, shape index: {}]
  %s8 = inlined_call_operand.vmem [shape: f32[1,768], index: 8, kind: input, shape index: {}]
  %s9 = inlined_call_operand.vmem [shape: bf16[256,640], index: 9, kind: input, shape index: {}]
  %s10 = inlined_call_operand.vmem [shape: f32[1,640], index: 10, kind: input, shape index: {}]
  %s11 = inlined_call_operand.hbm [shape: f32[2,128], index: 11, kind: output, shape index: {0}]
  %s12 = inlined_call_operand.hbm [shape: f32[2,16,16], index: 12, kind: output, shape index: {1}]
  %13 = xla_tuple %s11, %s12
  %s14 = sld [smem:[#allocation0]]
  $region62: #{financial_cnn_forward.1} parent=0
    _
  %s16 = ssub.s32 1, %s14
  %s17 = scalar_select 0, %s16, %s14
  $region1: #{financial_cnn_forward.1} parent=0
    #allocation2 [shape = 'u8[1024]{0}', space=vmem, size = 0x400, scoped, tag = 'output window, operand 0, single buffered']
    #allocation3 [shape = 's32[1]{0}', space=sflag, size = 0x4, scoped, tag = 'scoped memory for financial_cnn_forward.1']
    #allocation4 [shape = 'u8[16384]{0}', space=vmem, size = 0x4000, scoped, tag = 'output window, operand 1, single buffered']
    #allocation5 [shape = 's32[1]{0}', space=sflag, size = 0x4, scoped, tag = 'scoped memory for financial_cnn_forward.1']
    %18 = vsyncpa [#allocation3], 0
    %19 = vsyncpa [#allocation5], 0
    // Predicated region
    $region2: #{financial_cnn_forward.1} parent=1 // pred_check
      _
    $region3: #{financial_cnn_forward.1} parent=1 // pred_check_branch
      %21 = sbr.rel (0) target = $region5
    $region4: #{financial_cnn_forward.1} parent=1 // pred_region
      _
    $region5: #{financial_cnn_forward.1} parent=1 // pred_fallthru
      _
    // Predicated region
    $region6: #{financial_cnn_forward.1} parent=1 // pred_check
      _
    $region7: #{financial_cnn_forward.1} parent=1 // pred_check_branch
      %23 = sbr.rel (0) target = $region9
    $region8: #{financial_cnn_forward.1} parent=1 // pred_region
      _
    $region9: #{financial_cnn_forward.1} parent=1 // pred_fallthru
      _
    // Predicated region
    $region10: #{financial_cnn_forward.1} parent=1 // pred_check
      _
    $region11: #{financial_cnn_forward.1} parent=1 // pred_check_branch
      %25 = sbr.rel (0) target = $region13
    $region12: #{financial_cnn_forward.1} parent=1 // pred_region
      _
    $region13: #{financial_cnn_forward.1} parent=1 // pred_fallthru
      _
    // Predicated region
    $region14: #{financial_cnn_forward.1} parent=1 // pred_check
      _
    $region15: #{financial_cnn_forward.1} parent=1 // pred_check_branch
      %27 = sbr.rel (0) target = $region17
    $region16: #{financial_cnn_forward.1} parent=1 // pred_region
      _
    $region17: #{financial_cnn_forward.1} parent=1 // pred_fallthru
      _
    // Predicated region
    $region18: #{financial_cnn_forward.1} parent=1 // pred_check
      _
    $region19: #{financial_cnn_forward.1} parent=1 // pred_check_branch
      %29 = sbr.rel (0) target = $region21
    $region20: #{financial_cnn_forward.1} parent=1 // pred_region
      _
    $region21: #{financial_cnn_forward.1} parent=1 // pred_fallthru
      _
    // Predicated region
    $region22: #{financial_cnn_forward.1} parent=1 // pred_check
      _
    $region23: #{financial_cnn_forward.1} parent=1 // pred_check_branch
      %31 = sbr.rel (0) target = $region25
    $region24: #{financial_cnn_forward.1} parent=1 // pred_region
      _
    $region25: #{financial_cnn_forward.1} parent=1 // pred_fallthru
      _
    // Predicated region
    $region26: #{financial_cnn_forward.1} parent=1 // pred_check
      _
    $region27: #{financial_cnn_forward.1} parent=1 // pred_check_branch
      %33 = sbr.rel (0) target = $region29
    $region28: #{financial_cnn_forward.1} parent=1 // pred_region
      _
    $region29: #{financial_cnn_forward.1} parent=1 // pred_fallthru
      _
    // Predicated region
    $region30: #{financial_cnn_forward.1} parent=1 // pred_check
      _
    $region31: #{financial_cnn_forward.1} parent=1 // pred_check_branch
      %35 = sbr.rel (0) target = $region33
    $region32: #{financial_cnn_forward.1} parent=1 // pred_region
      _
    $region33: #{financial_cnn_forward.1} parent=1 // pred_fallthru
      _
    // Predicated region
    $region34: #{financial_cnn_forward.1} parent=1 // pred_check
      _
    $region35: #{financial_cnn_forward.1} parent=1 // pred_check_branch
      %37 = sbr.rel (0) target = $region37
    $region36: #{financial_cnn_forward.1} parent=1 // pred_region
      _
    $region37: #{financial_cnn_forward.1} parent=1 // pred_fallthru
      _
    // Predicated region
    $region38: #{financial_cnn_forward.1} parent=1 // pred_check
      _
    $region39: #{financial_cnn_forward.1} parent=1 // pred_check_branch
      %39 = sbr.rel (0) target = $region41
    $region40: #{financial_cnn_forward.1} parent=1 // pred_region
      _
    $region41: #{financial_cnn_forward.1} parent=1 // pred_fallthru
      _
    // Predicated region
    $region42: #{financial_cnn_forward.1} parent=1 // pred_check
      _
    $region43: #{financial_cnn_forward.1} parent=1 // pred_check_branch
      %41 = sbr.rel (0) target = $region45
    $region44: #{financial_cnn_forward.1} parent=1 // pred_region
      _
    $region45: #{financial_cnn_forward.1} parent=1 // pred_fallthru
      _
    %v43 = vlaneseq
    %v44 = vshrl.u32 %v43, 7
    %v45 = vadd.s32 %v44, 8
    %vm46 = vcmp.ne.s32.totalorder %v44, 0
    %vm47 = vcmp.ne.s32.totalorder %v45, 0
    %vm48 = vcmp.ne.s32.totalorder %v44, 15
    %vm49 = vcmp.ne.s32.totalorder %v45, 15
    %v50 = vld [vmem:[%s0] sm:$0xff]
    %v51 = vld [vmem:[%s0 + $0x8] sm:$0xff]
    %v52 = vld [vmem:[%s0 + $0x10] sm:$0xff]
    %v53 = vld [vmem:[%s0 + $0x18] sm:$0xff]
    %vm58 = vcmask 1040384
    %v59 = vrot.slane %v50, 7
    %v60 = vrot.slane %v51, 7
    %v61 = vsel %vm58, %v59, %v60
    %v62 = vrot.slane %v52, 7
    %v63 = vsel %vm58, %v60, %v62
    %v64 = vrot.slane %v53, 7
    %v65 = vsel %vm58, %v62, %v64
    %v70 = vsel %vm58, 0.0, %v59
    %v71 = vsel %vm46, 1, 0
    %v72 = vsel %vm47, 1, 0
    %vm73 = vcmp.eq.s32.totalorder %v71, 1
    %vm74 = vcmp.eq.s32.totalorder %v72, 1
    %v75 = vsel %vm73, %v70, 0.0
    %v76 = vsel %vm74, %v61, 0.0
    %v77 = vsel %vm73, %v63, 0.0
    %v78 = vsel %vm74, %v65, 0.0
    %vm79 = vcmask 1046528
    %v80 = vrot.slane %v50, 1
    %v81 = vrot.slane %v51, 1
    %v82 = vsel %vm79, %v80, %v81
    %v83 = vrot.slane %v52, 1
    %v84 = vsel %vm79, %v81, %v83
    %v85 = vrot.slane %v53, 1
    %v86 = vsel %vm79, %v83, %v85
    %v91 = vsel %vm79, %v85, 0.0
    %v92 = vsel %vm48, 1, 0
    %v93 = vsel %vm49, 1, 0
    %vm94 = vcmp.eq.s32.totalorder %v92, 1
    %vm95 = vcmp.eq.s32.totalorder %v93, 1
    %v96 = vsel %vm94, %v82, 0.0
    %v97 = vsel %vm95, %v84, 0.0
    %v98 = vsel %vm94, %v86, 0.0
    %v99 = vsel %vm95, %v91, 0.0
    %v100 = vpack.c.bf16 %v76, %v75
    %v101 = vpack.c.bf16 %v78, %v77
    %v102 = vld [vmem:[%s1] sm:$0x3]
    %v103 = vpack.c.bf16 %v51, %v50
    %v104 = vpack.c.bf16 %v53, %v52
    %s105 = scalar_lea.vmem %s1, 2
    %v106 = vld [vmem:[%s105] sm:$0x3]
    %vm107 = vcmask 31744
    %v109 = vsel %vm107, %v103, 0
    %v112 = vsel %vm107, %v104, 0
    %vm114 = vcmask 1041408
    %v116 = vsel %vm114, %v106, 0
    %118 = vmatprep.subr.bf16.mxu0 0
    %119 = vmatpush1.bf16.msra.mxu0 %v116
    %120 = vmatprep.subr.bf16.mxu0 0
    %121 = vmatpush1.bf16.msra.mxu0 0
    %122 = vmatprep.subr.bf16.mxu0 0
    %123 = vmatpush1.bf16.msra.mxu0 0
    %124 = vmatprep.subr.bf16.mxu0 0
    %125 = vmatpush1.bf16.msra.mxu0 0
    %126 = vmatprep.subr.bf16.mxu0 0
    %127 = vmatpush1.bf16.msra.mxu0 0
    %128 = vmatprep.subr.bf16.mxu0 0
    %129 = vmatpush1.bf16.msra.mxu0 0
    %130 = vmatprep.subr.bf16.mxu0 0
    %131 = vmatpush1.bf16.msra.mxu0 0
    %132 = vmatprep.subr.bf16.mxu0 0
    %133 = vmatpush1.bf16.msra.mxu0 0
    %134 = vmatprep.subr.bf16.mxu0 0
    %135 = vmatpush1.bf16.msra.mxu0 0
    %136 = vmatprep.subr.bf16.mxu0 0
    %137 = vmatpush1.bf16.msra.mxu0 0
    %138 = vmatprep.subr.bf16.mxu0 0
    %139 = vmatpush1.bf16.msra.mxu0 0
    %140 = vmatprep.subr.bf16.mxu0 0
    %141 = vmatpush1.bf16.msra.mxu0 0
    %142 = vmatprep.subr.bf16.mxu0 0
    %143 = vmatpush1.bf16.msra.mxu0 0
    %144 = vmatprep.subr.bf16.mxu0 0
    %145 = vmatpush1.bf16.msra.mxu0 0
    %146 = vmatprep.subr.bf16.mxu0 0
    %147 = vmatpush1.bf16.msra.mxu0 0
    %148 = vmatprep.subr.bf16.mxu0 0
    %149 = vmatpush1.bf16.msra.mxu0 0
    %150 = vmatprep.mubr.bf16.mxu0 0
    %151 = vmatmul.mubr.bf16.gmra.mrb[0].mxu0 %v109
    %v152 = vpop.f32.mrb[0].mxu0
    %v153 = vadd.f32 0.0, %v152
    %v154 = vpop.f32.mrb[0].mxu0
    %v155 = vpop.f32.mrb[0].mxu0
    %v156 = vadd.f32 0.0, %v155
    %v157 = vpop.f32.mrb[0].mxu0
    %158 = vmatprep.mubr.bf16.mxu0 0
    %159 = vmatmul.mubr.bf16.gmra.mrb[0].mxu0 %v112
    %v160 = vpop.f32.mrb[0].mxu0
    %v161 = vadd.f32 0.0, %v160
    %v162 = vpop.f32.mrb[0].mxu0
    %v163 = vpop.f32.mrb[0].mxu0
    %v164 = vadd.f32 0.0, %v163
    %v165 = vpop.f32.mrb[0].mxu0
    %166 = vdwg.mxu0
    %v168 = vsel %vm107, %v100, 0
    %v171 = vsel %vm107, %v101, 0
    %v174 = vsel %vm114, %v102, 0
    %176 = vmatprep.subr.bf16.mxu0 0
    %177 = vmatpush1.bf16.msra.mxu0 %v174
    %178 = vmatprep.subr.bf16.mxu0 0
    %179 = vmatpush1.bf16.msra.mxu0 0
    %180 = vmatprep.subr.bf16.mxu0 0
    %181 = vmatpush1.bf16.msra.mxu0 0
    %182 = vmatprep.subr.bf16.mxu0 0
    %183 = vmatpush1.bf16.msra.mxu0 0
    %184 = vmatprep.subr.bf16.mxu0 0
    %185 = vmatpush1.bf16.msra.mxu0 0
    %186 = vmatprep.subr.bf16.mxu0 0
    %187 = vmatpush1.bf16.msra.mxu0 0
    %188 = vmatprep.subr.bf16.mxu0 0
    %189 = vmatpush1.bf16.msra.mxu0 0
    %190 = vmatprep.subr.bf16.mxu0 0
    %191 = vmatpush1.bf16.msra.mxu0 0
    %192 = vmatprep.subr.bf16.mxu0 0
    %193 = vmatpush1.bf16.msra.mxu0 0
    %194 = vmatprep.subr.bf16.mxu0 0
    %195 = vmatpush1.bf16.msra.mxu0 0
    %196 = vmatprep.subr.bf16.mxu0 0
    %197 = vmatpush1.bf16.msra.mxu0 0
    %198 = vmatprep.subr.bf16.mxu0 0
    %199 = vmatpush1.bf16.msra.mxu0 0
    %200 = vmatprep.subr.bf16.mxu0 0
    %201 = vmatpush1.bf16.msra.mxu0 0
    %202 = vmatprep.subr.bf16.mxu0 0
    %203 = vmatpush1.bf16.msra.mxu0 0
    %204 = vmatprep.subr.bf16.mxu0 0
    %205 = vmatpush1.bf16.msra.mxu0 0
    %206 = vmatprep.subr.bf16.mxu0 0
    %207 = vmatpush1.bf16.msra.mxu0 0
    %208 = vmatprep.mubr.bf16.mxu0 0
    %209 = vmatmul.mubr.bf16.gmra.mrb[0].mxu0 %v168
    %v210 = vpop.f32.mrb[0].mxu0
    %v211 = vadd.f32 %v153, %v210
    %v212 = vpop.f32.mrb[0].mxu0
    %v213 = vpop.f32.mrb[0].mxu0
    %v214 = vadd.f32 %v156, %v213
    %v215 = vpop.f32.mrb[0].mxu0
    %216 = vmatprep.mubr.bf16.mxu0 0
    %217 = vmatmul.mubr.bf16.gmra.mrb[0].mxu0 %v171
    %v218 = vpop.f32.mrb[0].mxu0
    %v219 = vadd.f32 %v161, %v218
    %v220 = vpop.f32.mrb[0].mxu0
    %v221 = vpop.f32.mrb[0].mxu0
    %v222 = vadd.f32 %v164, %v221
    %v223 = vpop.f32.mrb[0].mxu0
    %224 = vdwg.mxu0
    %v225 = vpack.c.bf16 %v97, %v96
    %v226 = vpack.c.bf16 %v99, %v98
    %s227 = scalar_lea.vmem %s1, 4
    %v228 = vld [vmem:[%s227] sm:$0x3]
    %v230 = vsel %vm107, %v225, 0
    %v233 = vsel %vm107, %v226, 0
    %v236 = vsel %vm114, %v228, 0
    %238 = vmatprep.subr.bf16.mxu0 0
    %239 = vmatpush1.bf16.msra.mxu0 %v236
    %240 = vmatprep.subr.bf16.mxu0 0
    %241 = vmatpush1.bf16.msra.mxu0 0
    %242 = vmatprep.subr.bf16.mxu0 0
    %243 = vmatpush1.bf16.msra.mxu0 0
    %244 = vmatprep.subr.bf16.mxu0 0
    %245 = vmatpush1.bf16.msra.mxu0 0
    %246 = vmatprep.subr.bf16.mxu0 0
    %247 = vmatpush1.bf16.msra.mxu0 0
    %248 = vmatprep.subr.bf16.mxu0 0
    %249 = vmatpush1.bf16.msra.mxu0 0
    %250 = vmatprep.subr.bf16.mxu0 0
    %251 = vmatpush1.bf16.msra.mxu0 0
    %252 = vmatprep.subr.bf16.mxu0 0
    %253 = vmatpush1.bf16.msra.mxu0 0
    %254 = vmatprep.subr.bf16.mxu0 0
    %255 = vmatpush1.bf16.msra.mxu0 0
    %256 = vmatprep.subr.bf16.mxu0 0
    %257 = vmatpush1.bf16.msra.mxu0 0
    %258 = vmatprep.subr.bf16.mxu0 0
    %259 = vmatpush1.bf16.msra.mxu0 0
    %260 = vmatprep.subr.bf16.mxu0 0
    %261 = vmatpush1.bf16.msra.mxu0 0
    %262 = vmatprep.subr.bf16.mxu0 0
    %263 = vmatpush1.bf16.msra.mxu0 0
    %264 = vmatprep.subr.bf16.mxu0 0
    %265 = vmatpush1.bf16.msra.mxu0 0
    %266 = vmatprep.subr.bf16.mxu0 0
    %267 = vmatpush1.bf16.msra.mxu0 0
    %268 = vmatprep.subr.bf16.mxu0 0
    %269 = vmatpush1.bf16.msra.mxu0 0
    %270 = vmatprep.mubr.bf16.mxu0 0
    %271 = vmatmul.mubr.bf16.gmra.mrb[0].mxu0 %v230
    %v272 = vpop.f32.mrb[0].mxu0
    %v273 = vadd.f32 0.0, %v272
    %v274 = vpop.f32.mrb[0].mxu0
    %v275 = vpop.f32.mrb[0].mxu0
    %v276 = vadd.f32 0.0, %v275
    %v277 = vpop.f32.mrb[0].mxu0
    %278 = vmatprep.mubr.bf16.mxu0 0
    %279 = vmatmul.mubr.bf16.gmra.mrb[0].mxu0 %v233
    %v280 = vpop.f32.mrb[0].mxu0
    %v281 = vadd.f32 0.0, %v280
    %v282 = vpop.f32.mrb[0].mxu0
    %v283 = vpop.f32.mrb[0].mxu0
    %v284 = vadd.f32 0.0, %v283
    %v285 = vpop.f32.mrb[0].mxu0
    %286 = vdwg.mxu0
    %v287 = vadd.f32 %v211, %v273
    %v288 = vadd.f32 %v214, %v276
    %v289 = vadd.f32 %v219, %v281
    %v290 = vadd.f32 %v222, %v284
    %v291 = vld [vmem:[%s2] sm:$0x1]
    %v293 = vlaneseq
    %v294 = vshrl.u32 %v293, 7
    %v295 = vsub.s32 0, %v294
    %v296 = vrot.slane %v291, %v295
    %v298 = vadd.f32 %v287, %v296
    %v299 = vadd.f32 %v288, %v296
    %v300 = vadd.f32 %v289, %v296
    %v301 = vadd.f32 %v290, %v296
    %v302 = vmax.f32 %v298, 0.0
    %v303 = vmax.f32 %v299, 0.0
    %v304 = vmax.f32 %v300, 0.0
    %v305 = vmax.f32 %v301, 0.0
    %v310 = vrot.slane %v302, 7
    %v311 = vrot.slane %v303, 7
    %v312 = vsel %vm58, %v310, %v311
    %v313 = vrot.slane %v304, 7
    %v314 = vsel %vm58, %v311, %v313
    %v315 = vrot.slane %v305, 7
    %v316 = vsel %vm58, %v313, %v315
    %v321 = vsel %vm58, 0.0, %v310
    %v322 = vsel %vm73, %v321, 0.0
    %v323 = vsel %vm74, %v312, 0.0
    %v324 = vsel %vm73, %v314, 0.0
    %v325 = vsel %vm74, %v316, 0.0
    %v326 = vrot.slane %v302, 1
    %v327 = vrot.slane %v303, 1
    %v328 = vsel %vm79, %v326, %v327
    %v329 = vrot.slane %v304, 1
    %v330 = vsel %vm79, %v327, %v329
    %v331 = vrot.slane %v305, 1
    %v332 = vsel %vm79, %v329, %v331
    %v337 = vsel %vm79, %v331, 0.0
    %v338 = vsel %vm94, %v328, 0.0
    %v339 = vsel %vm95, %v330, 0.0
    %v340 = vsel %vm94, %v332, 0.0
    %v341 = vsel %vm95, %v337, 0.0
    %v342 = vpack.c.bf16 %v323, %v322
    %v343 = vpack.c.bf16 %v325, %v324
    %v344 = vld [vmem:[%s3] sm:$0xf]
    %v345 = vld [vmem:[%s3 + $0x4] sm:$0xf]
    %v346 = vld [vmem:[%s3 + $0x8] sm:$0xf]
    %v347 = vld [vmem:[%s3 + $0xc] sm:$0xf]
    %v348 = vld [vmem:[%s3 + $0x10] sm:$0xf]
    %v349 = vld [vmem:[%s3 + $0x14] sm:$0xf]
    %v350 = vld [vmem:[%s3 + $0x18] sm:$0xf]
    %v351 = vld [vmem:[%s3 + $0x1c] sm:$0xf]
    %v352 = vpack.c.bf16 %v303, %v302
    %v353 = vpack.c.bf16 %v305, %v304
    %s354 = scalar_lea.vmem %s3, 32
    %v355 = vld [vmem:[%s354] sm:$0xf]
    %v356 = vld [vmem:[%s354 + $0x4] sm:$0xf]
    %v357 = vld [vmem:[%s354 + $0x8] sm:$0xf]
    %v358 = vld [vmem:[%s354 + $0xc] sm:$0xf]
    %v359 = vld [vmem:[%s354 + $0x10] sm:$0xf]
    %v360 = vld [vmem:[%s354 + $0x14] sm:$0xf]
    %v361 = vld [vmem:[%s354 + $0x18] sm:$0xf]
    %v362 = vld [vmem:[%s354 + $0x1c] sm:$0xf]
    %v371 = vunpack.c.l.b16 %v355
    %v372 = vunpack.c.l.b16 %v356
    %v373 = vunpack.c.l.b16 %v357
    %v374 = vunpack.c.l.b16 %v358
    %v375 = vunpack.c.l.b16 %v359
    %v376 = vunpack.c.l.b16 %v360
    %v377 = vunpack.c.l.b16 %v361
    %v378 = vunpack.c.l.b16 %v362
    %v379 = vpack.c.b16 %v372, %v371
    %v380 = vpack.c.b16 %v374, %v373
    %v381 = vpack.c.b16 %v376, %v375
    %v382 = vpack.c.b16 %v378, %v377
    %vm387 = vcmask 523264
    %v389 = vsel %vm387, %v352, 0
    %v392 = vsel %vm387, %v353, 0
    %394 = vmatprep.subr.bf16.mxu0 0
    %395 = vmatpush1.bf16.msra.mxu0 %v379
    %396 = vmatprep.subr.bf16.mxu0 0
    %397 = vmatpush1.bf16.msra.mxu0 %v380
    %398 = vmatprep.subr.bf16.mxu0 0
    %399 = vmatpush1.bf16.msra.mxu0 %v381
    %400 = vmatprep.subr.bf16.mxu0 0
    %401 = vmatpush1.bf16.msra.mxu0 %v382
    %402 = vmatprep.subr.bf16.mxu0 0
    %403 = vmatpush1.bf16.msra.mxu0 0
    %404 = vmatprep.subr.bf16.mxu0 0
    %405 = vmatpush1.bf16.msra.mxu0 0
    %406 = vmatprep.subr.bf16.mxu0 0
    %407 = vmatpush1.bf16.msra.mxu0 0
    %408 = vmatprep.subr.bf16.mxu0 0
    %409 = vmatpush1.bf16.msra.mxu0 0
    %410 = vmatprep.subr.bf16.mxu0 0
    %411 = vmatpush1.bf16.msra.mxu0 0
    %412 = vmatprep.subr.bf16.mxu0 0
    %413 = vmatpush1.bf16.msra.mxu0 0
    %414 = vmatprep.subr.bf16.mxu0 0
    %415 = vmatpush1.bf16.msra.mxu0 0
    %416 = vmatprep.subr.bf16.mxu0 0
    %417 = vmatpush1.bf16.msra.mxu0 0
    %418 = vmatprep.subr.bf16.mxu0 0
    %419 = vmatpush1.bf16.msra.mxu0 0
    %420 = vmatprep.subr.bf16.mxu0 0
    %421 = vmatpush1.bf16.msra.mxu0 0
    %422 = vmatprep.subr.bf16.mxu0 0
    %423 = vmatpush1.bf16.msra.mxu0 0
    %424 = vmatprep.subr.bf16.mxu0 0
    %425 = vmatpush1.bf16.msra.mxu0 0
    %426 = vmatprep.mubr.bf16.mxu0 0
    %427 = vmatmul.mubr.bf16.gmra.mrb[0].mxu0 %v389
    %v428 = vpop.f32.mrb[0].mxu0
    %v429 = vadd.f32 0.0, %v428
    %v430 = vpop.f32.mrb[0].mxu0
    %v431 = vpop.f32.mrb[0].mxu0
    %v432 = vadd.f32 0.0, %v431
    %v433 = vpop.f32.mrb[0].mxu0
    %434 = vmatprep.mubr.bf16.mxu0 0
    %435 = vmatmul.mubr.bf16.gmra.mrb[0].mxu0 %v392
    %v436 = vpop.f32.mrb[0].mxu0
    %v437 = vadd.f32 0.0, %v436
    %v438 = vpop.f32.mrb[0].mxu0
    %v439 = vpop.f32.mrb[0].mxu0
    %v440 = vadd.f32 0.0, %v439
    %v441 = vpop.f32.mrb[0].mxu0
    %442 = vdwg.mxu0
    %v451 = vunpack.c.l.b16 %v344
    %v452 = vunpack.c.l.b16 %v345
    %v453 = vunpack.c.l.b16 %v346
    %v454 = vunpack.c.l.b16 %v347
    %v455 = vunpack.c.l.b16 %v348
    %v456 = vunpack.c.l.b16 %v349
    %v457 = vunpack.c.l.b16 %v350
    %v458 = vunpack.c.l.b16 %v351
    %v459 = vpack.c.b16 %v452, %v451
    %v460 = vpack.c.b16 %v454, %v453
    %v461 = vpack.c.b16 %v456, %v455
    %v462 = vpack.c.b16 %v458, %v457
    %v468 = vsel %vm387, %v342, 0
    %v471 = vsel %vm387, %v343, 0
    %473 = vmatprep.subr.bf16.mxu0 0
    %474 = vmatpush1.bf16.msra.mxu0 %v459
    %475 = vmatprep.subr.bf16.mxu0 0
    %476 = vmatpush1.bf16.msra.mxu0 %v460
    %477 = vmatprep.subr.bf16.mxu0 0
    %478 = vmatpush1.bf16.msra.mxu0 %v461
    %479 = vmatprep.subr.bf16.mxu0 0
    %480 = vmatpush1.bf16.msra.mxu0 %v462
    %481 = vmatprep.subr.bf16.mxu0 0
    %482 = vmatpush1.bf16.msra.mxu0 0
    %483 = vmatprep.subr.bf16.mxu0 0
    %484 = vmatpush1.bf16.msra.mxu0 0
    %485 = vmatprep.subr.bf16.mxu0 0
    %486 = vmatpush1.bf16.msra.mxu0 0
    %487 = vmatprep.subr.bf16.mxu0 0
    %488 = vmatpush1.bf16.msra.mxu0 0
    %489 = vmatprep.subr.bf16.mxu0 0
    %490 = vmatpush1.bf16.msra.mxu0 0
    %491 = vmatprep.subr.bf16.mxu0 0
    %492 = vmatpush1.bf16.msra.mxu0 0
    %493 = vmatprep.subr.bf16.mxu0 0
    %494 = vmatpush1.bf16.msra.mxu0 0
    %495 = vmatprep.subr.bf16.mxu0 0
    %496 = vmatpush1.bf16.msra.mxu0 0
    %497 = vmatprep.subr.bf16.mxu0 0
    %498 = vmatpush1.bf16.msra.mxu0 0
    %499 = vmatprep.subr.bf16.mxu0 0
    %500 = vmatpush1.bf16.msra.mxu0 0
    %501 = vmatprep.subr.bf16.mxu0 0
    %502 = vmatpush1.bf16.msra.mxu0 0
    %503 = vmatprep.subr.bf16.mxu0 0
    %504 = vmatpush1.bf16.msra.mxu0 0
    %505 = vmatprep.mubr.bf16.mxu0 0
    %506 = vmatmul.mubr.bf16.gmra.mrb[0].mxu0 %v468
    %v507 = vpop.f32.mrb[0].mxu0
    %v508 = vadd.f32 %v429, %v507
    %v509 = vpop.f32.mrb[0].mxu0
    %v510 = vpop.f32.mrb[0].mxu0
    %v511 = vadd.f32 %v432, %v510
    %v512 = vpop.f32.mrb[0].mxu0
    %513 = vmatprep.mubr.bf16.mxu0 0
    %514 = vmatmul.mubr.bf16.gmra.mrb[0].mxu0 %v471
    %v515 = vpop.f32.mrb[0].mxu0
    %v516 = vadd.f32 %v437, %v515
    %v517 = vpop.f32.mrb[0].mxu0
    %v518 = vpop.f32.mrb[0].mxu0
    %v519 = vadd.f32 %v440, %v518
    %v520 = vpop.f32.mrb[0].mxu0
    %521 = vdwg.mxu0
    %v522 = vpack.c.bf16 %v339, %v338
    %v523 = vpack.c.bf16 %v341, %v340
    %s524 = scalar_lea.vmem %s3, 64
    %v525 = vld [vmem:[%s524] sm:$0xf]
    %v526 = vld [vmem:[%s524 + $0x4] sm:$0xf]
    %v527 = vld [vmem:[%s524 + $0x8] sm:$0xf]
    %v528 = vld [vmem:[%s524 + $0xc] sm:$0xf]
    %v529 = vld [vmem:[%s524 + $0x10] sm:$0xf]
    %v530 = vld [vmem:[%s524 + $0x14] sm:$0xf]
    %v531 = vld [vmem:[%s524 + $0x18] sm:$0xf]
    %v532 = vld [vmem:[%s524 + $0x1c] sm:$0xf]
    %v541 = vunpack.c.l.b16 %v525
    %v542 = vunpack.c.l.b16 %v526
    %v543 = vunpack.c.l.b16 %v527
    %v544 = vunpack.c.l.b16 %v528
    %v545 = vunpack.c.l.b16 %v529
    %v546 = vunpack.c.l.b16 %v530
    %v547 = vunpack.c.l.b16 %v531
    %v548 = vunpack.c.l.b16 %v532
    %v549 = vpack.c.b16 %v542, %v541
    %v550 = vpack.c.b16 %v544, %v543
    %v551 = vpack.c.b16 %v546, %v545
    %v552 = vpack.c.b16 %v548, %v547
    %v558 = vsel %vm387, %v522, 0
    %v561 = vsel %vm387, %v523, 0
    %563 = vmatprep.subr.bf16.mxu0 0
    %564 = vmatpush1.bf16.msra.mxu0 %v549
    %565 = vmatprep.subr.bf16.mxu0 0
    %566 = vmatpush1.bf16.msra.mxu0 %v550
    %567 = vmatprep.subr.bf16.mxu0 0
    %568 = vmatpush1.bf16.msra.mxu0 %v551
    %569 = vmatprep.subr.bf16.mxu0 0
    %570 = vmatpush1.bf16.msra.mxu0 %v552
    %571 = vmatprep.subr.bf16.mxu0 0
    %572 = vmatpush1.bf16.msra.mxu0 0
    %573 = vmatprep.subr.bf16.mxu0 0
    %574 = vmatpush1.bf16.msra.mxu0 0
    %575 = vmatprep.subr.bf16.mxu0 0
    %576 = vmatpush1.bf16.msra.mxu0 0
    %577 = vmatprep.subr.bf16.mxu0 0
    %578 = vmatpush1.bf16.msra.mxu0 0
    %579 = vmatprep.subr.bf16.mxu0 0
    %580 = vmatpush1.bf16.msra.mxu0 0
    %581 = vmatprep.subr.bf16.mxu0 0
    %582 = vmatpush1.bf16.msra.mxu0 0
    %583 = vmatprep.subr.bf16.mxu0 0
    %584 = vmatpush1.bf16.msra.mxu0 0
    %585 = vmatprep.subr.bf16.mxu0 0
    %586 = vmatpush1.bf16.msra.mxu0 0
    %587 = vmatprep.subr.bf16.mxu0 0
    %588 = vmatpush1.bf16.msra.mxu0 0
    %589 = vmatprep.subr.bf16.mxu0 0
    %590 = vmatpush1.bf16.msra.mxu0 0
    %591 = vmatprep.subr.bf16.mxu0 0
    %592 = vmatpush1.bf16.msra.mxu0 0
    %593 = vmatprep.subr.bf16.mxu0 0
    %594 = vmatpush1.bf16.msra.mxu0 0
    %595 = vmatprep.mubr.bf16.mxu0 0
    %596 = vmatmul.mubr.bf16.gmra.mrb[0].mxu0 %v558
    %v597 = vpop.f32.mrb[0].mxu0
    %v598 = vadd.f32 0.0, %v597
    %v599 = vpop.f32.mrb[0].mxu0
    %v600 = vpop.f32.mrb[0].mxu0
    %v601 = vadd.f32 0.0, %v600
    %v602 = vpop.f32.mrb[0].mxu0
    %603 = vmatprep.mubr.bf16.mxu0 0
    %604 = vmatmul.mubr.bf16.gmra.mrb[0].mxu0 %v561
    %v605 = vpop.f32.mrb[0].mxu0
    %v606 = vadd.f32 0.0, %v605
    %v607 = vpop.f32.mrb[0].mxu0
    %v608 = vpop.f32.mrb[0].mxu0
    %v609 = vadd.f32 0.0, %v608
    %v610 = vpop.f32.mrb[0].mxu0
    %611 = vdwg.mxu0
    %v612 = vadd.f32 %v508, %v598
    %v613 = vadd.f32 %v511, %v601
    %v614 = vadd.f32 %v516, %v606
    %v615 = vadd.f32 %v519, %v609
    %v616 = vld [vmem:[%s4] sm:$0x1]
    %v618 = vlaneseq
    %v619 = vshrl.u32 %v618, 7
    %v620 = vsub.s32 0, %v619
    %v621 = vrot.slane %v616, %v620
    %v623 = vadd.f32 %v612, %v621
    %v624 = vadd.f32 %v613, %v621
    %v625 = vadd.f32 %v614, %v621
    %v626 = vadd.f32 %v615, %v621
    %v627 = vmax.f32 %v623, 0.0
    %v628 = vmax.f32 %v624, 0.0
    %v629 = vmax.f32 %v625, 0.0
    %v630 = vmax.f32 %v626, 0.0
    %v635 = vrot.slane %v627, 7
    %v636 = vrot.slane %v628, 7
    %v637 = vsel %vm58, %v635, %v636
    %v638 = vrot.slane %v629, 7
    %v639 = vsel %vm58, %v636, %v638
    %v640 = vrot.slane %v630, 7
    %v641 = vsel %vm58, %v638, %v640
    %v646 = vsel %vm58, 0.0, %v635
    %v647 = vsel %vm73, %v646, 0.0
    %v648 = vsel %vm74, %v637, 0.0
    %v649 = vsel %vm73, %v639, 0.0
    %v650 = vsel %vm74, %v641, 0.0
    %v651 = vrot.slane %v627, 1
    %v652 = vrot.slane %v628, 1
    %v653 = vsel %vm79, %v651, %v652
    %v654 = vrot.slane %v629, 1
    %v655 = vsel %vm79, %v652, %v654
    %v656 = vrot.slane %v630, 1
    %v657 = vsel %vm79, %v654, %v656
    %v662 = vsel %vm79, %v656, 0.0
    %v663 = vsel %vm94, %v653, 0.0
    %v664 = vsel %vm95, %v655, 0.0
    %v665 = vsel %vm94, %v657, 0.0
    %v666 = vsel %vm95, %v662, 0.0
    %v667 = vpack.c.bf16 %v648, %v647
    %v668 = vpack.c.bf16 %v650, %v649
    %v669 = vld [vmem:[%s5] sm:$0xff]
    %v670 = vld [vmem:[%s5 + $0x8] sm:$0xff]
    %v671 = vld [vmem:[%s5 + $0x10] sm:$0xff]
    %v672 = vld [vmem:[%s5 + $0x18] sm:$0xff]
    %v673 = vld [vmem:[%s5 + $0x20] sm:$0xff]
    %v674 = vld [vmem:[%s5 + $0x28] sm:$0xff]
    %v675 = vld [vmem:[%s5 + $0x30] sm:$0xff]
    %v676 = vld [vmem:[%s5 + $0x38] sm:$0xff]
    %v677 = vld [vmem:[%s5 + $0x40] sm:$0xff]
    %v678 = vld [vmem:[%s5 + $0x48] sm:$0xff]
    %v679 = vld [vmem:[%s5 + $0x50] sm:$0xff]
    %v680 = vld [vmem:[%s5 + $0x58] sm:$0xff]
    %v681 = vld [vmem:[%s5 + $0x60] sm:$0xff]
    %v682 = vld [vmem:[%s5 + $0x68] sm:$0xff]
    %v683 = vld [vmem:[%s5 + $0x70] sm:$0xff]
    %v684 = vld [vmem:[%s5 + $0x78] sm:$0xff]
    %v685 = vpack.c.bf16 %v628, %v627
    %v686 = vpack.c.bf16 %v630, %v629
    %s687 = scalar_lea.vmem %s5, 128
    %v688 = vld [vmem:[%s687] sm:$0xff]
    %v689 = vld [vmem:[%s687 + $0x8] sm:$0xff]
    %v690 = vld [vmem:[%s687 + $0x10] sm:$0xff]
    %v691 = vld [vmem:[%s687 + $0x18] sm:$0xff]
    %v692 = vld [vmem:[%s687 + $0x20] sm:$0xff]
    %v693 = vld [vmem:[%s687 + $0x28] sm:$0xff]
    %v694 = vld [vmem:[%s687 + $0x30] sm:$0xff]
    %v695 = vld [vmem:[%s687 + $0x38] sm:$0xff]
    %v696 = vld [vmem:[%s687 + $0x40] sm:$0xff]
    %v697 = vld [vmem:[%s687 + $0x48] sm:$0xff]
    %v698 = vld [vmem:[%s687 + $0x50] sm:$0xff]
    %v699 = vld [vmem:[%s687 + $0x58] sm:$0xff]
    %v700 = vld [vmem:[%s687 + $0x60] sm:$0xff]
    %v701 = vld [vmem:[%s687 + $0x68] sm:$0xff]
    %v702 = vld [vmem:[%s687 + $0x70] sm:$0xff]
    %v703 = vld [vmem:[%s687 + $0x78] sm:$0xff]
    %v720 = vunpack.c.l.b16 %v688
    %v721 = vunpack.c.h.b16 %v688
    %v722 = vunpack.c.l.b16 %v689
    %v723 = vunpack.c.h.b16 %v689
    %v724 = vunpack.c.l.b16 %v690
    %v725 = vunpack.c.h.b16 %v690
    %v726 = vunpack.c.l.b16 %v691
    %v727 = vunpack.c.h.b16 %v691
    %v728 = vunpack.c.l.b16 %v692
    %v729 = vunpack.c.h.b16 %v692
    %v730 = vunpack.c.l.b16 %v693
    %v731 = vunpack.c.h.b16 %v693
    %v732 = vunpack.c.l.b16 %v694
    %v733 = vunpack.c.h.b16 %v694
    %v734 = vunpack.c.l.b16 %v695
    %v735 = vunpack.c.h.b16 %v695
    %v736 = vunpack.c.l.b16 %v696
    %v737 = vunpack.c.h.b16 %v696
    %v738 = vunpack.c.l.b16 %v697
    %v739 = vunpack.c.h.b16 %v697
    %v740 = vunpack.c.l.b16 %v698
    %v741 = vunpack.c.h.b16 %v698
    %v742 = vunpack.c.l.b16 %v699
    %v743 = vunpack.c.h.b16 %v699
    %v744 = vunpack.c.l.b16 %v700
    %v745 = vunpack.c.h.b16 %v700
    %v746 = vunpack.c.l.b16 %v701
    %v747 = vunpack.c.h.b16 %v701
    %v748 = vunpack.c.l.b16 %v702
    %v749 = vunpack.c.h.b16 %v702
    %v750 = vunpack.c.l.b16 %v703
    %v751 = vunpack.c.h.b16 %v703
    %v752 = vpack.c.b16 %v722, %v720
    %v753 = vpack.c.b16 %v723, %v721
    %v754 = vpack.c.b16 %v726, %v724
    %v755 = vpack.c.b16 %v727, %v725
    %v756 = vpack.c.b16 %v730, %v728
    %v757 = vpack.c.b16 %v731, %v729
    %v758 = vpack.c.b16 %v734, %v732
    %v759 = vpack.c.b16 %v735, %v733
    %v760 = vpack.c.b16 %v738, %v736
    %v761 = vpack.c.b16 %v739, %v737
    %v762 = vpack.c.b16 %v742, %v740
    %v763 = vpack.c.b16 %v743, %v741
    %v764 = vpack.c.b16 %v746, %v744
    %v765 = vpack.c.b16 %v747, %v745
    %v766 = vpack.c.b16 %v750, %v748
    %v767 = vpack.c.b16 %v751, %v749
    %784 = vmatprep.subr.bf16.mxu0 %v753
    %785 = vmatpush1.bf16.msra.mxu0 %v752
    %786 = vmatprep.subr.bf16.mxu0 %v755
    %787 = vmatpush1.bf16.msra.mxu0 %v754
    %788 = vmatprep.subr.bf16.mxu0 %v757
    %789 = vmatpush1.bf16.msra.mxu0 %v756
    %790 = vmatprep.subr.bf16.mxu0 %v759
    %791 = vmatpush1.bf16.msra.mxu0 %v758
    %792 = vmatprep.subr.bf16.mxu0 %v761
    %793 = vmatpush1.bf16.msra.mxu0 %v760
    %794 = vmatprep.subr.bf16.mxu0 %v763
    %795 = vmatpush1.bf16.msra.mxu0 %v762
    %796 = vmatprep.subr.bf16.mxu0 %v765
    %797 = vmatpush1.bf16.msra.mxu0 %v764
    %798 = vmatprep.subr.bf16.mxu0 %v767
    %799 = vmatpush1.bf16.msra.mxu0 %v766
    %800 = vmatprep.subr.bf16.mxu0 0
    %801 = vmatpush1.bf16.msra.mxu0 0
    %802 = vmatprep.subr.bf16.mxu0 0
    %803 = vmatpush1.bf16.msra.mxu0 0
    %804 = vmatprep.subr.bf16.mxu0 0
    %805 = vmatpush1.bf16.msra.mxu0 0
    %806 = vmatprep.subr.bf16.mxu0 0
    %807 = vmatpush1.bf16.msra.mxu0 0
    %808 = vmatprep.subr.bf16.mxu0 0
    %809 = vmatpush1.bf16.msra.mxu0 0
    %810 = vmatprep.subr.bf16.mxu0 0
    %811 = vmatpush1.bf16.msra.mxu0 0
    %812 = vmatprep.subr.bf16.mxu0 0
    %813 = vmatpush1.bf16.msra.mxu0 0
    %814 = vmatprep.subr.bf16.mxu0 0
    %815 = vmatpush1.bf16.msra.mxu0 0
    %816 = vmatprep.mubr.bf16.mxu0 0
    %817 = vmatmul.mubr.bf16.gmra.mrb[0].mxu0 %v685
    %v818 = vpop.f32.mrb[0].mxu0
    %v819 = vadd.f32 0.0, %v818
    %v820 = vpop.f32.mrb[0].mxu0
    %v821 = vadd.f32 0.0, %v820
    %v822 = vpop.f32.mrb[0].mxu0
    %v823 = vadd.f32 0.0, %v822
    %v824 = vpop.f32.mrb[0].mxu0
    %v825 = vadd.f32 0.0, %v824
    %826 = vmatprep.mubr.bf16.mxu0 0
    %827 = vmatmul.mubr.bf16.gmra.mrb[0].mxu0 %v686
    %v828 = vpop.f32.mrb[0].mxu0
    %v829 = vadd.f32 0.0, %v828
    %v830 = vpop.f32.mrb[0].mxu0
    %v831 = vadd.f32 0.0, %v830
    %v832 = vpop.f32.mrb[0].mxu0
    %v833 = vadd.f32 0.0, %v832
    %v834 = vpop.f32.mrb[0].mxu0
    %v835 = vadd.f32 0.0, %v834
    %836 = vdwg.mxu0
    %v853 = vunpack.c.l.b16 %v669
    %v854 = vunpack.c.h.b16 %v669
    %v855 = vunpack.c.l.b16 %v670
    %v856 = vunpack.c.h.b16 %v670
    %v857 = vunpack.c.l.b16 %v671
    %v858 = vunpack.c.h.b16 %v671
    %v859 = vunpack.c.l.b16 %v672
    %v860 = vunpack.c.h.b16 %v672
    %v861 = vunpack.c.l.b16 %v673
    %v862 = vunpack.c.h.b16 %v673
    %v863 = vunpack.c.l.b16 %v674
    %v864 = vunpack.c.h.b16 %v674
    %v865 = vunpack.c.l.b16 %v675
    %v866 = vunpack.c.h.b16 %v675
    %v867 = vunpack.c.l.b16 %v676
    %v868 = vunpack.c.h.b16 %v676
    %v869 = vunpack.c.l.b16 %v677
    %v870 = vunpack.c.h.b16 %v677
    %v871 = vunpack.c.l.b16 %v678
    %v872 = vunpack.c.h.b16 %v678
    %v873 = vunpack.c.l.b16 %v679
    %v874 = vunpack.c.h.b16 %v679
    %v875 = vunpack.c.l.b16 %v680
    %v876 = vunpack.c.h.b16 %v680
    %v877 = vunpack.c.l.b16 %v681
    %v878 = vunpack.c.h.b16 %v681
    %v879 = vunpack.c.l.b16 %v682
    %v880 = vunpack.c.h.b16 %v682
    %v881 = vunpack.c.l.b16 %v683
    %v882 = vunpack.c.h.b16 %v683
    %v883 = vunpack.c.l.b16 %v684
    %v884 = vunpack.c.h.b16 %v684
    %v885 = vpack.c.b16 %v855, %v853
    %v886 = vpack.c.b16 %v856, %v854
    %v887 = vpack.c.b16 %v859, %v857
    %v888 = vpack.c.b16 %v860, %v858
    %v889 = vpack.c.b16 %v863, %v861
    %v890 = vpack.c.b16 %v864, %v862
    %v891 = vpack.c.b16 %v867, %v865
    %v892 = vpack.c.b16 %v868, %v866
    %v893 = vpack.c.b16 %v871, %v869
    %v894 = vpack.c.b16 %v872, %v870
    %v895 = vpack.c.b16 %v875, %v873
    %v896 = vpack.c.b16 %v876, %v874
    %v897 = vpack.c.b16 %v879, %v877
    %v898 = vpack.c.b16 %v880, %v878
    %v899 = vpack.c.b16 %v883, %v881
    %v900 = vpack.c.b16 %v884, %v882
    %917 = vmatprep.subr.bf16.mxu0 %v886
    %918 = vmatpush1.bf16.msra.mxu0 %v885
    %919 = vmatprep.subr.bf16.mxu0 %v888
    %920 = vmatpush1.bf16.msra.mxu0 %v887
    %921 = vmatprep.subr.bf16.mxu0 %v890
    %922 = vmatpush1.bf16.msra.mxu0 %v889
    %923 = vmatprep.subr.bf16.mxu0 %v892
    %924 = vmatpush1.bf16.msra.mxu0 %v891
    %925 = vmatprep.subr.bf16.mxu0 %v894
    %926 = vmatpush1.bf16.msra.mxu0 %v893
    %927 = vmatprep.subr.bf16.mxu0 %v896
    %928 = vmatpush1.bf16.msra.mxu0 %v895
    %929 = vmatprep.subr.bf16.mxu0 %v898
    %930 = vmatpush1.bf16.msra.mxu0 %v897
    %931 = vmatprep.subr.bf16.mxu0 %v900
    %932 = vmatpush1.bf16.msra.mxu0 %v899
    %933 = vmatprep.subr.bf16.mxu0 0
    %934 = vmatpush1.bf16.msra.mxu0 0
    %935 = vmatprep.subr.bf16.mxu0 0
    %936 = vmatpush1.bf16.msra.mxu0 0
    %937 = vmatprep.subr.bf16.mxu0 0
    %938 = vmatpush1.bf16.msra.mxu0 0
    %939 = vmatprep.subr.bf16.mxu0 0
    %940 = vmatpush1.bf16.msra.mxu0 0
    %941 = vmatprep.subr.bf16.mxu0 0
    %942 = vmatpush1.bf16.msra.mxu0 0
    %943 = vmatprep.subr.bf16.mxu0 0
    %944 = vmatpush1.bf16.msra.mxu0 0
    %945 = vmatprep.subr.bf16.mxu0 0
    %946 = vmatpush1.bf16.msra.mxu0 0
    %947 = vmatprep.subr.bf16.mxu0 0
    %948 = vmatpush1.bf16.msra.mxu0 0
    %949 = vmatprep.mubr.bf16.mxu0 0
    %950 = vmatmul.mubr.bf16.gmra.mrb[0].mxu0 %v667
    %v951 = vpop.f32.mrb[0].mxu0
    %v952 = vadd.f32 %v819, %v951
    %v953 = vpop.f32.mrb[0].mxu0
    %v954 = vadd.f32 %v821, %v953
    %v955 = vpop.f32.mrb[0].mxu0
    %v956 = vadd.f32 %v823, %v955
    %v957 = vpop.f32.mrb[0].mxu0
    %v958 = vadd.f32 %v825, %v957
    %959 = vmatprep.mubr.bf16.mxu0 0
    %960 = vmatmul.mubr.bf16.gmra.mrb[0].mxu0 %v668
    %v961 = vpop.f32.mrb[0].mxu0
    %v962 = vadd.f32 %v829, %v961
    %v963 = vpop.f32.mrb[0].mxu0
    %v964 = vadd.f32 %v831, %v963
    %v965 = vpop.f32.mrb[0].mxu0
    %v966 = vadd.f32 %v833, %v965
    %v967 = vpop.f32.mrb[0].mxu0
    %v968 = vadd.f32 %v835, %v967
    %969 = vdwg.mxu0
    %v970 = vpack.c.bf16 %v664, %v663
    %v971 = vpack.c.bf16 %v666, %v665
    %s972 = scalar_lea.vmem %s5, 256
    %v973 = vld [vmem:[%s972] sm:$0xff]
    %v974 = vld [vmem:[%s972 + $0x8] sm:$0xff]
    %v975 = vld [vmem:[%s972 + $0x10] sm:$0xff]
    %v976 = vld [vmem:[%s972 + $0x18] sm:$0xff]
    %v977 = vld [vmem:[%s972 + $0x20] sm:$0xff]
    %v978 = vld [vmem:[%s972 + $0x28] sm:$0xff]
    %v979 = vld [vmem:[%s972 + $0x30] sm:$0xff]
    %v980 = vld [vmem:[%s972 + $0x38] sm:$0xff]
    %v981 = vld [vmem:[%s972 + $0x40] sm:$0xff]
    %v982 = vld [vmem:[%s972 + $0x48] sm:$0xff]
    %v983 = vld [vmem:[%s972 + $0x50] sm:$0xff]
    %v984 = vld [vmem:[%s972 + $0x58] sm:$0xff]
    %v985 = vld [vmem:[%s972 + $0x60] sm:$0xff]
    %v986 = vld [vmem:[%s972 + $0x68] sm:$0xff]
    %v987 = vld [vmem:[%s972 + $0x70] sm:$0xff]
    %v988 = vld [vmem:[%s972 + $0x78] sm:$0xff]
    %v1005 = vunpack.c.l.b16 %v973
    %v1006 = vunpack.c.h.b16 %v973
    %v1007 = vunpack.c.l.b16 %v974
    %v1008 = vunpack.c.h.b16 %v974
    %v1009 = vunpack.c.l.b16 %v975
    %v1010 = vunpack.c.h.b16 %v975
    %v1011 = vunpack.c.l.b16 %v976
    %v1012 = vunpack.c.h.b16 %v976
    %v1013 = vunpack.c.l.b16 %v977
    %v1014 = vunpack.c.h.b16 %v977
    %v1015 = vunpack.c.l.b16 %v978
    %v1016 = vunpack.c.h.b16 %v978
    %v1017 = vunpack.c.l.b16 %v979
    %v1018 = vunpack.c.h.b16 %v979
    %v1019 = vunpack.c.l.b16 %v980
    %v1020 = vunpack.c.h.b16 %v980
    %v1021 = vunpack.c.l.b16 %v981
    %v1022 = vunpack.c.h.b16 %v981
    %v1023 = vunpack.c.l.b16 %v982
    %v1024 = vunpack.c.h.b16 %v982
    %v1025 = vunpack.c.l.b16 %v983
    %v1026 = vunpack.c.h.b16 %v983
    %v1027 = vunpack.c.l.b16 %v984
    %v1028 = vunpack.c.h.b16 %v984
    %v1029 = vunpack.c.l.b16 %v985
    %v1030 = vunpack.c.h.b16 %v985
    %v1031 = vunpack.c.l.b16 %v986
    %v1032 = vunpack.c.h.b16 %v986
    %v1033 = vunpack.c.l.b16 %v987
    %v1034 = vunpack.c.h.b16 %v987
    %v1035 = vunpack.c.l.b16 %v988
    %v1036 = vunpack.c.h.b16 %v988
    %v1037 = vpack.c.b16 %v1007, %v1005
    %v1038 = vpack.c.b16 %v1008, %v1006
    %v1039 = vpack.c.b16 %v1011, %v1009
    %v1040 = vpack.c.b16 %v1012, %v1010
    %v1041 = vpack.c.b16 %v1015, %v1013
    %v1042 = vpack.c.b16 %v1016, %v1014
    %v1043 = vpack.c.b16 %v1019, %v1017
    %v1044 = vpack.c.b16 %v1020, %v1018
    %v1045 = vpack.c.b16 %v1023, %v1021
    %v1046 = vpack.c.b16 %v1024, %v1022
    %v1047 = vpack.c.b16 %v1027, %v1025
    %v1048 = vpack.c.b16 %v1028, %v1026
    %v1049 = vpack.c.b16 %v1031, %v1029
    %v1050 = vpack.c.b16 %v1032, %v1030
    %v1051 = vpack.c.b16 %v1035, %v1033
    %v1052 = vpack.c.b16 %v1036, %v1034
    %1069 = vmatprep.subr.bf16.mxu0 %v1038
    %1070 = vmatpush1.bf16.msra.mxu0 %v1037
    %1071 = vmatprep.subr.bf16.mxu0 %v1040
    %1072 = vmatpush1.bf16.msra.mxu0 %v1039
    %1073 = vmatprep.subr.bf16.mxu0 %v1042
    %1074 = vmatpush1.bf16.msra.mxu0 %v1041
    %1075 = vmatprep.subr.bf16.mxu0 %v1044
    %1076 = vmatpush1.bf16.msra.mxu0 %v1043
    %1077 = vmatprep.subr.bf16.mxu0 %v1046
    %1078 = vmatpush1.bf16.msra.mxu0 %v1045
    %1079 = vmatprep.subr.bf16.mxu0 %v1048
    %1080 = vmatpush1.bf16.msra.mxu0 %v1047
    %1081 = vmatprep.subr.bf16.mxu0 %v1050
    %1082 = vmatpush1.bf16.msra.mxu0 %v1049
    %1083 = vmatprep.subr.bf16.mxu0 %v1052
    %1084 = vmatpush1.bf16.msra.mxu0 %v1051
    %1085 = vmatprep.subr.bf16.mxu0 0
    %1086 = vmatpush1.bf16.msra.mxu0 0
    %1087 = vmatprep.subr.bf16.mxu0 0
    %1088 = vmatpush1.bf16.msra.mxu0 0
    %1089 = vmatprep.subr.bf16.mxu0 0
    %1090 = vmatpush1.bf16.msra.mxu0 0
    %1091 = vmatprep.subr.bf16.mxu0 0
    %1092 = vmatpush1.bf16.msra.mxu0 0
    %1093 = vmatprep.subr.bf16.mxu0 0
    %1094 = vmatpush1.bf16.msra.mxu0 0
    %1095 = vmatprep.subr.bf16.mxu0 0
    %1096 = vmatpush1.bf16.msra.mxu0 0
    %1097 = vmatprep.subr.bf16.mxu0 0
    %1098 = vmatpush1.bf16.msra.mxu0 0
    %1099 = vmatprep.subr.bf16.mxu0 0
    %1100 = vmatpush1.bf16.msra.mxu0 0
    %1101 = vmatprep.mubr.bf16.mxu0 0
    %1102 = vmatmul.mubr.bf16.gmra.mrb[0].mxu0 %v970
    %v1103 = vpop.f32.mrb[0].mxu0
    %v1104 = vadd.f32 0.0, %v1103
    %v1105 = vpop.f32.mrb[0].mxu0
    %v1106 = vadd.f32 0.0, %v1105
    %v1107 = vpop.f32.mrb[0].mxu0
    %v1108 = vadd.f32 0.0, %v1107
    %v1109 = vpop.f32.mrb[0].mxu0
    %v1110 = vadd.f32 0.0, %v1109
    %1111 = vmatprep.mubr.bf16.mxu0 0
    %1112 = vmatmul.mubr.bf16.gmra.mrb[0].mxu0 %v971
    %v1113 = vpop.f32.mrb[0].mxu0
    %v1114 = vadd.f32 0.0, %v1113
    %v1115 = vpop.f32.mrb[0].mxu0
    %v1116 = vadd.f32 0.0, %v1115
    %v1117 = vpop.f32.mrb[0].mxu0
    %v1118 = vadd.f32 0.0, %v1117
    %v1119 = vpop.f32.mrb[0].mxu0
    %v1120 = vadd.f32 0.0, %v1119
    %1121 = vdwg.mxu0
    %v1122 = vadd.f32 %v952, %v1104
    %v1123 = vadd.f32 %v954, %v1106
    %v1124 = vadd.f32 %v956, %v1108
    %v1125 = vadd.f32 %v958, %v1110
    %v1126 = vadd.f32 %v962, %v1114
    %v1127 = vadd.f32 %v964, %v1116
    %v1128 = vadd.f32 %v966, %v1118
    %v1129 = vadd.f32 %v968, %v1120
    %v1130 = vld [vmem:[%s6] sm:$0x3]
    %v1132 = vlaneseq
    %v1133 = vshrl.u32 %v1132, 7
    %v1134 = vsub.s32 0, %v1133
    %v1135 = vrot.slane %v1130, %v1134
    %v1136 = vlaneseq
    %v1137 = vshrl.u32 %v1136, 7
    %v1138 = vsub.s32 1, %v1137
    %v1139 = vrot.slane %v1130, %v1138
    %v1142 = vadd.f32 %v1122, %v1135
    %v1143 = vadd.f32 %v1123, %v1139
    %v1144 = vadd.f32 %v1124, %v1135
    %v1145 = vadd.f32 %v1125, %v1139
    %v1146 = vadd.f32 %v1126, %v1135
    %v1147 = vadd.f32 %v1127, %v1139
    %v1148 = vadd.f32 %v1128, %v1135
    %v1149 = vadd.f32 %v1129, %v1139
    %v1150 = vmax.f32 %v1142, 0.0
    %v1151 = vmax.f32 %v1143, 0.0
    %v1152 = vmax.f32 %v1144, 0.0
    %v1153 = vmax.f32 %v1145, 0.0
    %v1154 = vmax.f32 %v1146, 0.0
    %v1155 = vmax.f32 %v1147, 0.0
    %v1156 = vmax.f32 %v1148, 0.0
    %v1157 = vmax.f32 %v1149, 0.0
    %v1158 = vadd.f32 %v1150, %v1152
    %v1159 = vrot.slane %v1158, 4
    %v1160 = vadd.f32 %v1158, %v1159
    %v1161 = vrot.slane %v1160, 2
    %v1162 = vadd.f32 %v1160, %v1161
    %v1163 = vrot.slane %v1162, 1
    %v1164 = vadd.f32 %v1162, %v1163
    %v1165 = vadd.f32 %v1151, %v1153
    %v1166 = vrot.slane %v1165, 4
    %v1167 = vadd.f32 %v1165, %v1166
    %v1168 = vrot.slane %v1167, 2
    %v1169 = vadd.f32 %v1167, %v1168
    %v1170 = vrot.slane %v1169, 1
    %v1171 = vadd.f32 %v1169, %v1170
    %v1172 = vadd.f32 %v1154, %v1156
    %v1173 = vrot.slane %v1172, 4
    %v1174 = vadd.f32 %v1172, %v1173
    %v1175 = vrot.slane %v1174, 2
    %v1176 = vadd.f32 %v1174, %v1175
    %v1177 = vrot.slane %v1176, 1
    %v1178 = vadd.f32 %v1176, %v1177
    %v1179 = vadd.f32 %v1155, %v1157
    %v1180 = vrot.slane %v1179, 4
    %v1181 = vadd.f32 %v1179, %v1180
    %v1182 = vrot.slane %v1181, 2
    %v1183 = vadd.f32 %v1181, %v1182
    %v1184 = vrot.slane %v1183, 1
    %v1185 = vadd.f32 %v1183, %v1184
    %v1186 = vmul.f32 %v1164, 0.0625
    %v1187 = vmul.f32 %v1171, 0.0625
    %v1188 = vmul.f32 %v1178, 0.0625
    %v1189 = vmul.f32 %v1185, 0.0625
    %v1190 = vpack.c.bf16 %v1152, %v1150
    %v1191 = vpack.c.bf16 %v1153, %v1151
    %v1192 = vpack.c.bf16 %v1156, %v1154
    %v1193 = vpack.c.bf16 %v1157, %v1155
    %v1194 = vld [vmem:[%s7] sm:$0xff]
    %v1195 = vld [vmem:[%s7 + $0x8] sm:$0xff]
    %v1196 = vld [vmem:[%s7 + $0x10] sm:$0xff]
    %v1197 = vld [vmem:[%s7 + $0x18] sm:$0xff]
    %v1198 = vld [vmem:[%s7 + $0x20] sm:$0xff]
    %v1199 = vld [vmem:[%s7 + $0x28] sm:$0xff]
    %v1200 = vld [vmem:[%s7 + $0x30] sm:$0xff]
    %v1201 = vld [vmem:[%s7 + $0x38] sm:$0xff]
    %v1202 = vld [vmem:[%s7 + $0x40] sm:$0xff]
    %v1203 = vld [vmem:[%s7 + $0x48] sm:$0xff]
    %v1204 = vld [vmem:[%s7 + $0x50] sm:$0xff]
    %v1205 = vld [vmem:[%s7 + $0x58] sm:$0xff]
    %v1206 = vld [vmem:[%s7 + $0x60] sm:$0xff]
    %v1207 = vld [vmem:[%s7 + $0x68] sm:$0xff]
    %v1208 = vld [vmem:[%s7 + $0x70] sm:$0xff]
    %v1209 = vld [vmem:[%s7 + $0x78] sm:$0xff]
    %v1210 = vld [vmem:[%s7 + $0x80] sm:$0xff]
    %v1211 = vld [vmem:[%s7 + $0x88] sm:$0xff]
    %v1212 = vld [vmem:[%s7 + $0x90] sm:$0xff]
    %v1213 = vld [vmem:[%s7 + $0x98] sm:$0xff]
    %v1214 = vld [vmem:[%s7 + $0xa0] sm:$0xff]
    %v1215 = vld [vmem:[%s7 + $0xa8] sm:$0xff]
    %v1216 = vld [vmem:[%s7 + $0xb0] sm:$0xff]
    %v1217 = vld [vmem:[%s7 + $0xb8] sm:$0xff]
    %v1218 = vld [vmem:[%s7 + $0xc0] sm:$0xff]
    %v1219 = vld [vmem:[%s7 + $0xc8] sm:$0xff]
    %v1220 = vld [vmem:[%s7 + $0xd0] sm:$0xff]
    %v1221 = vld [vmem:[%s7 + $0xd8] sm:$0xff]
    %v1222 = vld [vmem:[%s7 + $0xe0] sm:$0xff]
    %v1223 = vld [vmem:[%s7 + $0xe8] sm:$0xff]
    %v1224 = vld [vmem:[%s7 + $0xf0] sm:$0xff]
    %v1225 = vld [vmem:[%s7 + $0xf8] sm:$0xff]
    %v1226 = vld [vmem:[%s7 + $0x100] sm:$0xff]
    %v1227 = vld [vmem:[%s7 + $0x108] sm:$0xff]
    %v1228 = vld [vmem:[%s7 + $0x110] sm:$0xff]
    %v1229 = vld [vmem:[%s7 + $0x118] sm:$0xff]
    %v1230 = vld [vmem:[%s7 + $0x120] sm:$0xff]
    %v1231 = vld [vmem:[%s7 + $0x128] sm:$0xff]
    %v1232 = vld [vmem:[%s7 + $0x130] sm:$0xff]
    %v1233 = vld [vmem:[%s7 + $0x138] sm:$0xff]
    %v1234 = vld [vmem:[%s7 + $0x140] sm:$0xff]
    %v1235 = vld [vmem:[%s7 + $0x148] sm:$0xff]
    %v1236 = vld [vmem:[%s7 + $0x150] sm:$0xff]
    %v1237 = vld [vmem:[%s7 + $0x158] sm:$0xff]
    %v1238 = vld [vmem:[%s7 + $0x160] sm:$0xff]
    %v1239 = vld [vmem:[%s7 + $0x168] sm:$0xff]
    %v1240 = vld [vmem:[%s7 + $0x170] sm:$0xff]
    %v1241 = vld [vmem:[%s7 + $0x178] sm:$0xff]
    %v1242 = vld [vmem:[%s7 + $0x180] sm:$0xff]
    %v1243 = vld [vmem:[%s7 + $0x188] sm:$0xff]
    %v1244 = vld [vmem:[%s7 + $0x190] sm:$0xff]
    %v1245 = vld [vmem:[%s7 + $0x198] sm:$0xff]
    %v1246 = vld [vmem:[%s7 + $0x1a0] sm:$0xff]
    %v1247 = vld [vmem:[%s7 + $0x1a8] sm:$0xff]
    %v1248 = vld [vmem:[%s7 + $0x1b0] sm:$0xff]
    %v1249 = vld [vmem:[%s7 + $0x1b8] sm:$0xff]
    %v1250 = vld [vmem:[%s7 + $0x1c0] sm:$0xff]
    %v1251 = vld [vmem:[%s7 + $0x1c8] sm:$0xff]
    %v1252 = vld [vmem:[%s7 + $0x1d0] sm:$0xff]
    %v1253 = vld [vmem:[%s7 + $0x1d8] sm:$0xff]
    %v1254 = vld [vmem:[%s7 + $0x1e0] sm:$0xff]
    %v1255 = vld [vmem:[%s7 + $0x1e8] sm:$0xff]
    %v1256 = vld [vmem:[%s7 + $0x1f0] sm:$0xff]
    %v1257 = vld [vmem:[%s7 + $0x1f8] sm:$0xff]
    %v1258 = vld [vmem:[%s7 + $0x200] sm:$0xff]
    %v1259 = vld [vmem:[%s7 + $0x208] sm:$0xff]
    %v1260 = vld [vmem:[%s7 + $0x210] sm:$0xff]
    %v1261 = vld [vmem:[%s7 + $0x218] sm:$0xff]
    %v1262 = vld [vmem:[%s7 + $0x220] sm:$0xff]
    %v1263 = vld [vmem:[%s7 + $0x228] sm:$0xff]
    %v1264 = vld [vmem:[%s7 + $0x230] sm:$0xff]
    %v1265 = vld [vmem:[%s7 + $0x238] sm:$0xff]
    %v1266 = vld [vmem:[%s7 + $0x240] sm:$0xff]
    %v1267 = vld [vmem:[%s7 + $0x248] sm:$0xff]
    %v1268 = vld [vmem:[%s7 + $0x250] sm:$0xff]
    %v1269 = vld [vmem:[%s7 + $0x258] sm:$0xff]
    %v1270 = vld [vmem:[%s7 + $0x260] sm:$0xff]
    %v1271 = vld [vmem:[%s7 + $0x268] sm:$0xff]
    %v1272 = vld [vmem:[%s7 + $0x270] sm:$0xff]
    %v1273 = vld [vmem:[%s7 + $0x278] sm:$0xff]
    %v1274 = vld [vmem:[%s7 + $0x280] sm:$0xff]
    %v1275 = vld [vmem:[%s7 + $0x288] sm:$0xff]
    %v1276 = vld [vmem:[%s7 + $0x290] sm:$0xff]
    %v1277 = vld [vmem:[%s7 + $0x298] sm:$0xff]
    %v1278 = vld [vmem:[%s7 + $0x2a0] sm:$0xff]
    %v1279 = vld [vmem:[%s7 + $0x2a8] sm:$0xff]
    %v1280 = vld [vmem:[%s7 + $0x2b0] sm:$0xff]
    %v1281 = vld [vmem:[%s7 + $0x2b8] sm:$0xff]
    %v1282 = vld [vmem:[%s7 + $0x2c0] sm:$0xff]
    %v1283 = vld [vmem:[%s7 + $0x2c8] sm:$0xff]
    %v1284 = vld [vmem:[%s7 + $0x2d0] sm:$0xff]
    %v1285 = vld [vmem:[%s7 + $0x2d8] sm:$0xff]
    %v1286 = vld [vmem:[%s7 + $0x2e0] sm:$0xff]
    %v1287 = vld [vmem:[%s7 + $0x2e8] sm:$0xff]
    %v1288 = vld [vmem:[%s7 + $0x2f0] sm:$0xff]
    %v1289 = vld [vmem:[%s7 + $0x2f8] sm:$0xff]
    %v1290 = vld [vmem:[%s8] sm:$0x3f]
    %v1292 = vlaneseq
    %v1293 = vshrl.u32 %v1292, 7
    %v1294 = vsub.s32 0, %v1293
    %v1295 = vrot.slane %v1290, %v1294
    %v1296 = vlaneseq
    %v1297 = vshrl.u32 %v1296, 7
    %v1298 = vsub.s32 1, %v1297
    %v1299 = vrot.slane %v1290, %v1298
    %v1300 = vlaneseq
    %v1301 = vshrl.u32 %v1300, 7
    %v1302 = vsub.s32 2, %v1301
    %v1303 = vrot.slane %v1290, %v1302
    %v1304 = vlaneseq
    %v1305 = vshrl.u32 %v1304, 7
    %v1306 = vsub.s32 3, %v1305
    %v1307 = vrot.slane %v1290, %v1306
    %v1308 = vlaneseq
    %v1309 = vshrl.u32 %v1308, 7
    %v1310 = vsub.s32 4, %v1309
    %v1311 = vrot.slane %v1290, %v1310
    %v1312 = vlaneseq
    %v1313 = vshrl.u32 %v1312, 7
    %v1314 = vsub.s32 5, %v1313
    %v1315 = vrot.slane %v1290, %v1314
    %v1418 = vunpack.c.l.b16 %v1194
    %v1419 = vunpack.c.h.b16 %v1194
    %v1420 = vunpack.c.l.b16 %v1195
    %v1421 = vunpack.c.h.b16 %v1195
    %v1422 = vunpack.c.l.b16 %v1196
    %v1423 = vunpack.c.h.b16 %v1196
    %v1424 = vunpack.c.l.b16 %v1197
    %v1425 = vunpack.c.h.b16 %v1197
    %v1426 = vunpack.c.l.b16 %v1198
    %v1427 = vunpack.c.h.b16 %v1198
    %v1428 = vunpack.c.l.b16 %v1199
    %v1429 = vunpack.c.h.b16 %v1199
    %v1430 = vunpack.c.l.b16 %v1200
    %v1431 = vunpack.c.h.b16 %v1200
    %v1432 = vunpack.c.l.b16 %v1201
    %v1433 = vunpack.c.h.b16 %v1201
    %v1434 = vunpack.c.l.b16 %v1202
    %v1435 = vunpack.c.h.b16 %v1202
    %v1436 = vunpack.c.l.b16 %v1203
    %v1437 = vunpack.c.h.b16 %v1203
    %v1438 = vunpack.c.l.b16 %v1204
    %v1439 = vunpack.c.h.b16 %v1204
    %v1440 = vunpack.c.l.b16 %v1205
    %v1441 = vunpack.c.h.b16 %v1205
    %v1442 = vunpack.c.l.b16 %v1206
    %v1443 = vunpack.c.h.b16 %v1206
    %v1444 = vunpack.c.l.b16 %v1207
    %v1445 = vunpack.c.h.b16 %v1207
    %v1446 = vunpack.c.l.b16 %v1208
    %v1447 = vunpack.c.h.b16 %v1208
    %v1448 = vunpack.c.l.b16 %v1209
    %v1449 = vunpack.c.h.b16 %v1209
    %v1450 = vunpack.c.l.b16 %v1210
    %v1451 = vunpack.c.h.b16 %v1210
    %v1452 = vunpack.c.l.b16 %v1211
    %v1453 = vunpack.c.h.b16 %v1211
    %v1454 = vunpack.c.l.b16 %v1212
    %v1455 = vunpack.c.h.b16 %v1212
    %v1456 = vunpack.c.l.b16 %v1213
    %v1457 = vunpack.c.h.b16 %v1213
    %v1458 = vunpack.c.l.b16 %v1214
    %v1459 = vunpack.c.h.b16 %v1214
    %v1460 = vunpack.c.l.b16 %v1215
    %v1461 = vunpack.c.h.b16 %v1215
    %v1462 = vunpack.c.l.b16 %v1216
    %v1463 = vunpack.c.h.b16 %v1216
    %v1464 = vunpack.c.l.b16 %v1217
    %v1465 = vunpack.c.h.b16 %v1217
    %v1466 = vunpack.c.l.b16 %v1218
    %v1467 = vunpack.c.h.b16 %v1218
    %v1468 = vunpack.c.l.b16 %v1219
    %v1469 = vunpack.c.h.b16 %v1219
    %v1470 = vunpack.c.l.b16 %v1220
    %v1471 = vunpack.c.h.b16 %v1220
    %v1472 = vunpack.c.l.b16 %v1221
    %v1473 = vunpack.c.h.b16 %v1221
    %v1474 = vunpack.c.l.b16 %v1222
    %v1475 = vunpack.c.h.b16 %v1222
    %v1476 = vunpack.c.l.b16 %v1223
    %v1477 = vunpack.c.h.b16 %v1223
    %v1478 = vunpack.c.l.b16 %v1224
    %v1479 = vunpack.c.h.b16 %v1224
    %v1480 = vunpack.c.l.b16 %v1225
    %v1481 = vunpack.c.h.b16 %v1225
    %v1482 = vunpack.c.l.b16 %v1226
    %v1483 = vunpack.c.h.b16 %v1226
    %v1484 = vunpack.c.l.b16 %v1227
    %v1485 = vunpack.c.h.b16 %v1227
    %v1486 = vunpack.c.l.b16 %v1228
    %v1487 = vunpack.c.h.b16 %v1228
    %v1488 = vunpack.c.l.b16 %v1229
    %v1489 = vunpack.c.h.b16 %v1229
    %v1490 = vunpack.c.l.b16 %v1230
    %v1491 = vunpack.c.h.b16 %v1230
    %v1492 = vunpack.c.l.b16 %v1231
    %v1493 = vunpack.c.h.b16 %v1231
    %v1494 = vunpack.c.l.b16 %v1232
    %v1495 = vunpack.c.h.b16 %v1232
    %v1496 = vunpack.c.l.b16 %v1233
    %v1497 = vunpack.c.h.b16 %v1233
    %v1498 = vunpack.c.l.b16 %v1234
    %v1499 = vunpack.c.h.b16 %v1234
    %v1500 = vunpack.c.l.b16 %v1235
    %v1501 = vunpack.c.h.b16 %v1235
    %v1502 = vunpack.c.l.b16 %v1236
    %v1503 = vunpack.c.h.b16 %v1236
    %v1504 = vunpack.c.l.b16 %v1237
    %v1505 = vunpack.c.h.b16 %v1237
    %v1506 = vunpack.c.l.b16 %v1238
    %v1507 = vunpack.c.h.b16 %v1238
    %v1508 = vunpack.c.l.b16 %v1239
    %v1509 = vunpack.c.h.b16 %v1239
    %v1510 = vunpack.c.l.b16 %v1240
    %v1511 = vunpack.c.h.b16 %v1240
    %v1512 = vunpack.c.l.b16 %v1241
    %v1513 = vunpack.c.h.b16 %v1241
    %v1514 = vunpack.c.l.b16 %v1242
    %v1515 = vunpack.c.h.b16 %v1242
    %v1516 = vunpack.c.l.b16 %v1243
    %v1517 = vunpack.c.h.b16 %v1243
    %v1518 = vunpack.c.l.b16 %v1244
    %v1519 = vunpack.c.h.b16 %v1244
    %v1520 = vunpack.c.l.b16 %v1245
    %v1521 = vunpack.c.h.b16 %v1245
    %v1522 = vunpack.c.l.b16 %v1246
    %v1523 = vunpack.c.h.b16 %v1246
    %v1524 = vunpack.c.l.b16 %v1247
    %v1525 = vunpack.c.h.b16 %v1247
    %v1526 = vunpack.c.l.b16 %v1248
    %v1527 = vunpack.c.h.b16 %v1248
    %v1528 = vunpack.c.l.b16 %v1249
    %v1529 = vunpack.c.h.b16 %v1249
    %v1530 = vunpack.c.l.b16 %v1250
    %v1531 = vunpack.c.h.b16 %v1250
    %v1532 = vunpack.c.l.b16 %v1251
    %v1533 = vunpack.c.h.b16 %v1251
    %v1534 = vunpack.c.l.b16 %v1252
    %v1535 = vunpack.c.h.b16 %v1252
    %v1536 = vunpack.c.l.b16 %v1253
    %v1537 = vunpack.c.h.b16 %v1253
    %v1538 = vunpack.c.l.b16 %v1254
    %v1539 = vunpack.c.h.b16 %v1254
    %v1540 = vunpack.c.l.b16 %v1255
    %v1541 = vunpack.c.h.b16 %v1255
    %v1542 = vunpack.c.l.b16 %v1256
    %v1543 = vunpack.c.h.b16 %v1256
    %v1544 = vunpack.c.l.b16 %v1257
    %v1545 = vunpack.c.h.b16 %v1257
    %v1546 = vunpack.c.l.b16 %v1258
    %v1547 = vunpack.c.h.b16 %v1258
    %v1548 = vunpack.c.l.b16 %v1259
    %v1549 = vunpack.c.h.b16 %v1259
    %v1550 = vunpack.c.l.b16 %v1260
    %v1551 = vunpack.c.h.b16 %v1260
    %v1552 = vunpack.c.l.b16 %v1261
    %v1553 = vunpack.c.h.b16 %v1261
    %v1554 = vunpack.c.l.b16 %v1262
    %v1555 = vunpack.c.h.b16 %v1262
    %v1556 = vunpack.c.l.b16 %v1263
    %v1557 = vunpack.c.h.b16 %v1263
    %v1558 = vunpack.c.l.b16 %v1264
    %v1559 = vunpack.c.h.b16 %v1264
    %v1560 = vunpack.c.l.b16 %v1265
    %v1561 = vunpack.c.h.b16 %v1265
    %v1562 = vunpack.c.l.b16 %v1266
    %v1563 = vunpack.c.h.b16 %v1266
    %v1564 = vunpack.c.l.b16 %v1267
    %v1565 = vunpack.c.h.b16 %v1267
    %v1566 = vunpack.c.l.b16 %v1268
    %v1567 = vunpack.c.h.b16 %v1268
    %v1568 = vunpack.c.l.b16 %v1269
    %v1569 = vunpack.c.h.b16 %v1269
    %v1570 = vunpack.c.l.b16 %v1270
    %v1571 = vunpack.c.h.b16 %v1270
    %v1572 = vunpack.c.l.b16 %v1271
    %v1573 = vunpack.c.h.b16 %v1271
    %v1574 = vunpack.c.l.b16 %v1272
    %v1575 = vunpack.c.h.b16 %v1272
    %v1576 = vunpack.c.l.b16 %v1273
    %v1577 = vunpack.c.h.b16 %v1273
    %v1578 = vunpack.c.l.b16 %v1274
    %v1579 = vunpack.c.h.b16 %v1274
    %v1580 = vunpack.c.l.b16 %v1275
    %v1581 = vunpack.c.h.b16 %v1275
    %v1582 = vunpack.c.l.b16 %v1276
    %v1583 = vunpack.c.h.b16 %v1276
    %v1584 = vunpack.c.l.b16 %v1277
    %v1585 = vunpack.c.h.b16 %v1277
    %v1586 = vunpack.c.l.b16 %v1278
    %v1587 = vunpack.c.h.b16 %v1278
    %v1588 = vunpack.c.l.b16 %v1279
    %v1589 = vunpack.c.h.b16 %v1279
    %v1590 = vunpack.c.l.b16 %v1280
    %v1591 = vunpack.c.h.b16 %v1280
    %v1592 = vunpack.c.l.b16 %v1281
    %v1593 = vunpack.c.h.b16 %v1281
    %v1594 = vunpack.c.l.b16 %v1282
    %v1595 = vunpack.c.h.b16 %v1282
    %v1596 = vunpack.c.l.b16 %v1283
    %v1597 = vunpack.c.h.b16 %v1283
    %v1598 = vunpack.c.l.b16 %v1284
    %v1599 = vunpack.c.h.b16 %v1284
    %v1600 = vunpack.c.l.b16 %v1285
    %v1601 = vunpack.c.h.b16 %v1285
    %v1602 = vunpack.c.l.b16 %v1286
    %v1603 = vunpack.c.h.b16 %v1286
    %v1604 = vunpack.c.l.b16 %v1287
    %v1605 = vunpack.c.h.b16 %v1287
    %v1606 = vunpack.c.l.b16 %v1288
    %v1607 = vunpack.c.h.b16 %v1288
    %v1608 = vunpack.c.l.b16 %v1289
    %v1609 = vunpack.c.h.b16 %v1289
    %v1610 = vpack.c.b16 %v1424, %v1418
    %v1611 = vpack.c.b16 %v1425, %v1419
    %v1612 = vpack.c.b16 %v1426, %v1420
    %v1613 = vpack.c.b16 %v1427, %v1421
    %v1614 = vpack.c.b16 %v1428, %v1422
    %v1615 = vpack.c.b16 %v1429, %v1423
    %v1616 = vpack.c.b16 %v1436, %v1430
    %v1617 = vpack.c.b16 %v1437, %v1431
    %v1618 = vpack.c.b16 %v1438, %v1432
    %v1619 = vpack.c.b16 %v1439, %v1433
    %v1620 = vpack.c.b16 %v1440, %v1434
    %v1621 = vpack.c.b16 %v1441, %v1435
    %v1622 = vpack.c.b16 %v1448, %v1442
    %v1623 = vpack.c.b16 %v1449, %v1443
    %v1624 = vpack.c.b16 %v1450, %v1444
    %v1625 = vpack.c.b16 %v1451, %v1445
    %v1626 = vpack.c.b16 %v1452, %v1446
    %v1627 = vpack.c.b16 %v1453, %v1447
    %v1628 = vpack.c.b16 %v1460, %v1454
    %v1629 = vpack.c.b16 %v1461, %v1455
    %v1630 = vpack.c.b16 %v1462, %v1456
    %v1631 = vpack.c.b16 %v1463, %v1457
    %v1632 = vpack.c.b16 %v1464, %v1458
    %v1633 = vpack.c.b16 %v1465, %v1459
    %v1634 = vpack.c.b16 %v1472, %v1466
    %v1635 = vpack.c.b16 %v1473, %v1467
    %v1636 = vpack.c.b16 %v1474, %v1468
    %v1637 = vpack.c.b16 %v1475, %v1469
    %v1638 = vpack.c.b16 %v1476, %v1470
    %v1639 = vpack.c.b16 %v1477, %v1471
    %v1640 = vpack.c.b16 %v1484, %v1478
    %v1641 = vpack.c.b16 %v1485, %v1479
    %v1642 = vpack.c.b16 %v1486, %v1480
    %v1643 = vpack.c.b16 %v1487, %v1481
    %v1644 = vpack.c.b16 %v1488, %v1482
    %v1645 = vpack.c.b16 %v1489, %v1483
    %v1646 = vpack.c.b16 %v1496, %v1490
    %v1647 = vpack.c.b16 %v1497, %v1491
    %v1648 = vpack.c.b16 %v1498, %v1492
    %v1649 = vpack.c.b16 %v1499, %v1493
    %v1650 = vpack.c.b16 %v1500, %v1494
    %v1651 = vpack.c.b16 %v1501, %v1495
    %v1652 = vpack.c.b16 %v1508, %v1502
    %v1653 = vpack.c.b16 %v1509, %v1503
    %v1654 = vpack.c.b16 %v1510, %v1504
    %v1655 = vpack.c.b16 %v1511, %v1505
    %v1656 = vpack.c.b16 %v1512, %v1506
    %v1657 = vpack.c.b16 %v1513, %v1507
    %v1658 = vpack.c.b16 %v1520, %v1514
    %v1659 = vpack.c.b16 %v1521, %v1515
    %v1660 = vpack.c.b16 %v1522, %v1516
    %v1661 = vpack.c.b16 %v1523, %v1517
    %v1662 = vpack.c.b16 %v1524, %v1518
    %v1663 = vpack.c.b16 %v1525, %v1519
    %v1664 = vpack.c.b16 %v1532, %v1526
    %v1665 = vpack.c.b16 %v1533, %v1527
    %v1666 = vpack.c.b16 %v1534, %v1528
    %v1667 = vpack.c.b16 %v1535, %v1529
    %v1668 = vpack.c.b16 %v1536, %v1530
    %v1669 = vpack.c.b16 %v1537, %v1531
    %v1670 = vpack.c.b16 %v1544, %v1538
    %v1671 = vpack.c.b16 %v1545, %v1539
    %v1672 = vpack.c.b16 %v1546, %v1540
    %v1673 = vpack.c.b16 %v1547, %v1541
    %v1674 = vpack.c.b16 %v1548, %v1542
    %v1675 = vpack.c.b16 %v1549, %v1543
    %v1676 = vpack.c.b16 %v1556, %v1550
    %v1677 = vpack.c.b16 %v1557, %v1551
    %v1678 = vpack.c.b16 %v1558, %v1552
    %v1679 = vpack.c.b16 %v1559, %v1553
    %v1680 = vpack.c.b16 %v1560, %v1554
    %v1681 = vpack.c.b16 %v1561, %v1555
    %v1682 = vpack.c.b16 %v1568, %v1562
    %v1683 = vpack.c.b16 %v1569, %v1563
    %v1684 = vpack.c.b16 %v1570, %v1564
    %v1685 = vpack.c.b16 %v1571, %v1565
    %v1686 = vpack.c.b16 %v1572, %v1566
    %v1687 = vpack.c.b16 %v1573, %v1567
    %v1688 = vpack.c.b16 %v1580, %v1574
    %v1689 = vpack.c.b16 %v1581, %v1575
    %v1690 = vpack.c.b16 %v1582, %v1576
    %v1691 = vpack.c.b16 %v1583, %v1577
    %v1692 = vpack.c.b16 %v1584, %v1578
    %v1693 = vpack.c.b16 %v1585, %v1579
    %v1694 = vpack.c.b16 %v1592, %v1586
    %v1695 = vpack.c.b16 %v1593, %v1587
    %v1696 = vpack.c.b16 %v1594, %v1588
    %v1697 = vpack.c.b16 %v1595, %v1589
    %v1698 = vpack.c.b16 %v1596, %v1590
    %v1699 = vpack.c.b16 %v1597, %v1591
    %v1700 = vpack.c.b16 %v1604, %v1598
    %v1701 = vpack.c.b16 %v1605, %v1599
    %v1702 = vpack.c.b16 %v1606, %v1600
    %v1703 = vpack.c.b16 %v1607, %v1601
    %v1704 = vpack.c.b16 %v1608, %v1602
    %v1705 = vpack.c.b16 %v1609, %v1603
    %1802 = vmatprep.subr.bf16.mxu0 %v1611
    %1803 = vmatpush1.bf16.msra.mxu0 %v1610
    %1804 = vmatprep.subr.bf16.mxu0 %v1617
    %1805 = vmatpush1.bf16.msra.mxu0 %v1616
    %1806 = vmatprep.subr.bf16.mxu0 %v1623
    %1807 = vmatpush1.bf16.msra.mxu0 %v1622
    %1808 = vmatprep.subr.bf16.mxu0 %v1629
    %1809 = vmatpush1.bf16.msra.mxu0 %v1628
    %1810 = vmatprep.subr.bf16.mxu0 %v1635
    %1811 = vmatpush1.bf16.msra.mxu0 %v1634
    %1812 = vmatprep.subr.bf16.mxu0 %v1641
    %1813 = vmatpush1.bf16.msra.mxu0 %v1640
    %1814 = vmatprep.subr.bf16.mxu0 %v1647
    %1815 = vmatpush1.bf16.msra.mxu0 %v1646
    %1816 = vmatprep.subr.bf16.mxu0 %v1653
    %1817 = vmatpush1.bf16.msra.mxu0 %v1652
    %1818 = vmatprep.subr.bf16.mxu0 %v1659
    %1819 = vmatpush1.bf16.msra.mxu0 %v1658
    %1820 = vmatprep.subr.bf16.mxu0 %v1665
    %1821 = vmatpush1.bf16.msra.mxu0 %v1664
    %1822 = vmatprep.subr.bf16.mxu0 %v1671
    %1823 = vmatpush1.bf16.msra.mxu0 %v1670
    %1824 = vmatprep.subr.bf16.mxu0 %v1677
    %1825 = vmatpush1.bf16.msra.mxu0 %v1676
    %1826 = vmatprep.subr.bf16.mxu0 %v1683
    %1827 = vmatpush1.bf16.msra.mxu0 %v1682
    %1828 = vmatprep.subr.bf16.mxu0 %v1689
    %1829 = vmatpush1.bf16.msra.mxu0 %v1688
    %1830 = vmatprep.subr.bf16.mxu0 %v1695
    %1831 = vmatpush1.bf16.msra.mxu0 %v1694
    %1832 = vmatprep.subr.bf16.mxu0 %v1701
    %1833 = vmatpush1.bf16.msra.mxu0 %v1700
    %1834 = vmatprep.mubr.bf16.mxu0 %v1191
    %1835 = vmatmul.mubr.bf16.gmra.mrb[0].mxu0 %v1190
    %v1836 = vpop.f32.mrb[0].mxu0
    %v1837 = vadd.f32 %v1295, %v1836
    %v1838 = vpop.f32.mrb[0].mxu0
    %v1839 = vadd.f32 %v1299, %v1838
    %v1840 = vpop.f32.mrb[0].mxu0
    %v1841 = vadd.f32 %v1295, %v1840
    %v1842 = vpop.f32.mrb[0].mxu0
    %v1843 = vadd.f32 %v1299, %v1842
    %1844 = vmatprep.mubr.bf16.mxu0 %v1193
    %1845 = vmatmul.mubr.bf16.gmra.mrb[0].mxu0 %v1192
    %v1846 = vpop.f32.mrb[0].mxu0
    %v1847 = vadd.f32 %v1295, %v1846
    %v1848 = vpop.f32.mrb[0].mxu0
    %v1849 = vadd.f32 %v1299, %v1848
    %v1850 = vpop.f32.mrb[0].mxu0
    %v1851 = vadd.f32 %v1295, %v1850
    %v1852 = vpop.f32.mrb[0].mxu0
    %v1853 = vadd.f32 %v1299, %v1852
    %1854 = vdwg.mxu0
    %1855 = vmatprep.subr.bf16.mxu0 %v1613
    %1856 = vmatpush1.bf16.msra.mxu0 %v1612
    %1857 = vmatprep.subr.bf16.mxu0 %v1619
    %1858 = vmatpush1.bf16.msra.mxu0 %v1618
    %1859 = vmatprep.subr.bf16.mxu0 %v1625
    %1860 = vmatpush1.bf16.msra.mxu0 %v1624
    %1861 = vmatprep.subr.bf16.mxu0 %v1631
    %1862 = vmatpush1.bf16.msra.mxu0 %v1630
    %1863 = vmatprep.subr.bf16.mxu0 %v1637
    %1864 = vmatpush1.bf16.msra.mxu0 %v1636
    %1865 = vmatprep.subr.bf16.mxu0 %v1643
    %1866 = vmatpush1.bf16.msra.mxu0 %v1642
    %1867 = vmatprep.subr.bf16.mxu0 %v1649
    %1868 = vmatpush1.bf16.msra.mxu0 %v1648
    %1869 = vmatprep.subr.bf16.mxu0 %v1655
    %1870 = vmatpush1.bf16.msra.mxu0 %v1654
    %1871 = vmatprep.subr.bf16.mxu0 %v1661
    %1872 = vmatpush1.bf16.msra.mxu0 %v1660
    %1873 = vmatprep.subr.bf16.mxu0 %v1667
    %1874 = vmatpush1.bf16.msra.mxu0 %v1666
    %1875 = vmatprep.subr.bf16.mxu0 %v1673
    %1876 = vmatpush1.bf16.msra.mxu0 %v1672
    %1877 = vmatprep.subr.bf16.mxu0 %v1679
    %1878 = vmatpush1.bf16.msra.mxu0 %v1678
    %1879 = vmatprep.subr.bf16.mxu0 %v1685
    %1880 = vmatpush1.bf16.msra.mxu0 %v1684
    %1881 = vmatprep.subr.bf16.mxu0 %v1691
    %1882 = vmatpush1.bf16.msra.mxu0 %v1690
    %1883 = vmatprep.subr.bf16.mxu0 %v1697
    %1884 = vmatpush1.bf16.msra.mxu0 %v1696
    %1885 = vmatprep.subr.bf16.mxu0 %v1703
    %1886 = vmatpush1.bf16.msra.mxu0 %v1702
    %1887 = vmatprep.mubr.bf16.mxu0 %v1191
    %1888 = vmatmul.mubr.bf16.gmra.mrb[0].mxu0 %v1190
    %v1889 = vpop.f32.mrb[0].mxu0
    %v1890 = vadd.f32 %v1303, %v1889
    %v1891 = vpop.f32.mrb[0].mxu0
    %v1892 = vadd.f32 %v1307, %v1891
    %v1893 = vpop.f32.mrb[0].mxu0
    %v1894 = vadd.f32 %v1303, %v1893
    %v1895 = vpop.f32.mrb[0].mxu0
    %v1896 = vadd.f32 %v1307, %v1895
    %1897 = vmatprep.mubr.bf16.mxu0 %v1193
    %1898 = vmatmul.mubr.bf16.gmra.mrb[0].mxu0 %v1192
    %v1899 = vpop.f32.mrb[0].mxu0
    %v1900 = vadd.f32 %v1303, %v1899
    %v1901 = vpop.f32.mrb[0].mxu0
    %v1902 = vadd.f32 %v1307, %v1901
    %v1903 = vpop.f32.mrb[0].mxu0
    %v1904 = vadd.f32 %v1303, %v1903
    %v1905 = vpop.f32.mrb[0].mxu0
    %v1906 = vadd.f32 %v1307, %v1905
    %1907 = vdwg.mxu0
    %1908 = vmatprep.subr.bf16.mxu0 %v1615
    %1909 = vmatpush1.bf16.msra.mxu0 %v1614
    %1910 = vmatprep.subr.bf16.mxu0 %v1621
    %1911 = vmatpush1.bf16.msra.mxu0 %v1620
    %1912 = vmatprep.subr.bf16.mxu0 %v1627
    %1913 = vmatpush1.bf16.msra.mxu0 %v1626
    %1914 = vmatprep.subr.bf16.mxu0 %v1633
    %1915 = vmatpush1.bf16.msra.mxu0 %v1632
    %1916 = vmatprep.subr.bf16.mxu0 %v1639
    %1917 = vmatpush1.bf16.msra.mxu0 %v1638
    %1918 = vmatprep.subr.bf16.mxu0 %v1645
    %1919 = vmatpush1.bf16.msra.mxu0 %v1644
    %1920 = vmatprep.subr.bf16.mxu0 %v1651
    %1921 = vmatpush1.bf16.msra.mxu0 %v1650
    %1922 = vmatprep.subr.bf16.mxu0 %v1657
    %1923 = vmatpush1.bf16.msra.mxu0 %v1656
    %1924 = vmatprep.subr.bf16.mxu0 %v1663
    %1925 = vmatpush1.bf16.msra.mxu0 %v1662
    %1926 = vmatprep.subr.bf16.mxu0 %v1669
    %1927 = vmatpush1.bf16.msra.mxu0 %v1668
    %1928 = vmatprep.subr.bf16.mxu0 %v1675
    %1929 = vmatpush1.bf16.msra.mxu0 %v1674
    %1930 = vmatprep.subr.bf16.mxu0 %v1681
    %1931 = vmatpush1.bf16.msra.mxu0 %v1680
    %1932 = vmatprep.subr.bf16.mxu0 %v1687
    %1933 = vmatpush1.bf16.msra.mxu0 %v1686
    %1934 = vmatprep.subr.bf16.mxu0 %v1693
    %1935 = vmatpush1.bf16.msra.mxu0 %v1692
    %1936 = vmatprep.subr.bf16.mxu0 %v1699
    %1937 = vmatpush1.bf16.msra.mxu0 %v1698
    %1938 = vmatprep.subr.bf16.mxu0 %v1705
    %1939 = vmatpush1.bf16.msra.mxu0 %v1704
    %1940 = vmatprep.mubr.bf16.mxu0 %v1191
    %1941 = vmatmul.mubr.bf16.gmra.mrb[0].mxu0 %v1190
    %v1942 = vpop.f32.mrb[0].mxu0
    %v1943 = vadd.f32 %v1311, %v1942
    %v1944 = vpop.f32.mrb[0].mxu0
    %v1945 = vadd.f32 %v1315, %v1944
    %v1946 = vpop.f32.mrb[0].mxu0
    %v1947 = vadd.f32 %v1311, %v1946
    %v1948 = vpop.f32.mrb[0].mxu0
    %v1949 = vadd.f32 %v1315, %v1948
    %1950 = vmatprep.mubr.bf16.mxu0 %v1193
    %1951 = vmatmul.mubr.bf16.gmra.mrb[0].mxu0 %v1192
    %v1952 = vpop.f32.mrb[0].mxu0
    %v1953 = vadd.f32 %v1311, %v1952
    %v1954 = vpop.f32.mrb[0].mxu0
    %v1955 = vadd.f32 %v1315, %v1954
    %v1956 = vpop.f32.mrb[0].mxu0
    %v1957 = vadd.f32 %v1311, %v1956
    %v1958 = vpop.f32.mrb[0].mxu0
    %v1959 = vadd.f32 %v1315, %v1958
    %1960 = vdwg.mxu0
    %v1961 = vpack.c.bf16 %v1841, %v1837
    %v1962 = vpack.c.bf16 %v1843, %v1839
    %v1963 = vpack.c.bf16 %v1894, %v1890
    %v1964 = vpack.c.bf16 %v1896, %v1892
    %v1965 = vpack.c.bf16 %v1947, %v1943
    %v1966 = vpack.c.bf16 %v1949, %v1945
    %v1967 = vpack.c.bf16 %v1851, %v1847
    %v1968 = vpack.c.bf16 %v1853, %v1849
    %v1969 = vpack.c.bf16 %v1904, %v1900
    %v1970 = vpack.c.bf16 %v1906, %v1902
    %v1971 = vpack.c.bf16 %v1957, %v1953
    %v1972 = vpack.c.bf16 %v1959, %v1955
    %vm1973 = vcmask 261120
    %v1975 = vsel %vm1973, %v1961, 0
    %v1978 = vsel %vm1973, %v1963, 0
    %1980 = vmatprep.subr.bf16.mxu0 0
    %1981 = vmatpush1.bf16.xpose.msra.mxu0 %v1978
    %1982 = vmatprep.subr.bf16.mxu0 0
    %1983 = vmatpush1.bf16.xpose.msra.mxu0 0
    %1984 = vmatprep.subr.bf16.mxu0 0
    %1985 = vmatpush1.bf16.xpose.msra.mxu0 0
    %1986 = vmatprep.subr.bf16.mxu0 0
    %1987 = vmatpush1.bf16.xpose.msra.mxu0 0
    %1988 = vmatprep.subr.bf16.mxu0 0
    %1989 = vmatpush1.bf16.xpose.msra.mxu0 0
    %1990 = vmatprep.subr.bf16.mxu0 0
    %1991 = vmatpush1.bf16.xpose.msra.mxu0 0
    %1992 = vmatprep.subr.bf16.mxu0 0
    %1993 = vmatpush1.bf16.xpose.msra.mxu0 0
    %1994 = vmatprep.subr.bf16.mxu0 0
    %1995 = vmatpush1.bf16.xpose.msra.mxu0 0
    %1996 = vmatprep.subr.bf16.mxu0 0
    %1997 = vmatpush1.bf16.xpose.msra.mxu0 0
    %1998 = vmatprep.subr.bf16.mxu0 0
    %1999 = vmatpush1.bf16.xpose.msra.mxu0 0
    %2000 = vmatprep.subr.bf16.mxu0 0
    %2001 = vmatpush1.bf16.xpose.msra.mxu0 0
    %2002 = vmatprep.subr.bf16.mxu0 0
    %2003 = vmatpush1.bf16.xpose.msra.mxu0 0
    %2004 = vmatprep.subr.bf16.mxu0 0
    %2005 = vmatpush1.bf16.xpose.msra.mxu0 0
    %2006 = vmatprep.subr.bf16.mxu0 0
    %2007 = vmatpush1.bf16.xpose.msra.mxu0 0
    %2008 = vmatprep.subr.bf16.mxu0 0
    %2009 = vmatpush1.bf16.xpose.msra.mxu0 0
    %2010 = vmatprep.subr.bf16.mxu0 0
    %2011 = vmatpush1.bf16.xpose.msra.mxu0 0
    %2012 = vmatprep.mubr.bf16.mxu0 0
    %2013 = vmatmul.mubr.bf16.gmra.mrb[0].mxu0 %v1975
    %v2014 = vpop.f32.mrb[0].mxu0
    %v2015 = vadd.f32 0.0, %v2014
    %v2016 = vpop.f32.mrb[0].mxu0
    %v2017 = vpop.f32.mrb[0].mxu0
    %v2018 = vadd.f32 0.0, %v2017
    %v2019 = vpop.f32.mrb[0].mxu0
    %2020 = vdwg.mxu0
    %v2022 = vsel %vm1973, %v1967, 0
    %v2025 = vsel %vm1973, %v1969, 0
    %2027 = vmatprep.subr.bf16.mxu0 0
    %2028 = vmatpush1.bf16.xpose.msra.mxu0 %v2025
    %2029 = vmatprep.subr.bf16.mxu0 0
    %2030 = vmatpush1.bf16.xpose.msra.mxu0 0
    %2031 = vmatprep.subr.bf16.mxu0 0
    %2032 = vmatpush1.bf16.xpose.msra.mxu0 0
    %2033 = vmatprep.subr.bf16.mxu0 0
    %2034 = vmatpush1.bf16.xpose.msra.mxu0 0
    %2035 = vmatprep.subr.bf16.mxu0 0
    %2036 = vmatpush1.bf16.xpose.msra.mxu0 0
    %2037 = vmatprep.subr.bf16.mxu0 0
    %2038 = vmatpush1.bf16.xpose.msra.mxu0 0
    %2039 = vmatprep.subr.bf16.mxu0 0
    %2040 = vmatpush1.bf16.xpose.msra.mxu0 0
    %2041 = vmatprep.subr.bf16.mxu0 0
    %2042 = vmatpush1.bf16.xpose.msra.mxu0 0
    %2043 = vmatprep.subr.bf16.mxu0 0
    %2044 = vmatpush1.bf16.xpose.msra.mxu0 0
    %2045 = vmatprep.subr.bf16.mxu0 0
    %2046 = vmatpush1.bf16.xpose.msra.mxu0 0
    %2047 = vmatprep.subr.bf16.mxu0 0
    %2048 = vmatpush1.bf16.xpose.msra.mxu0 0
    %2049 = vmatprep.subr.bf16.mxu0 0
    %2050 = vmatpush1.bf16.xpose.msra.mxu0 0
    %2051 = vmatprep.subr.bf16.mxu0 0
    %2052 = vmatpush1.bf16.xpose.msra.mxu0 0
    %2053 = vmatprep.subr.bf16.mxu0 0
    %2054 = vmatpush1.bf16.xpose.msra.mxu0 0
    %2055 = vmatprep.subr.bf16.mxu0 0
    %2056 = vmatpush1.bf16.xpose.msra.mxu0 0
    %2057 = vmatprep.subr.bf16.mxu0 0
    %2058 = vmatpush1.bf16.xpose.msra.mxu0 0
    %2059 = vmatprep.mubr.bf16.mxu0 0
    %2060 = vmatmul.mubr.bf16.gmra.mrb[0].mxu0 %v2022
    %v2061 = vpop.f32.mrb[0].mxu0
    %v2062 = vadd.f32 0.0, %v2061
    %v2063 = vpop.f32.mrb[0].mxu0
    %v2064 = vpop.f32.mrb[0].mxu0
    %v2065 = vadd.f32 0.0, %v2064
    %v2066 = vpop.f32.mrb[0].mxu0
    %2067 = vdwg.mxu0
    %v2068 = vmul.f32 %v2015, 0.17677669
    %v2069 = vmul.f32 %v2018, 0.17677669
    %v2070 = vmul.f32 %v2062, 0.17677669
    %v2071 = vmul.f32 %v2065, 0.17677669
    %vm2072 = vcmask 130048
    %v2073 = vsel %vm2072, %v2068, -inf
    %2074 = vmax.xlane.f32.xlu0 %v2073
    %v2075 = vpop.xlane.xlu0 %2074
    %v2076 = vsel %vm2072, %v2069, -inf
    %2077 = vmax.xlane.f32.xlu0 %v2076
    %v2078 = vpop.xlane.xlu0 %2077
    %v2079 = vsel %vm2072, %v2070, -inf
    %2080 = vmax.xlane.f32.xlu0 %v2079
    %v2081 = vpop.xlane.xlu0 %2080
    %v2082 = vsel %vm2072, %v2071, -inf
    %2083 = vmax.xlane.f32.xlu0 %v2082
    %v2084 = vpop.xlane.xlu0 %2083
    %v2085 = vsub.f32 %v2068, %v2075
    %v2086 = vsub.f32 %v2069, %v2078
    %v2087 = vsub.f32 %v2070, %v2081
    %v2088 = vsub.f32 %v2071, %v2084
    %v2089 = vmul.f32 %v2085, 1.442695
    %v2090 = vpow.pop %v2089
    %v2091 = vmul.f32 %v2086, 1.442695
    %v2092 = vpow.pop %v2091
    %v2093 = vmul.f32 %v2087, 1.442695
    %v2094 = vpow.pop %v2093
    %v2095 = vmul.f32 %v2088, 1.442695
    %v2096 = vpow.pop %v2095
    %v2097 = vsel %vm2072, %v2090, 0.0
    %2098 = vadd.xlane.f32.xlu0 %v2097
    %v2099 = vpop.xlane.xlu0 %2098
    %v2100 = vsel %vm2072, %v2092, 0.0
    %2101 = vadd.xlane.f32.xlu0 %v2100
    %v2102 = vpop.xlane.xlu0 %2101
    %v2103 = vsel %vm2072, %v2094, 0.0
    %2104 = vadd.xlane.f32.xlu0 %v2103
    %v2105 = vpop.xlane.xlu0 %2104
    %v2106 = vsel %vm2072, %v2096, 0.0
    %2107 = vadd.xlane.f32.xlu0 %v2106
    %v2108 = vpop.xlane.xlu0 %2107
    %v2109 = vrcp.pop %v2099
    %v2110 = vmul.f32 %v2090, %v2109
    %v2111 = vrcp.pop %v2102
    %v2112 = vmul.f32 %v2092, %v2111
    %v2113 = vrcp.pop %v2105
    %v2114 = vmul.f32 %v2094, %v2113
    %v2115 = vrcp.pop %v2108
    %v2116 = vmul.f32 %v2096, %v2115
    %v2117 = vadd.f32 %v2110, 0.0
    %v2118 = vadd.f32 %v2112, 0.0
    %v2119 = vadd.f32 %v2114, 0.0
    %v2120 = vadd.f32 %v2116, 0.0
    %v2121 = vsel %vm2072, %v2110, 0.0
    %v2122 = vsel %vm2072, %v2112, 0.0
    %v2123 = vadd.f32 %v2121, %v2122
    %v2124 = vrot.slane %v2123, 4
    %v2125 = vadd.f32 %v2123, %v2124
    %v2126 = vrot.slane %v2125, 2
    %v2127 = vadd.f32 %v2125, %v2126
    %v2128 = vrot.slane %v2127, 1
    %v2129 = vadd.f32 %v2127, %v2128
    %v2130 = vsel %vm2072, %v2114, 0.0
    %v2131 = vsel %vm2072, %v2116, 0.0
    %v2132 = vadd.f32 %v2130, %v2131
    %v2133 = vrot.slane %v2132, 4
    %v2134 = vadd.f32 %v2132, %v2133
    %v2135 = vrot.slane %v2134, 2
    %v2136 = vadd.f32 %v2134, %v2135
    %v2137 = vrot.slane %v2136, 1
    %v2138 = vadd.f32 %v2136, %v2137
    %v2139 = vmul.f32 %v2129, 0.0625
    %v2140 = vmul.f32 %v2138, 0.0625
    %v2141 = vpack.c.bf16 %v2139, %v2139
    %v2142 = vpack.c.bf16 %v2140, %v2140
    %v2144 = vsel %vm2072, %v2141, 0
    %2146 = vmatprep.subr.bf16.mxu0 0
    %2147 = vmatpush1.bf16.msra.mxu0 %v1965
    %2148 = vmatprep.subr.bf16.mxu0 0
    %2149 = vmatpush1.bf16.msra.mxu0 0
    %2150 = vmatprep.subr.bf16.mxu0 0
    %2151 = vmatpush1.bf16.msra.mxu0 0
    %2152 = vmatprep.subr.bf16.mxu0 0
    %2153 = vmatpush1.bf16.msra.mxu0 0
    %2154 = vmatprep.subr.bf16.mxu0 0
    %2155 = vmatpush1.bf16.msra.mxu0 0
    %2156 = vmatprep.subr.bf16.mxu0 0
    %2157 = vmatpush1.bf16.msra.mxu0 0
    %2158 = vmatprep.subr.bf16.mxu0 0
    %2159 = vmatpush1.bf16.msra.mxu0 0
    %2160 = vmatprep.subr.bf16.mxu0 0
    %2161 = vmatpush1.bf16.msra.mxu0 0
    %2162 = vmatprep.subr.bf16.mxu0 0
    %2163 = vmatpush1.bf16.msra.mxu0 0
    %2164 = vmatprep.subr.bf16.mxu0 0
    %2165 = vmatpush1.bf16.msra.mxu0 0
    %2166 = vmatprep.subr.bf16.mxu0 0
    %2167 = vmatpush1.bf16.msra.mxu0 0
    %2168 = vmatprep.subr.bf16.mxu0 0
    %2169 = vmatpush1.bf16.msra.mxu0 0
    %2170 = vmatprep.subr.bf16.mxu0 0
    %2171 = vmatpush1.bf16.msra.mxu0 0
    %2172 = vmatprep.subr.bf16.mxu0 0
    %2173 = vmatpush1.bf16.msra.mxu0 0
    %2174 = vmatprep.subr.bf16.mxu0 0
    %2175 = vmatpush1.bf16.msra.mxu0 0
    %2176 = vmatprep.subr.bf16.mxu0 0
    %2177 = vmatpush1.bf16.msra.mxu0 0
    %2178 = vmatprep.mubr.bf16.mxu0 0
    %2179 = vmatmul.mubr.bf16.gmra.mrb[0].mxu0 %v2144
    %v2180 = vpop.f32.mrb[0].mxu0
    %v2181 = vadd.f32 0.0, %v2180
    %v2182 = vpop.f32.mrb[0].mxu0
    %v2183 = vpop.f32.mrb[0].mxu0
    %v2184 = vpop.f32.mrb[0].mxu0
    %2185 = vdwg.mxu0
    %v2187 = vsel %vm2072, %v2142, 0
    %2189 = vmatprep.subr.bf16.mxu0 0
    %2190 = vmatpush1.bf16.msra.mxu0 %v1971
    %2191 = vmatprep.subr.bf16.mxu0 0
    %2192 = vmatpush1.bf16.msra.mxu0 0
    %2193 = vmatprep.subr.bf16.mxu0 0
    %2194 = vmatpush1.bf16.msra.mxu0 0
    %2195 = vmatprep.subr.bf16.mxu0 0
    %2196 = vmatpush1.bf16.msra.mxu0 0
    %2197 = vmatprep.subr.bf16.mxu0 0
    %2198 = vmatpush1.bf16.msra.mxu0 0
    %2199 = vmatprep.subr.bf16.mxu0 0
    %2200 = vmatpush1.bf16.msra.mxu0 0
    %2201 = vmatprep.subr.bf16.mxu0 0
    %2202 = vmatpush1.bf16.msra.mxu0 0
    %2203 = vmatprep.subr.bf16.mxu0 0
    %2204 = vmatpush1.bf16.msra.mxu0 0
    %2205 = vmatprep.subr.bf16.mxu0 0
    %2206 = vmatpush1.bf16.msra.mxu0 0
    %2207 = vmatprep.subr.bf16.mxu0 0
    %2208 = vmatpush1.bf16.msra.mxu0 0
    %2209 = vmatprep.subr.bf16.mxu0 0
    %2210 = vmatpush1.bf16.msra.mxu0 0
    %2211 = vmatprep.subr.bf16.mxu0 0
    %2212 = vmatpush1.bf16.msra.mxu0 0
    %2213 = vmatprep.subr.bf16.mxu0 0
    %2214 = vmatpush1.bf16.msra.mxu0 0
    %2215 = vmatprep.subr.bf16.mxu0 0
    %2216 = vmatpush1.bf16.msra.mxu0 0
    %2217 = vmatprep.subr.bf16.mxu0 0
    %2218 = vmatpush1.bf16.msra.mxu0 0
    %2219 = vmatprep.subr.bf16.mxu0 0
    %2220 = vmatpush1.bf16.msra.mxu0 0
    %2221 = vmatprep.mubr.bf16.mxu0 0
    %2222 = vmatmul.mubr.bf16.gmra.mrb[0].mxu0 %v2187
    %v2223 = vpop.f32.mrb[0].mxu0
    %v2224 = vadd.f32 0.0, %v2223
    %v2225 = vpop.f32.mrb[0].mxu0
    %v2226 = vpop.f32.mrb[0].mxu0
    %v2227 = vpop.f32.mrb[0].mxu0
    %2228 = vdwg.mxu0
    %2230 = vrot.lane.b32.xlu0 %v1961, 96
    %v2231 = vpop.permute.xlu0 %2230
    %2233 = vrot.lane.b32.xlu0 %v1963, 96
    %v2234 = vpop.permute.xlu0 %2233
    %v2236 = vsel %vm1973, %v2231, 0
    %v2239 = vsel %vm1973, %v2234, 0
    %2241 = vmatprep.subr.bf16.mxu0 0
    %2242 = vmatpush1.bf16.xpose.msra.mxu0 %v2239
    %2243 = vmatprep.subr.bf16.mxu0 0
    %2244 = vmatpush1.bf16.xpose.msra.mxu0 0
    %2245 = vmatprep.subr.bf16.mxu0 0
    %2246 = vmatpush1.bf16.xpose.msra.mxu0 0
    %2247 = vmatprep.subr.bf16.mxu0 0
    %2248 = vmatpush1.bf16.xpose.msra.mxu0 0
    %2249 = vmatprep.subr.bf16.mxu0 0
    %2250 = vmatpush1.bf16.xpose.msra.mxu0 0
    %2251 = vmatprep.subr.bf16.mxu0 0
    %2252 = vmatpush1.bf16.xpose.msra.mxu0 0
    %2253 = vmatprep.subr.bf16.mxu0 0
    %2254 = vmatpush1.bf16.xpose.msra.mxu0 0
    %2255 = vmatprep.subr.bf16.mxu0 0
    %2256 = vmatpush1.bf16.xpose.msra.mxu0 0
    %2257 = vmatprep.subr.bf16.mxu0 0
    %2258 = vmatpush1.bf16.xpose.msra.mxu0 0
    %2259 = vmatprep.subr.bf16.mxu0 0
    %2260 = vmatpush1.bf16.xpose.msra.mxu0 0
    %2261 = vmatprep.subr.bf16.mxu0 0
    %2262 = vmatpush1.bf16.xpose.msra.mxu0 0
    %2263 = vmatprep.subr.bf16.mxu0 0
    %2264 = vmatpush1.bf16.xpose.msra.mxu0 0
    %2265 = vmatprep.subr.bf16.mxu0 0
    %2266 = vmatpush1.bf16.xpose.msra.mxu0 0
    %2267 = vmatprep.subr.bf16.mxu0 0
    %2268 = vmatpush1.bf16.xpose.msra.mxu0 0
    %2269 = vmatprep.subr.bf16.mxu0 0
    %2270 = vmatpush1.bf16.xpose.msra.mxu0 0
    %2271 = vmatprep.subr.bf16.mxu0 0
    %2272 = vmatpush1.bf16.xpose.msra.mxu0 0
    %2273 = vmatprep.mubr.bf16.mxu0 0
    %2274 = vmatmul.mubr.bf16.gmra.mrb[0].mxu0 %v2236
    %v2275 = vpop.f32.mrb[0].mxu0
    %v2276 = vadd.f32 0.0, %v2275
    %v2277 = vpop.f32.mrb[0].mxu0
    %v2278 = vpop.f32.mrb[0].mxu0
    %v2279 = vadd.f32 0.0, %v2278
    %v2280 = vpop.f32.mrb[0].mxu0
    %2281 = vdwg.mxu0
    %2283 = vrot.lane.b32.xlu0 %v1967, 96
    %v2284 = vpop.permute.xlu0 %2283
    %2286 = vrot.lane.b32.xlu0 %v1969, 96
    %v2287 = vpop.permute.xlu0 %2286
    %v2289 = vsel %vm1973, %v2284, 0
    %v2292 = vsel %vm1973, %v2287, 0
    %2294 = vmatprep.subr.bf16.mxu0 0
    %2295 = vmatpush1.bf16.xpose.msra.mxu0 %v2292
    %2296 = vmatprep.subr.bf16.mxu0 0
    %2297 = vmatpush1.bf16.xpose.msra.mxu0 0
    %2298 = vmatprep.subr.bf16.mxu0 0
    %2299 = vmatpush1.bf16.xpose.msra.mxu0 0
    %2300 = vmatprep.subr.bf16.mxu0 0
    %2301 = vmatpush1.bf16.xpose.msra.mxu0 0
    %2302 = vmatprep.subr.bf16.mxu0 0
    %2303 = vmatpush1.bf16.xpose.msra.mxu0 0
    %2304 = vmatprep.subr.bf16.mxu0 0
    %2305 = vmatpush1.bf16.xpose.msra.mxu0 0
    %2306 = vmatprep.subr.bf16.mxu0 0
    %2307 = vmatpush1.bf16.xpose.msra.mxu0 0
    %2308 = vmatprep.subr.bf16.mxu0 0
    %2309 = vmatpush1.bf16.xpose.msra.mxu0 0
    %2310 = vmatprep.subr.bf16.mxu0 0
    %2311 = vmatpush1.bf16.xpose.msra.mxu0 0
    %2312 = vmatprep.subr.bf16.mxu0 0
    %2313 = vmatpush1.bf16.xpose.msra.mxu0 0
    %2314 = vmatprep.subr.bf16.mxu0 0
    %2315 = vmatpush1.bf16.xpose.msra.mxu0 0
    %2316 = vmatprep.subr.bf16.mxu0 0
    %2317 = vmatpush1.bf16.xpose.msra.mxu0 0
    %2318 = vmatprep.subr.bf16.mxu0 0
    %2319 = vmatpush1.bf16.xpose.msra.mxu0 0
    %2320 = vmatprep.subr.bf16.mxu0 0
    %2321 = vmatpush1.bf16.xpose.msra.mxu0 0
    %2322 = vmatprep.subr.bf16.mxu0 0
    %2323 = vmatpush1.bf16.xpose.msra.mxu0 0
    %2324 = vmatprep.subr.bf16.mxu0 0
    %2325 = vmatpush1.bf16.xpose.msra.mxu0 0
    %2326 = vmatprep.mubr.bf16.mxu0 0
    %2327 = vmatmul.mubr.bf16.gmra.mrb[0].mxu0 %v2289
    %v2328 = vpop.f32.mrb[0].mxu0
    %v2329 = vadd.f32 0.0, %v2328
    %v2330 = vpop.f32.mrb[0].mxu0
    %v2331 = vpop.f32.mrb[0].mxu0
    %v2332 = vadd.f32 0.0, %v2331
    %v2333 = vpop.f32.mrb[0].mxu0
    %2334 = vdwg.mxu0
    %v2335 = vmul.f32 %v2276, 0.17677669
    %v2336 = vmul.f32 %v2279, 0.17677669
    %v2337 = vmul.f32 %v2329, 0.17677669
    %v2338 = vmul.f32 %v2332, 0.17677669
    %v2339 = vsel %vm2072, %v2335, -inf
    %2340 = vmax.xlane.f32.xlu0 %v2339
    %v2341 = vpop.xlane.xlu0 %2340
    %v2342 = vsel %vm2072, %v2336, -inf
    %2343 = vmax.xlane.f32.xlu0 %v2342
    %v2344 = vpop.xlane.xlu0 %2343
    %v2345 = vsel %vm2072, %v2337, -inf
    %2346 = vmax.xlane.f32.xlu0 %v2345
    %v2347 = vpop.xlane.xlu0 %2346
    %v2348 = vsel %vm2072, %v2338, -inf
    %2349 = vmax.xlane.f32.xlu0 %v2348
    %v2350 = vpop.xlane.xlu0 %2349
    %v2351 = vsub.f32 %v2335, %v2341
    %v2352 = vsub.f32 %v2336, %v2344
    %v2353 = vsub.f32 %v2337, %v2347
    %v2354 = vsub.f32 %v2338, %v2350
    %v2355 = vmul.f32 %v2351, 1.442695
    %v2356 = vpow.pop %v2355
    %v2357 = vmul.f32 %v2352, 1.442695
    %v2358 = vpow.pop %v2357
    %v2359 = vmul.f32 %v2353, 1.442695
    %v2360 = vpow.pop %v2359
    %v2361 = vmul.f32 %v2354, 1.442695
    %v2362 = vpow.pop %v2361
    %v2363 = vsel %vm2072, %v2356, 0.0
    %2364 = vadd.xlane.f32.xlu0 %v2363
    %v2365 = vpop.xlane.xlu0 %2364
    %v2366 = vsel %vm2072, %v2358, 0.0
    %2367 = vadd.xlane.f32.xlu0 %v2366
    %v2368 = vpop.xlane.xlu0 %2367
    %v2369 = vsel %vm2072, %v2360, 0.0
    %2370 = vadd.xlane.f32.xlu0 %v2369
    %v2371 = vpop.xlane.xlu0 %2370
    %v2372 = vsel %vm2072, %v2362, 0.0
    %2373 = vadd.xlane.f32.xlu0 %v2372
    %v2374 = vpop.xlane.xlu0 %2373
    %v2375 = vrcp.pop %v2365
    %v2376 = vmul.f32 %v2356, %v2375
    %v2377 = vrcp.pop %v2368
    %v2378 = vmul.f32 %v2358, %v2377
    %v2379 = vrcp.pop %v2371
    %v2380 = vmul.f32 %v2360, %v2379
    %v2381 = vrcp.pop %v2374
    %v2382 = vmul.f32 %v2362, %v2381
    %v2383 = vadd.f32 %v2117, %v2376
    %v2384 = vadd.f32 %v2118, %v2378
    %v2385 = vadd.f32 %v2119, %v2380
    %v2386 = vadd.f32 %v2120, %v2382
    %v2387 = vsel %vm2072, %v2376, 0.0
    %v2388 = vsel %vm2072, %v2378, 0.0
    %v2389 = vadd.f32 %v2387, %v2388
    %v2390 = vrot.slane %v2389, 4
    %v2391 = vadd.f32 %v2389, %v2390
    %v2392 = vrot.slane %v2391, 2
    %v2393 = vadd.f32 %v2391, %v2392
    %v2394 = vrot.slane %v2393, 1
    %v2395 = vadd.f32 %v2393, %v2394
    %v2396 = vsel %vm2072, %v2380, 0.0
    %v2397 = vsel %vm2072, %v2382, 0.0
    %v2398 = vadd.f32 %v2396, %v2397
    %v2399 = vrot.slane %v2398, 4
    %v2400 = vadd.f32 %v2398, %v2399
    %v2401 = vrot.slane %v2400, 2
    %v2402 = vadd.f32 %v2400, %v2401
    %v2403 = vrot.slane %v2402, 1
    %v2404 = vadd.f32 %v2402, %v2403
    %v2405 = vmul.f32 %v2395, 0.0625
    %v2406 = vmul.f32 %v2404, 0.0625
    %v2407 = vpack.c.bf16 %v2405, %v2405
    %v2408 = vpack.c.bf16 %v2406, %v2406
    %2410 = vrot.lane.b32.xlu0 %v1965, 96
    %v2411 = vpop.permute.xlu0 %2410
    %v2414 = vsel %vm2072, %v2407, 0
    %2416 = vmatprep.subr.bf16.mxu0 0
    %2417 = vmatpush1.bf16.msra.mxu0 %v2411
    %2418 = vmatprep.subr.bf16.mxu0 0
    %2419 = vmatpush1.bf16.msra.mxu0 0
    %2420 = vmatprep.subr.bf16.mxu0 0
    %2421 = vmatpush1.bf16.msra.mxu0 0
    %2422 = vmatprep.subr.bf16.mxu0 0
    %2423 = vmatpush1.bf16.msra.mxu0 0
    %2424 = vmatprep.subr.bf16.mxu0 0
    %2425 = vmatpush1.bf16.msra.mxu0 0
    %2426 = vmatprep.subr.bf16.mxu0 0
    %2427 = vmatpush1.bf16.msra.mxu0 0
    %2428 = vmatprep.subr.bf16.mxu0 0
    %2429 = vmatpush1.bf16.msra.mxu0 0
    %2430 = vmatprep.subr.bf16.mxu0 0
    %2431 = vmatpush1.bf16.msra.mxu0 0
    %2432 = vmatprep.subr.bf16.mxu0 0
    %2433 = vmatpush1.bf16.msra.mxu0 0
    %2434 = vmatprep.subr.bf16.mxu0 0
    %2435 = vmatpush1.bf16.msra.mxu0 0
    %2436 = vmatprep.subr.bf16.mxu0 0
    %2437 = vmatpush1.bf16.msra.mxu0 0
    %2438 = vmatprep.subr.bf16.mxu0 0
    %2439 = vmatpush1.bf16.msra.mxu0 0
    %2440 = vmatprep.subr.bf16.mxu0 0
    %2441 = vmatpush1.bf16.msra.mxu0 0
    %2442 = vmatprep.subr.bf16.mxu0 0
    %2443 = vmatpush1.bf16.msra.mxu0 0
    %2444 = vmatprep.subr.bf16.mxu0 0
    %2445 = vmatpush1.bf16.msra.mxu0 0
    %2446 = vmatprep.subr.bf16.mxu0 0
    %2447 = vmatpush1.bf16.msra.mxu0 0
    %2448 = vmatprep.mubr.bf16.mxu0 0
    %2449 = vmatmul.mubr.bf16.gmra.mrb[0].mxu0 %v2414
    %v2450 = vpop.f32.mrb[0].mxu0
    %v2451 = vadd.f32 0.0, %v2450
    %v2452 = vpop.f32.mrb[0].mxu0
    %v2453 = vpop.f32.mrb[0].mxu0
    %v2454 = vpop.f32.mrb[0].mxu0
    %2455 = vdwg.mxu0
    %2457 = vrot.lane.b32.xlu0 %v1971, 96
    %v2458 = vpop.permute.xlu0 %2457
    %v2461 = vsel %vm2072, %v2408, 0
    %2463 = vmatprep.subr.bf16.mxu0 0
    %2464 = vmatpush1.bf16.msra.mxu0 %v2458
    %2465 = vmatprep.subr.bf16.mxu0 0
    %2466 = vmatpush1.bf16.msra.mxu0 0
    %2467 = vmatprep.subr.bf16.mxu0 0
    %2468 = vmatpush1.bf16.msra.mxu0 0
    %2469 = vmatprep.subr.bf16.mxu0 0
    %2470 = vmatpush1.bf16.msra.mxu0 0
    %2471 = vmatprep.subr.bf16.mxu0 0
    %2472 = vmatpush1.bf16.msra.mxu0 0
    %2473 = vmatprep.subr.bf16.mxu0 0
    %2474 = vmatpush1.bf16.msra.mxu0 0
    %2475 = vmatprep.subr.bf16.mxu0 0
    %2476 = vmatpush1.bf16.msra.mxu0 0
    %2477 = vmatprep.subr.bf16.mxu0 0
    %2478 = vmatpush1.bf16.msra.mxu0 0
    %2479 = vmatprep.subr.bf16.mxu0 0
    %2480 = vmatpush1.bf16.msra.mxu0 0
    %2481 = vmatprep.subr.bf16.mxu0 0
    %2482 = vmatpush1.bf16.msra.mxu0 0
    %2483 = vmatprep.subr.bf16.mxu0 0
    %2484 = vmatpush1.bf16.msra.mxu0 0
    %2485 = vmatprep.subr.bf16.mxu0 0
    %2486 = vmatpush1.bf16.msra.mxu0 0
    %2487 = vmatprep.subr.bf16.mxu0 0
    %2488 = vmatpush1.bf16.msra.mxu0 0
    %2489 = vmatprep.subr.bf16.mxu0 0
    %2490 = vmatpush1.bf16.msra.mxu0 0
    %2491 = vmatprep.subr.bf16.mxu0 0
    %2492 = vmatpush1.bf16.msra.mxu0 0
    %2493 = vmatprep.subr.bf16.mxu0 0
    %2494 = vmatpush1.bf16.msra.mxu0 0
    %2495 = vmatprep.mubr.bf16.mxu0 0
    %2496 = vmatmul.mubr.bf16.gmra.mrb[0].mxu0 %v2461
    %v2497 = vpop.f32.mrb[0].mxu0
    %v2498 = vadd.f32 0.0, %v2497
    %v2499 = vpop.f32.mrb[0].mxu0
    %v2500 = vpop.f32.mrb[0].mxu0
    %v2501 = vpop.f32.mrb[0].mxu0
    %2502 = vdwg.mxu0
    %2503 = vrot.lane.b32.xlu0 %v1961, 64
    %v2504 = vpop.permute.xlu0 %2503
    %2505 = vrot.lane.b32.xlu0 %v1963, 64
    %v2506 = vpop.permute.xlu0 %2505
    %v2508 = vsel %vm1973, %v2504, 0
    %v2511 = vsel %vm1973, %v2506, 0
    %2513 = vmatprep.subr.bf16.mxu0 0
    %2514 = vmatpush1.bf16.xpose.msra.mxu0 %v2511
    %2515 = vmatprep.subr.bf16.mxu0 0
    %2516 = vmatpush1.bf16.xpose.msra.mxu0 0
    %2517 = vmatprep.subr.bf16.mxu0 0
    %2518 = vmatpush1.bf16.xpose.msra.mxu0 0
    %2519 = vmatprep.subr.bf16.mxu0 0
    %2520 = vmatpush1.bf16.xpose.msra.mxu0 0
    %2521 = vmatprep.subr.bf16.mxu0 0
    %2522 = vmatpush1.bf16.xpose.msra.mxu0 0
    %2523 = vmatprep.subr.bf16.mxu0 0
    %2524 = vmatpush1.bf16.xpose.msra.mxu0 0
    %2525 = vmatprep.subr.bf16.mxu0 0
    %2526 = vmatpush1.bf16.xpose.msra.mxu0 0
    %2527 = vmatprep.subr.bf16.mxu0 0
    %2528 = vmatpush1.bf16.xpose.msra.mxu0 0
    %2529 = vmatprep.subr.bf16.mxu0 0
    %2530 = vmatpush1.bf16.xpose.msra.mxu0 0
    %2531 = vmatprep.subr.bf16.mxu0 0
    %2532 = vmatpush1.bf16.xpose.msra.mxu0 0
    %2533 = vmatprep.subr.bf16.mxu0 0
    %2534 = vmatpush1.bf16.xpose.msra.mxu0 0
    %2535 = vmatprep.subr.bf16.mxu0 0
    %2536 = vmatpush1.bf16.xpose.msra.mxu0 0
    %2537 = vmatprep.subr.bf16.mxu0 0
    %2538 = vmatpush1.bf16.xpose.msra.mxu0 0
    %2539 = vmatprep.subr.bf16.mxu0 0
    %2540 = vmatpush1.bf16.xpose.msra.mxu0 0
    %2541 = vmatprep.subr.bf16.mxu0 0
    %2542 = vmatpush1.bf16.xpose.msra.mxu0 0
    %2543 = vmatprep.subr.bf16.mxu0 0
    %2544 = vmatpush1.bf16.xpose.msra.mxu0 0
    %2545 = vmatprep.mubr.bf16.mxu0 0
    %2546 = vmatmul.mubr.bf16.gmra.mrb[0].mxu0 %v2508
    %v2547 = vpop.f32.mrb[0].mxu0
    %v2548 = vadd.f32 0.0, %v2547
    %v2549 = vpop.f32.mrb[0].mxu0
    %v2550 = vpop.f32.mrb[0].mxu0
    %v2551 = vadd.f32 0.0, %v2550
    %v2552 = vpop.f32.mrb[0].mxu0
    %2553 = vdwg.mxu0
    %2554 = vrot.lane.b32.xlu0 %v1967, 64
    %v2555 = vpop.permute.xlu0 %2554
    %2556 = vrot.lane.b32.xlu0 %v1969, 64
    %v2557 = vpop.permute.xlu0 %2556
    %v2559 = vsel %vm1973, %v2555, 0
    %v2562 = vsel %vm1973, %v2557, 0
    %2564 = vmatprep.subr.bf16.mxu0 0
    %2565 = vmatpush1.bf16.xpose.msra.mxu0 %v2562
    %2566 = vmatprep.subr.bf16.mxu0 0
    %2567 = vmatpush1.bf16.xpose.msra.mxu0 0
    %2568 = vmatprep.subr.bf16.mxu0 0
    %2569 = vmatpush1.bf16.xpose.msra.mxu0 0
    %2570 = vmatprep.subr.bf16.mxu0 0
    %2571 = vmatpush1.bf16.xpose.msra.mxu0 0
    %2572 = vmatprep.subr.bf16.mxu0 0
    %2573 = vmatpush1.bf16.xpose.msra.mxu0 0
    %2574 = vmatprep.subr.bf16.mxu0 0
    %2575 = vmatpush1.bf16.xpose.msra.mxu0 0
    %2576 = vmatprep.subr.bf16.mxu0 0
    %2577 = vmatpush1.bf16.xpose.msra.mxu0 0
    %2578 = vmatprep.subr.bf16.mxu0 0
    %2579 = vmatpush1.bf16.xpose.msra.mxu0 0
    %2580 = vmatprep.subr.bf16.mxu0 0
    %2581 = vmatpush1.bf16.xpose.msra.mxu0 0
    %2582 = vmatprep.subr.bf16.mxu0 0
    %2583 = vmatpush1.bf16.xpose.msra.mxu0 0
    %2584 = vmatprep.subr.bf16.mxu0 0
    %2585 = vmatpush1.bf16.xpose.msra.mxu0 0
    %2586 = vmatprep.subr.bf16.mxu0 0
    %2587 = vmatpush1.bf16.xpose.msra.mxu0 0
    %2588 = vmatprep.subr.bf16.mxu0 0
    %2589 = vmatpush1.bf16.xpose.msra.mxu0 0
    %2590 = vmatprep.subr.bf16.mxu0 0
    %2591 = vmatpush1.bf16.xpose.msra.mxu0 0
    %2592 = vmatprep.subr.bf16.mxu0 0
    %2593 = vmatpush1.bf16.xpose.msra.mxu0 0
    %2594 = vmatprep.subr.bf16.mxu0 0
    %2595 = vmatpush1.bf16.xpose.msra.mxu0 0
    %2596 = vmatprep.mubr.bf16.mxu0 0
    %2597 = vmatmul.mubr.bf16.gmra.mrb[0].mxu0 %v2559
    %v2598 = vpop.f32.mrb[0].mxu0
    %v2599 = vadd.f32 0.0, %v2598
    %v2600 = vpop.f32.mrb[0].mxu0
    %v2601 = vpop.f32.mrb[0].mxu0
    %v2602 = vadd.f32 0.0, %v2601
    %v2603 = vpop.f32.mrb[0].mxu0
    %2604 = vdwg.mxu0
    %v2605 = vmul.f32 %v2548, 0.17677669
    %v2606 = vmul.f32 %v2551, 0.17677669
    %v2607 = vmul.f32 %v2599, 0.17677669
    %v2608 = vmul.f32 %v2602, 0.17677669
    %v2609 = vsel %vm2072, %v2605, -inf
    %2610 = vmax.xlane.f32.xlu0 %v2609
    %v2611 = vpop.xlane.xlu0 %2610
    %v2612 = vsel %vm2072, %v2606, -inf
    %2613 = vmax.xlane.f32.xlu0 %v2612
    %v2614 = vpop.xlane.xlu0 %2613
    %v2615 = vsel %vm2072, %v2607, -inf
    %2616 = vmax.xlane.f32.xlu0 %v2615
    %v2617 = vpop.xlane.xlu0 %2616
    %v2618 = vsel %vm2072, %v2608, -inf
    %2619 = vmax.xlane.f32.xlu0 %v2618
    %v2620 = vpop.xlane.xlu0 %2619
    %v2621 = vsub.f32 %v2605, %v2611
    %v2622 = vsub.f32 %v2606, %v2614
    %v2623 = vsub.f32 %v2607, %v2617
    %v2624 = vsub.f32 %v2608, %v2620
    %v2625 = vmul.f32 %v2621, 1.442695
    %v2626 = vpow.pop %v2625
    %v2627 = vmul.f32 %v2622, 1.442695
    %v2628 = vpow.pop %v2627
    %v2629 = vmul.f32 %v2623, 1.442695
    %v2630 = vpow.pop %v2629
    %v2631 = vmul.f32 %v2624, 1.442695
    %v2632 = vpow.pop %v2631
    %v2633 = vsel %vm2072, %v2626, 0.0
    %2634 = vadd.xlane.f32.xlu0 %v2633
    %v2635 = vpop.xlane.xlu0 %2634
    %v2636 = vsel %vm2072, %v2628, 0.0
    %2637 = vadd.xlane.f32.xlu0 %v2636
    %v2638 = vpop.xlane.xlu0 %2637
    %v2639 = vsel %vm2072, %v2630, 0.0
    %2640 = vadd.xlane.f32.xlu0 %v2639
    %v2641 = vpop.xlane.xlu0 %2640
    %v2642 = vsel %vm2072, %v2632, 0.0
    %2643 = vadd.xlane.f32.xlu0 %v2642
    %v2644 = vpop.xlane.xlu0 %2643
    %v2645 = vrcp.pop %v2635
    %v2646 = vmul.f32 %v2626, %v2645
    %v2647 = vrcp.pop %v2638
    %v2648 = vmul.f32 %v2628, %v2647
    %v2649 = vrcp.pop %v2641
    %v2650 = vmul.f32 %v2630, %v2649
    %v2651 = vrcp.pop %v2644
    %v2652 = vmul.f32 %v2632, %v2651
    %v2653 = vadd.f32 %v2383, %v2646
    %v2654 = vadd.f32 %v2384, %v2648
    %v2655 = vadd.f32 %v2385, %v2650
    %v2656 = vadd.f32 %v2386, %v2652
    %v2657 = vsel %vm2072, %v2646, 0.0
    %v2658 = vsel %vm2072, %v2648, 0.0
    %v2659 = vadd.f32 %v2657, %v2658
    %v2660 = vrot.slane %v2659, 4
    %v2661 = vadd.f32 %v2659, %v2660
    %v2662 = vrot.slane %v2661, 2
    %v2663 = vadd.f32 %v2661, %v2662
    %v2664 = vrot.slane %v2663, 1
    %v2665 = vadd.f32 %v2663, %v2664
    %v2666 = vsel %vm2072, %v2650, 0.0
    %v2667 = vsel %vm2072, %v2652, 0.0
    %v2668 = vadd.f32 %v2666, %v2667
    %v2669 = vrot.slane %v2668, 4
    %v2670 = vadd.f32 %v2668, %v2669
    %v2671 = vrot.slane %v2670, 2
    %v2672 = vadd.f32 %v2670, %v2671
    %v2673 = vrot.slane %v2672, 1
    %v2674 = vadd.f32 %v2672, %v2673
    %v2675 = vmul.f32 %v2665, 0.0625
    %v2676 = vmul.f32 %v2674, 0.0625
    %v2677 = vpack.c.bf16 %v2675, %v2675
    %v2678 = vpack.c.bf16 %v2676, %v2676
    %2679 = vrot.lane.b32.xlu0 %v1965, 64
    %v2680 = vpop.permute.xlu0 %2679
    %v2683 = vsel %vm2072, %v2677, 0
    %2685 = vmatprep.subr.bf16.mxu0 0
    %2686 = vmatpush1.bf16.msra.mxu0 %v2680
    %2687 = vmatprep.subr.bf16.mxu0 0
    %2688 = vmatpush1.bf16.msra.mxu0 0
    %2689 = vmatprep.subr.bf16.mxu0 0
    %2690 = vmatpush1.bf16.msra.mxu0 0
    %2691 = vmatprep.subr.bf16.mxu0 0
    %2692 = vmatpush1.bf16.msra.mxu0 0
    %2693 = vmatprep.subr.bf16.mxu0 0
    %2694 = vmatpush1.bf16.msra.mxu0 0
    %2695 = vmatprep.subr.bf16.mxu0 0
    %2696 = vmatpush1.bf16.msra.mxu0 0
    %2697 = vmatprep.subr.bf16.mxu0 0
    %2698 = vmatpush1.bf16.msra.mxu0 0
    %2699 = vmatprep.subr.bf16.mxu0 0
    %2700 = vmatpush1.bf16.msra.mxu0 0
    %2701 = vmatprep.subr.bf16.mxu0 0
    %2702 = vmatpush1.bf16.msra.mxu0 0
    %2703 = vmatprep.subr.bf16.mxu0 0
    %2704 = vmatpush1.bf16.msra.mxu0 0
    %2705 = vmatprep.subr.bf16.mxu0 0
    %2706 = vmatpush1.bf16.msra.mxu0 0
    %2707 = vmatprep.subr.bf16.mxu0 0
    %2708 = vmatpush1.bf16.msra.mxu0 0
    %2709 = vmatprep.subr.bf16.mxu0 0
    %2710 = vmatpush1.bf16.msra.mxu0 0
    %2711 = vmatprep.subr.bf16.mxu0 0
    %2712 = vmatpush1.bf16.msra.mxu0 0
    %2713 = vmatprep.subr.bf16.mxu0 0
    %2714 = vmatpush1.bf16.msra.mxu0 0
    %2715 = vmatprep.subr.bf16.mxu0 0
    %2716 = vmatpush1.bf16.msra.mxu0 0
    %2717 = vmatprep.mubr.bf16.mxu0 0
    %2718 = vmatmul.mubr.bf16.gmra.mrb[0].mxu0 %v2683
    %v2719 = vpop.f32.mrb[0].mxu0
    %v2720 = vadd.f32 0.0, %v2719
    %v2721 = vpop.f32.mrb[0].mxu0
    %v2722 = vpop.f32.mrb[0].mxu0
    %v2723 = vpop.f32.mrb[0].mxu0
    %2724 = vdwg.mxu0
    %2725 = vrot.lane.b32.xlu0 %v1971, 64
    %v2726 = vpop.permute.xlu0 %2725
    %v2729 = vsel %vm2072, %v2678, 0
    %2731 = vmatprep.subr.bf16.mxu0 0
    %2732 = vmatpush1.bf16.msra.mxu0 %v2726
    %2733 = vmatprep.subr.bf16.mxu0 0
    %2734 = vmatpush1.bf16.msra.mxu0 0
    %2735 = vmatprep.subr.bf16.mxu0 0
    %2736 = vmatpush1.bf16.msra.mxu0 0
    %2737 = vmatprep.subr.bf16.mxu0 0
    %2738 = vmatpush1.bf16.msra.mxu0 0
    %2739 = vmatprep.subr.bf16.mxu0 0
    %2740 = vmatpush1.bf16.msra.mxu0 0
    %2741 = vmatprep.subr.bf16.mxu0 0
    %2742 = vmatpush1.bf16.msra.mxu0 0
    %2743 = vmatprep.subr.bf16.mxu0 0
    %2744 = vmatpush1.bf16.msra.mxu0 0
    %2745 = vmatprep.subr.bf16.mxu0 0
    %2746 = vmatpush1.bf16.msra.mxu0 0
    %2747 = vmatprep.subr.bf16.mxu0 0
    %2748 = vmatpush1.bf16.msra.mxu0 0
    %2749 = vmatprep.subr.bf16.mxu0 0
    %2750 = vmatpush1.bf16.msra.mxu0 0
    %2751 = vmatprep.subr.bf16.mxu0 0
    %2752 = vmatpush1.bf16.msra.mxu0 0
    %2753 = vmatprep.subr.bf16.mxu0 0
    %2754 = vmatpush1.bf16.msra.mxu0 0
    %2755 = vmatprep.subr.bf16.mxu0 0
    %2756 = vmatpush1.bf16.msra.mxu0 0
    %2757 = vmatprep.subr.bf16.mxu0 0
    %2758 = vmatpush1.bf16.msra.mxu0 0
    %2759 = vmatprep.subr.bf16.mxu0 0
    %2760 = vmatpush1.bf16.msra.mxu0 0
    %2761 = vmatprep.subr.bf16.mxu0 0
    %2762 = vmatpush1.bf16.msra.mxu0 0
    %2763 = vmatprep.mubr.bf16.mxu0 0
    %2764 = vmatmul.mubr.bf16.gmra.mrb[0].mxu0 %v2729
    %v2765 = vpop.f32.mrb[0].mxu0
    %v2766 = vadd.f32 0.0, %v2765
    %v2767 = vpop.f32.mrb[0].mxu0
    %v2768 = vpop.f32.mrb[0].mxu0
    %v2769 = vpop.f32.mrb[0].mxu0
    %2770 = vdwg.mxu0
    %2771 = vrot.lane.b32.xlu0 %v1961, 32
    %v2772 = vpop.permute.xlu0 %2771
    %2773 = vrot.lane.b32.xlu0 %v1963, 32
    %v2774 = vpop.permute.xlu0 %2773
    %v2776 = vsel %vm1973, %v2772, 0
    %v2779 = vsel %vm1973, %v2774, 0
    %2781 = vmatprep.subr.bf16.mxu0 0
    %2782 = vmatpush1.bf16.xpose.msra.mxu0 %v2779
    %2783 = vmatprep.subr.bf16.mxu0 0
    %2784 = vmatpush1.bf16.xpose.msra.mxu0 0
    %2785 = vmatprep.subr.bf16.mxu0 0
    %2786 = vmatpush1.bf16.xpose.msra.mxu0 0
    %2787 = vmatprep.subr.bf16.mxu0 0
    %2788 = vmatpush1.bf16.xpose.msra.mxu0 0
    %2789 = vmatprep.subr.bf16.mxu0 0
    %2790 = vmatpush1.bf16.xpose.msra.mxu0 0
    %2791 = vmatprep.subr.bf16.mxu0 0
    %2792 = vmatpush1.bf16.xpose.msra.mxu0 0
    %2793 = vmatprep.subr.bf16.mxu0 0
    %2794 = vmatpush1.bf16.xpose.msra.mxu0 0
    %2795 = vmatprep.subr.bf16.mxu0 0
    %2796 = vmatpush1.bf16.xpose.msra.mxu0 0
    %2797 = vmatprep.subr.bf16.mxu0 0
    %2798 = vmatpush1.bf16.xpose.msra.mxu0 0
    %2799 = vmatprep.subr.bf16.mxu0 0
    %2800 = vmatpush1.bf16.xpose.msra.mxu0 0
    %2801 = vmatprep.subr.bf16.mxu0 0
    %2802 = vmatpush1.bf16.xpose.msra.mxu0 0
    %2803 = vmatprep.subr.bf16.mxu0 0
    %2804 = vmatpush1.bf16.xpose.msra.mxu0 0
    %2805 = vmatprep.subr.bf16.mxu0 0
    %2806 = vmatpush1.bf16.xpose.msra.mxu0 0
    %2807 = vmatprep.subr.bf16.mxu0 0
    %2808 = vmatpush1.bf16.xpose.msra.mxu0 0
    %2809 = vmatprep.subr.bf16.mxu0 0
    %2810 = vmatpush1.bf16.xpose.msra.mxu0 0
    %2811 = vmatprep.subr.bf16.mxu0 0
    %2812 = vmatpush1.bf16.xpose.msra.mxu0 0
    %2813 = vmatprep.mubr.bf16.mxu0 0
    %2814 = vmatmul.mubr.bf16.gmra.mrb[0].mxu0 %v2776
    %v2815 = vpop.f32.mrb[0].mxu0
    %v2816 = vadd.f32 0.0, %v2815
    %v2817 = vpop.f32.mrb[0].mxu0
    %v2818 = vpop.f32.mrb[0].mxu0
    %v2819 = vadd.f32 0.0, %v2818
    %v2820 = vpop.f32.mrb[0].mxu0
    %2821 = vdwg.mxu0
    %2822 = vrot.lane.b32.xlu0 %v1967, 32
    %v2823 = vpop.permute.xlu0 %2822
    %2824 = vrot.lane.b32.xlu0 %v1969, 32
    %v2825 = vpop.permute.xlu0 %2824
    %v2827 = vsel %vm1973, %v2823, 0
    %v2830 = vsel %vm1973, %v2825, 0
    %2832 = vmatprep.subr.bf16.mxu0 0
    %2833 = vmatpush1.bf16.xpose.msra.mxu0 %v2830
    %2834 = vmatprep.subr.bf16.mxu0 0
    %2835 = vmatpush1.bf16.xpose.msra.mxu0 0
    %2836 = vmatprep.subr.bf16.mxu0 0
    %2837 = vmatpush1.bf16.xpose.msra.mxu0 0
    %2838 = vmatprep.subr.bf16.mxu0 0
    %2839 = vmatpush1.bf16.xpose.msra.mxu0 0
    %2840 = vmatprep.subr.bf16.mxu0 0
    %2841 = vmatpush1.bf16.xpose.msra.mxu0 0
    %2842 = vmatprep.subr.bf16.mxu0 0
    %2843 = vmatpush1.bf16.xpose.msra.mxu0 0
    %2844 = vmatprep.subr.bf16.mxu0 0
    %2845 = vmatpush1.bf16.xpose.msra.mxu0 0
    %2846 = vmatprep.subr.bf16.mxu0 0
    %2847 = vmatpush1.bf16.xpose.msra.mxu0 0
    %2848 = vmatprep.subr.bf16.mxu0 0
    %2849 = vmatpush1.bf16.xpose.msra.mxu0 0
    %2850 = vmatprep.subr.bf16.mxu0 0
    %2851 = vmatpush1.bf16.xpose.msra.mxu0 0
    %2852 = vmatprep.subr.bf16.mxu0 0
    %2853 = vmatpush1.bf16.xpose.msra.mxu0 0
    %2854 = vmatprep.subr.bf16.mxu0 0
    %2855 = vmatpush1.bf16.xpose.msra.mxu0 0
    %2856 = vmatprep.subr.bf16.mxu0 0
    %2857 = vmatpush1.bf16.xpose.msra.mxu0 0
    %2858 = vmatprep.subr.bf16.mxu0 0
    %2859 = vmatpush1.bf16.xpose.msra.mxu0 0
    %2860 = vmatprep.subr.bf16.mxu0 0
    %2861 = vmatpush1.bf16.xpose.msra.mxu0 0
    %2862 = vmatprep.subr.bf16.mxu0 0
    %2863 = vmatpush1.bf16.xpose.msra.mxu0 0
    %2864 = vmatprep.mubr.bf16.mxu0 0
    %2865 = vmatmul.mubr.bf16.gmra.mrb[0].mxu0 %v2827
    %v2866 = vpop.f32.mrb[0].mxu0
    %v2867 = vadd.f32 0.0, %v2866
    %v2868 = vpop.f32.mrb[0].mxu0
    %v2869 = vpop.f32.mrb[0].mxu0
    %v2870 = vadd.f32 0.0, %v2869
    %v2871 = vpop.f32.mrb[0].mxu0
    %2872 = vdwg.mxu0
    %v2873 = vmul.f32 %v2816, 0.17677669
    %v2874 = vmul.f32 %v2819, 0.17677669
    %v2875 = vmul.f32 %v2867, 0.17677669
    %v2876 = vmul.f32 %v2870, 0.17677669
    %v2877 = vsel %vm2072, %v2873, -inf
    %2878 = vmax.xlane.f32.xlu0 %v2877
    %v2879 = vpop.xlane.xlu0 %2878
    %v2880 = vsel %vm2072, %v2874, -inf
    %2881 = vmax.xlane.f32.xlu0 %v2880
    %v2882 = vpop.xlane.xlu0 %2881
    %v2883 = vsel %vm2072, %v2875, -inf
    %2884 = vmax.xlane.f32.xlu0 %v2883
    %v2885 = vpop.xlane.xlu0 %2884
    %v2886 = vsel %vm2072, %v2876, -inf
    %2887 = vmax.xlane.f32.xlu0 %v2886
    %v2888 = vpop.xlane.xlu0 %2887
    %v2889 = vsub.f32 %v2873, %v2879
    %v2890 = vsub.f32 %v2874, %v2882
    %v2891 = vsub.f32 %v2875, %v2885
    %v2892 = vsub.f32 %v2876, %v2888
    %v2893 = vmul.f32 %v2889, 1.442695
    %v2894 = vpow.pop %v2893
    %v2895 = vmul.f32 %v2890, 1.442695
    %v2896 = vpow.pop %v2895
    %v2897 = vmul.f32 %v2891, 1.442695
    %v2898 = vpow.pop %v2897
    %v2899 = vmul.f32 %v2892, 1.442695
    %v2900 = vpow.pop %v2899
    %v2901 = vsel %vm2072, %v2894, 0.0
    %2902 = vadd.xlane.f32.xlu0 %v2901
    %v2903 = vpop.xlane.xlu0 %2902
    %v2904 = vsel %vm2072, %v2896, 0.0
    %2905 = vadd.xlane.f32.xlu0 %v2904
    %v2906 = vpop.xlane.xlu0 %2905
    %v2907 = vsel %vm2072, %v2898, 0.0
    %2908 = vadd.xlane.f32.xlu0 %v2907
    %v2909 = vpop.xlane.xlu0 %2908
    %v2910 = vsel %vm2072, %v2900, 0.0
    %2911 = vadd.xlane.f32.xlu0 %v2910
    %v2912 = vpop.xlane.xlu0 %2911
    %v2913 = vrcp.pop %v2903
    %v2914 = vmul.f32 %v2894, %v2913
    %v2915 = vrcp.pop %v2906
    %v2916 = vmul.f32 %v2896, %v2915
    %v2917 = vrcp.pop %v2909
    %v2918 = vmul.f32 %v2898, %v2917
    %v2919 = vrcp.pop %v2912
    %v2920 = vmul.f32 %v2900, %v2919
    %v2921 = vadd.f32 %v2653, %v2914
    %v2922 = vadd.f32 %v2654, %v2916
    %v2923 = vadd.f32 %v2655, %v2918
    %v2924 = vadd.f32 %v2656, %v2920
    %v2925 = vsel %vm2072, %v2914, 0.0
    %v2926 = vsel %vm2072, %v2916, 0.0
    %v2927 = vadd.f32 %v2925, %v2926
    %v2928 = vrot.slane %v2927, 4
    %v2929 = vadd.f32 %v2927, %v2928
    %v2930 = vrot.slane %v2929, 2
    %v2931 = vadd.f32 %v2929, %v2930
    %v2932 = vrot.slane %v2931, 1
    %v2933 = vadd.f32 %v2931, %v2932
    %v2934 = vsel %vm2072, %v2918, 0.0
    %v2935 = vsel %vm2072, %v2920, 0.0
    %v2936 = vadd.f32 %v2934, %v2935
    %v2937 = vrot.slane %v2936, 4
    %v2938 = vadd.f32 %v2936, %v2937
    %v2939 = vrot.slane %v2938, 2
    %v2940 = vadd.f32 %v2938, %v2939
    %v2941 = vrot.slane %v2940, 1
    %v2942 = vadd.f32 %v2940, %v2941
    %v2943 = vmul.f32 %v2933, 0.0625
    %v2944 = vmul.f32 %v2942, 0.0625
    %v2945 = vpack.c.bf16 %v2943, %v2943
    %v2946 = vpack.c.bf16 %v2944, %v2944
    %2947 = vrot.lane.b32.xlu0 %v1965, 32
    %v2948 = vpop.permute.xlu0 %2947
    %v2951 = vsel %vm2072, %v2945, 0
    %2953 = vmatprep.subr.bf16.mxu0 0
    %2954 = vmatpush1.bf16.msra.mxu0 %v2948
    %2955 = vmatprep.subr.bf16.mxu0 0
    %2956 = vmatpush1.bf16.msra.mxu0 0
    %2957 = vmatprep.subr.bf16.mxu0 0
    %2958 = vmatpush1.bf16.msra.mxu0 0
    %2959 = vmatprep.subr.bf16.mxu0 0
    %2960 = vmatpush1.bf16.msra.mxu0 0
    %2961 = vmatprep.subr.bf16.mxu0 0
    %2962 = vmatpush1.bf16.msra.mxu0 0
    %2963 = vmatprep.subr.bf16.mxu0 0
    %2964 = vmatpush1.bf16.msra.mxu0 0
    %2965 = vmatprep.subr.bf16.mxu0 0
    %2966 = vmatpush1.bf16.msra.mxu0 0
    %2967 = vmatprep.subr.bf16.mxu0 0
    %2968 = vmatpush1.bf16.msra.mxu0 0
    %2969 = vmatprep.subr.bf16.mxu0 0
    %2970 = vmatpush1.bf16.msra.mxu0 0
    %2971 = vmatprep.subr.bf16.mxu0 0
    %2972 = vmatpush1.bf16.msra.mxu0 0
    %2973 = vmatprep.subr.bf16.mxu0 0
    %2974 = vmatpush1.bf16.msra.mxu0 0
    %2975 = vmatprep.subr.bf16.mxu0 0
    %2976 = vmatpush1.bf16.msra.mxu0 0
    %2977 = vmatprep.subr.bf16.mxu0 0
    %2978 = vmatpush1.bf16.msra.mxu0 0
    %2979 = vmatprep.subr.bf16.mxu0 0
    %2980 = vmatpush1.bf16.msra.mxu0 0
    %2981 = vmatprep.subr.bf16.mxu0 0
    %2982 = vmatpush1.bf16.msra.mxu0 0
    %2983 = vmatprep.subr.bf16.mxu0 0
    %2984 = vmatpush1.bf16.msra.mxu0 0
    %2985 = vmatprep.mubr.bf16.mxu0 0
    %2986 = vmatmul.mubr.bf16.gmra.mrb[0].mxu0 %v2951
    %v2987 = vpop.f32.mrb[0].mxu0
    %v2988 = vadd.f32 0.0, %v2987
    %v2989 = vpop.f32.mrb[0].mxu0
    %v2990 = vpop.f32.mrb[0].mxu0
    %v2991 = vpop.f32.mrb[0].mxu0
    %2992 = vdwg.mxu0
    %2993 = vrot.lane.b32.xlu0 %v1971, 32
    %v2994 = vpop.permute.xlu0 %2993
    %v2997 = vsel %vm2072, %v2946, 0
    %2999 = vmatprep.subr.bf16.mxu0 0
    %3000 = vmatpush1.bf16.msra.mxu0 %v2994
    %3001 = vmatprep.subr.bf16.mxu0 0
    %3002 = vmatpush1.bf16.msra.mxu0 0
    %3003 = vmatprep.subr.bf16.mxu0 0
    %3004 = vmatpush1.bf16.msra.mxu0 0
    %3005 = vmatprep.subr.bf16.mxu0 0
    %3006 = vmatpush1.bf16.msra.mxu0 0
    %3007 = vmatprep.subr.bf16.mxu0 0
    %3008 = vmatpush1.bf16.msra.mxu0 0
    %3009 = vmatprep.subr.bf16.mxu0 0
    %3010 = vmatpush1.bf16.msra.mxu0 0
    %3011 = vmatprep.subr.bf16.mxu0 0
    %3012 = vmatpush1.bf16.msra.mxu0 0
    %3013 = vmatprep.subr.bf16.mxu0 0
    %3014 = vmatpush1.bf16.msra.mxu0 0
    %3015 = vmatprep.subr.bf16.mxu0 0
    %3016 = vmatpush1.bf16.msra.mxu0 0
    %3017 = vmatprep.subr.bf16.mxu0 0
    %3018 = vmatpush1.bf16.msra.mxu0 0
    %3019 = vmatprep.subr.bf16.mxu0 0
    %3020 = vmatpush1.bf16.msra.mxu0 0
    %3021 = vmatprep.subr.bf16.mxu0 0
    %3022 = vmatpush1.bf16.msra.mxu0 0
    %3023 = vmatprep.subr.bf16.mxu0 0
    %3024 = vmatpush1.bf16.msra.mxu0 0
    %3025 = vmatprep.subr.bf16.mxu0 0
    %3026 = vmatpush1.bf16.msra.mxu0 0
    %3027 = vmatprep.subr.bf16.mxu0 0
    %3028 = vmatpush1.bf16.msra.mxu0 0
    %3029 = vmatprep.subr.bf16.mxu0 0
    %3030 = vmatpush1.bf16.msra.mxu0 0
    %3031 = vmatprep.mubr.bf16.mxu0 0
    %3032 = vmatmul.mubr.bf16.gmra.mrb[0].mxu0 %v2997
    %v3033 = vpop.f32.mrb[0].mxu0
    %v3034 = vadd.f32 0.0, %v3033
    %v3035 = vpop.f32.mrb[0].mxu0
    %v3036 = vpop.f32.mrb[0].mxu0
    %v3037 = vpop.f32.mrb[0].mxu0
    %3038 = vdwg.mxu0
    %v3040 = vsel %vm1973, %v1962, 0
    %v3043 = vsel %vm1973, %v1964, 0
    %3045 = vmatprep.subr.bf16.mxu0 0
    %3046 = vmatpush1.bf16.xpose.msra.mxu0 %v3043
    %3047 = vmatprep.subr.bf16.mxu0 0
    %3048 = vmatpush1.bf16.xpose.msra.mxu0 0
    %3049 = vmatprep.subr.bf16.mxu0 0
    %3050 = vmatpush1.bf16.xpose.msra.mxu0 0
    %3051 = vmatprep.subr.bf16.mxu0 0
    %3052 = vmatpush1.bf16.xpose.msra.mxu0 0
    %3053 = vmatprep.subr.bf16.mxu0 0
    %3054 = vmatpush1.bf16.xpose.msra.mxu0 0
    %3055 = vmatprep.subr.bf16.mxu0 0
    %3056 = vmatpush1.bf16.xpose.msra.mxu0 0
    %3057 = vmatprep.subr.bf16.mxu0 0
    %3058 = vmatpush1.bf16.xpose.msra.mxu0 0
    %3059 = vmatprep.subr.bf16.mxu0 0
    %3060 = vmatpush1.bf16.xpose.msra.mxu0 0
    %3061 = vmatprep.subr.bf16.mxu0 0
    %3062 = vmatpush1.bf16.xpose.msra.mxu0 0
    %3063 = vmatprep.subr.bf16.mxu0 0
    %3064 = vmatpush1.bf16.xpose.msra.mxu0 0
    %3065 = vmatprep.subr.bf16.mxu0 0
    %3066 = vmatpush1.bf16.xpose.msra.mxu0 0
    %3067 = vmatprep.subr.bf16.mxu0 0
    %3068 = vmatpush1.bf16.xpose.msra.mxu0 0
    %3069 = vmatprep.subr.bf16.mxu0 0
    %3070 = vmatpush1.bf16.xpose.msra.mxu0 0
    %3071 = vmatprep.subr.bf16.mxu0 0
    %3072 = vmatpush1.bf16.xpose.msra.mxu0 0
    %3073 = vmatprep.subr.bf16.mxu0 0
    %3074 = vmatpush1.bf16.xpose.msra.mxu0 0
    %3075 = vmatprep.subr.bf16.mxu0 0
    %3076 = vmatpush1.bf16.xpose.msra.mxu0 0
    %3077 = vmatprep.mubr.bf16.mxu0 0
    %3078 = vmatmul.mubr.bf16.gmra.mrb[0].mxu0 %v3040
    %v3079 = vpop.f32.mrb[0].mxu0
    %v3080 = vadd.f32 0.0, %v3079
    %v3081 = vpop.f32.mrb[0].mxu0
    %v3082 = vpop.f32.mrb[0].mxu0
    %v3083 = vadd.f32 0.0, %v3082
    %v3084 = vpop.f32.mrb[0].mxu0
    %3085 = vdwg.mxu0
    %v3087 = vsel %vm1973, %v1968, 0
    %v3090 = vsel %vm1973, %v1970, 0
    %3092 = vmatprep.subr.bf16.mxu0 0
    %3093 = vmatpush1.bf16.xpose.msra.mxu0 %v3090
    %3094 = vmatprep.subr.bf16.mxu0 0
    %3095 = vmatpush1.bf16.xpose.msra.mxu0 0
    %3096 = vmatprep.subr.bf16.mxu0 0
    %3097 = vmatpush1.bf16.xpose.msra.mxu0 0
    %3098 = vmatprep.subr.bf16.mxu0 0
    %3099 = vmatpush1.bf16.xpose.msra.mxu0 0
    %3100 = vmatprep.subr.bf16.mxu0 0
    %3101 = vmatpush1.bf16.xpose.msra.mxu0 0
    %3102 = vmatprep.subr.bf16.mxu0 0
    %3103 = vmatpush1.bf16.xpose.msra.mxu0 0
    %3104 = vmatprep.subr.bf16.mxu0 0
    %3105 = vmatpush1.bf16.xpose.msra.mxu0 0
    %3106 = vmatprep.subr.bf16.mxu0 0
    %3107 = vmatpush1.bf16.xpose.msra.mxu0 0
    %3108 = vmatprep.subr.bf16.mxu0 0
    %3109 = vmatpush1.bf16.xpose.msra.mxu0 0
    %3110 = vmatprep.subr.bf16.mxu0 0
    %3111 = vmatpush1.bf16.xpose.msra.mxu0 0
    %3112 = vmatprep.subr.bf16.mxu0 0
    %3113 = vmatpush1.bf16.xpose.msra.mxu0 0
    %3114 = vmatprep.subr.bf16.mxu0 0
    %3115 = vmatpush1.bf16.xpose.msra.mxu0 0
    %3116 = vmatprep.subr.bf16.mxu0 0
    %3117 = vmatpush1.bf16.xpose.msra.mxu0 0
    %3118 = vmatprep.subr.bf16.mxu0 0
    %3119 = vmatpush1.bf16.xpose.msra.mxu0 0
    %3120 = vmatprep.subr.bf16.mxu0 0
    %3121 = vmatpush1.bf16.xpose.msra.mxu0 0
    %3122 = vmatprep.subr.bf16.mxu0 0
    %3123 = vmatpush1.bf16.xpose.msra.mxu0 0
    %3124 = vmatprep.mubr.bf16.mxu0 0
    %3125 = vmatmul.mubr.bf16.gmra.mrb[0].mxu0 %v3087
    %v3126 = vpop.f32.mrb[0].mxu0
    %v3127 = vadd.f32 0.0, %v3126
    %v3128 = vpop.f32.mrb[0].mxu0
    %v3129 = vpop.f32.mrb[0].mxu0
    %v3130 = vadd.f32 0.0, %v3129
    %v3131 = vpop.f32.mrb[0].mxu0
    %3132 = vdwg.mxu0
    %v3133 = vmul.f32 %v3080, 0.17677669
    %v3134 = vmul.f32 %v3083, 0.17677669
    %v3135 = vmul.f32 %v3127, 0.17677669
    %v3136 = vmul.f32 %v3130, 0.17677669
    %v3137 = vsel %vm2072, %v3133, -inf
    %3138 = vmax.xlane.f32.xlu0 %v3137
    %v3139 = vpop.xlane.xlu0 %3138
    %v3140 = vsel %vm2072, %v3134, -inf
    %3141 = vmax.xlane.f32.xlu0 %v3140
    %v3142 = vpop.xlane.xlu0 %3141
    %v3143 = vsel %vm2072, %v3135, -inf
    %3144 = vmax.xlane.f32.xlu0 %v3143
    %v3145 = vpop.xlane.xlu0 %3144
    %v3146 = vsel %vm2072, %v3136, -inf
    %3147 = vmax.xlane.f32.xlu0 %v3146
    %v3148 = vpop.xlane.xlu0 %3147
    %v3149 = vsub.f32 %v3133, %v3139
    %v3150 = vsub.f32 %v3134, %v3142
    %v3151 = vsub.f32 %v3135, %v3145
    %v3152 = vsub.f32 %v3136, %v3148
    %v3153 = vmul.f32 %v3149, 1.442695
    %v3154 = vpow.pop %v3153
    %v3155 = vmul.f32 %v3150, 1.442695
    %v3156 = vpow.pop %v3155
    %v3157 = vmul.f32 %v3151, 1.442695
    %v3158 = vpow.pop %v3157
    %v3159 = vmul.f32 %v3152, 1.442695
    %v3160 = vpow.pop %v3159
    %v3161 = vsel %vm2072, %v3154, 0.0
    %3162 = vadd.xlane.f32.xlu0 %v3161
    %v3163 = vpop.xlane.xlu0 %3162
    %v3164 = vsel %vm2072, %v3156, 0.0
    %3165 = vadd.xlane.f32.xlu0 %v3164
    %v3166 = vpop.xlane.xlu0 %3165
    %v3167 = vsel %vm2072, %v3158, 0.0
    %3168 = vadd.xlane.f32.xlu0 %v3167
    %v3169 = vpop.xlane.xlu0 %3168
    %v3170 = vsel %vm2072, %v3160, 0.0
    %3171 = vadd.xlane.f32.xlu0 %v3170
    %v3172 = vpop.xlane.xlu0 %3171
    %v3173 = vrcp.pop %v3163
    %v3174 = vmul.f32 %v3154, %v3173
    %v3175 = vrcp.pop %v3166
    %v3176 = vmul.f32 %v3156, %v3175
    %v3177 = vrcp.pop %v3169
    %v3178 = vmul.f32 %v3158, %v3177
    %v3179 = vrcp.pop %v3172
    %v3180 = vmul.f32 %v3160, %v3179
    %v3181 = vadd.f32 %v2921, %v3174
    %v3182 = vadd.f32 %v2922, %v3176
    %v3183 = vadd.f32 %v2923, %v3178
    %v3184 = vadd.f32 %v2924, %v3180
    %v3185 = vsel %vm2072, %v3174, 0.0
    %v3186 = vsel %vm2072, %v3176, 0.0
    %v3187 = vadd.f32 %v3185, %v3186
    %v3188 = vrot.slane %v3187, 4
    %v3189 = vadd.f32 %v3187, %v3188
    %v3190 = vrot.slane %v3189, 2
    %v3191 = vadd.f32 %v3189, %v3190
    %v3192 = vrot.slane %v3191, 1
    %v3193 = vadd.f32 %v3191, %v3192
    %v3194 = vsel %vm2072, %v3178, 0.0
    %v3195 = vsel %vm2072, %v3180, 0.0
    %v3196 = vadd.f32 %v3194, %v3195
    %v3197 = vrot.slane %v3196, 4
    %v3198 = vadd.f32 %v3196, %v3197
    %v3199 = vrot.slane %v3198, 2
    %v3200 = vadd.f32 %v3198, %v3199
    %v3201 = vrot.slane %v3200, 1
    %v3202 = vadd.f32 %v3200, %v3201
    %v3203 = vmul.f32 %v3193, 0.0625
    %v3204 = vmul.f32 %v3202, 0.0625
    %v3205 = vpack.c.bf16 %v3203, %v3203
    %v3206 = vpack.c.bf16 %v3204, %v3204
    %v3208 = vsel %vm2072, %v3205, 0
    %3210 = vmatprep.subr.bf16.mxu0 0
    %3211 = vmatpush1.bf16.msra.mxu0 %v1966
    %3212 = vmatprep.subr.bf16.mxu0 0
    %3213 = vmatpush1.bf16.msra.mxu0 0
    %3214 = vmatprep.subr.bf16.mxu0 0
    %3215 = vmatpush1.bf16.msra.mxu0 0
    %3216 = vmatprep.subr.bf16.mxu0 0
    %3217 = vmatpush1.bf16.msra.mxu0 0
    %3218 = vmatprep.subr.bf16.mxu0 0
    %3219 = vmatpush1.bf16.msra.mxu0 0
    %3220 = vmatprep.subr.bf16.mxu0 0
    %3221 = vmatpush1.bf16.msra.mxu0 0
    %3222 = vmatprep.subr.bf16.mxu0 0
    %3223 = vmatpush1.bf16.msra.mxu0 0
    %3224 = vmatprep.subr.bf16.mxu0 0
    %3225 = vmatpush1.bf16.msra.mxu0 0
    %3226 = vmatprep.subr.bf16.mxu0 0
    %3227 = vmatpush1.bf16.msra.mxu0 0
    %3228 = vmatprep.subr.bf16.mxu0 0
    %3229 = vmatpush1.bf16.msra.mxu0 0
    %3230 = vmatprep.subr.bf16.mxu0 0
    %3231 = vmatpush1.bf16.msra.mxu0 0
    %3232 = vmatprep.subr.bf16.mxu0 0
    %3233 = vmatpush1.bf16.msra.mxu0 0
    %3234 = vmatprep.subr.bf16.mxu0 0
    %3235 = vmatpush1.bf16.msra.mxu0 0
    %3236 = vmatprep.subr.bf16.mxu0 0
    %3237 = vmatpush1.bf16.msra.mxu0 0
    %3238 = vmatprep.subr.bf16.mxu0 0
    %3239 = vmatpush1.bf16.msra.mxu0 0
    %3240 = vmatprep.subr.bf16.mxu0 0
    %3241 = vmatpush1.bf16.msra.mxu0 0
    %3242 = vmatprep.mubr.bf16.mxu0 0
    %3243 = vmatmul.mubr.bf16.gmra.mrb[0].mxu0 %v3208
    %v3244 = vpop.f32.mrb[0].mxu0
    %v3245 = vadd.f32 0.0, %v3244
    %v3246 = vpop.f32.mrb[0].mxu0
    %v3247 = vpop.f32.mrb[0].mxu0
    %v3248 = vpop.f32.mrb[0].mxu0
    %3249 = vdwg.mxu0
    %v3251 = vsel %vm2072, %v3206, 0
    %3253 = vmatprep.subr.bf16.mxu0 0
    %3254 = vmatpush1.bf16.msra.mxu0 %v1972
    %3255 = vmatprep.subr.bf16.mxu0 0
    %3256 = vmatpush1.bf16.msra.mxu0 0
    %3257 = vmatprep.subr.bf16.mxu0 0
    %3258 = vmatpush1.bf16.msra.mxu0 0
    %3259 = vmatprep.subr.bf16.mxu0 0
    %3260 = vmatpush1.bf16.msra.mxu0 0
    %3261 = vmatprep.subr.bf16.mxu0 0
    %3262 = vmatpush1.bf16.msra.mxu0 0
    %3263 = vmatprep.subr.bf16.mxu0 0
    %3264 = vmatpush1.bf16.msra.mxu0 0
    %3265 = vmatprep.subr.bf16.mxu0 0
    %3266 = vmatpush1.bf16.msra.mxu0 0
    %3267 = vmatprep.subr.bf16.mxu0 0
    %3268 = vmatpush1.bf16.msra.mxu0 0
    %3269 = vmatprep.subr.bf16.mxu0 0
    %3270 = vmatpush1.bf16.msra.mxu0 0
    %3271 = vmatprep.subr.bf16.mxu0 0
    %3272 = vmatpush1.bf16.msra.mxu0 0
    %3273 = vmatprep.subr.bf16.mxu0 0
    %3274 = vmatpush1.bf16.msra.mxu0 0
    %3275 = vmatprep.subr.bf16.mxu0 0
    %3276 = vmatpush1.bf16.msra.mxu0 0
    %3277 = vmatprep.subr.bf16.mxu0 0
    %3278 = vmatpush1.bf16.msra.mxu0 0
    %3279 = vmatprep.subr.bf16.mxu0 0
    %3280 = vmatpush1.bf16.msra.mxu0 0
    %3281 = vmatprep.subr.bf16.mxu0 0
    %3282 = vmatpush1.bf16.msra.mxu0 0
    %3283 = vmatprep.subr.bf16.mxu0 0
    %3284 = vmatpush1.bf16.msra.mxu0 0
    %3285 = vmatprep.mubr.bf16.mxu0 0
    %3286 = vmatmul.mubr.bf16.gmra.mrb[0].mxu0 %v3251
    %v3287 = vpop.f32.mrb[0].mxu0
    %v3288 = vadd.f32 0.0, %v3287
    %v3289 = vpop.f32.mrb[0].mxu0
    %v3290 = vpop.f32.mrb[0].mxu0
    %v3291 = vpop.f32.mrb[0].mxu0
    %3292 = vdwg.mxu0
    %3294 = vrot.lane.b32.xlu0 %v1962, 96
    %v3295 = vpop.permute.xlu0 %3294
    %3297 = vrot.lane.b32.xlu0 %v1964, 96
    %v3298 = vpop.permute.xlu0 %3297
    %v3300 = vsel %vm1973, %v3295, 0
    %v3303 = vsel %vm1973, %v3298, 0
    %3305 = vmatprep.subr.bf16.mxu0 0
    %3306 = vmatpush1.bf16.xpose.msra.mxu0 %v3303
    %3307 = vmatprep.subr.bf16.mxu0 0
    %3308 = vmatpush1.bf16.xpose.msra.mxu0 0
    %3309 = vmatprep.subr.bf16.mxu0 0
    %3310 = vmatpush1.bf16.xpose.msra.mxu0 0
    %3311 = vmatprep.subr.bf16.mxu0 0
    %3312 = vmatpush1.bf16.xpose.msra.mxu0 0
    %3313 = vmatprep.subr.bf16.mxu0 0
    %3314 = vmatpush1.bf16.xpose.msra.mxu0 0
    %3315 = vmatprep.subr.bf16.mxu0 0
    %3316 = vmatpush1.bf16.xpose.msra.mxu0 0
    %3317 = vmatprep.subr.bf16.mxu0 0
    %3318 = vmatpush1.bf16.xpose.msra.mxu0 0
    %3319 = vmatprep.subr.bf16.mxu0 0
    %3320 = vmatpush1.bf16.xpose.msra.mxu0 0
    %3321 = vmatprep.subr.bf16.mxu0 0
    %3322 = vmatpush1.bf16.xpose.msra.mxu0 0
    %3323 = vmatprep.subr.bf16.mxu0 0
    %3324 = vmatpush1.bf16.xpose.msra.mxu0 0
    %3325 = vmatprep.subr.bf16.mxu0 0
    %3326 = vmatpush1.bf16.xpose.msra.mxu0 0
    %3327 = vmatprep.subr.bf16.mxu0 0
    %3328 = vmatpush1.bf16.xpose.msra.mxu0 0
    %3329 = vmatprep.subr.bf16.mxu0 0
    %3330 = vmatpush1.bf16.xpose.msra.mxu0 0
    %3331 = vmatprep.subr.bf16.mxu0 0
    %3332 = vmatpush1.bf16.xpose.msra.mxu0 0
    %3333 = vmatprep.subr.bf16.mxu0 0
    %3334 = vmatpush1.bf16.xpose.msra.mxu0 0
    %3335 = vmatprep.subr.bf16.mxu0 0
    %3336 = vmatpush1.bf16.xpose.msra.mxu0 0
    %3337 = vmatprep.mubr.bf16.mxu0 0
    %3338 = vmatmul.mubr.bf16.gmra.mrb[0].mxu0 %v3300
    %v3339 = vpop.f32.mrb[0].mxu0
    %v3340 = vadd.f32 0.0, %v3339
    %v3341 = vpop.f32.mrb[0].mxu0
    %v3342 = vpop.f32.mrb[0].mxu0
    %v3343 = vadd.f32 0.0, %v3342
    %v3344 = vpop.f32.mrb[0].mxu0
    %3345 = vdwg.mxu0
    %3347 = vrot.lane.b32.xlu0 %v1968, 96
    %v3348 = vpop.permute.xlu0 %3347
    %3350 = vrot.lane.b32.xlu0 %v1970, 96
    %v3351 = vpop.permute.xlu0 %3350
    %v3353 = vsel %vm1973, %v3348, 0
    %v3356 = vsel %vm1973, %v3351, 0
    %3358 = vmatprep.subr.bf16.mxu0 0
    %3359 = vmatpush1.bf16.xpose.msra.mxu0 %v3356
    %3360 = vmatprep.subr.bf16.mxu0 0
    %3361 = vmatpush1.bf16.xpose.msra.mxu0 0
    %3362 = vmatprep.subr.bf16.mxu0 0
    %3363 = vmatpush1.bf16.xpose.msra.mxu0 0
    %3364 = vmatprep.subr.bf16.mxu0 0
    %3365 = vmatpush1.bf16.xpose.msra.mxu0 0
    %3366 = vmatprep.subr.bf16.mxu0 0
    %3367 = vmatpush1.bf16.xpose.msra.mxu0 0
    %3368 = vmatprep.subr.bf16.mxu0 0
    %3369 = vmatpush1.bf16.xpose.msra.mxu0 0
    %3370 = vmatprep.subr.bf16.mxu0 0
    %3371 = vmatpush1.bf16.xpose.msra.mxu0 0
    %3372 = vmatprep.subr.bf16.mxu0 0
    %3373 = vmatpush1.bf16.xpose.msra.mxu0 0
    %3374 = vmatprep.subr.bf16.mxu0 0
    %3375 = vmatpush1.bf16.xpose.msra.mxu0 0
    %3376 = vmatprep.subr.bf16.mxu0 0
    %3377 = vmatpush1.bf16.xpose.msra.mxu0 0
    %3378 = vmatprep.subr.bf16.mxu0 0
    %3379 = vmatpush1.bf16.xpose.msra.mxu0 0
    %3380 = vmatprep.subr.bf16.mxu0 0
    %3381 = vmatpush1.bf16.xpose.msra.mxu0 0
    %3382 = vmatprep.subr.bf16.mxu0 0
    %3383 = vmatpush1.bf16.xpose.msra.mxu0 0
    %3384 = vmatprep.subr.bf16.mxu0 0
    %3385 = vmatpush1.bf16.xpose.msra.mxu0 0
    %3386 = vmatprep.subr.bf16.mxu0 0
    %3387 = vmatpush1.bf16.xpose.msra.mxu0 0
    %3388 = vmatprep.subr.bf16.mxu0 0
    %3389 = vmatpush1.bf16.xpose.msra.mxu0 0
    %3390 = vmatprep.mubr.bf16.mxu0 0
    %3391 = vmatmul.mubr.bf16.gmra.mrb[0].mxu0 %v3353
    %v3392 = vpop.f32.mrb[0].mxu0
    %v3393 = vadd.f32 0.0, %v3392
    %v3394 = vpop.f32.mrb[0].mxu0
    %v3395 = vpop.f32.mrb[0].mxu0
    %v3396 = vadd.f32 0.0, %v3395
    %v3397 = vpop.f32.mrb[0].mxu0
    %3398 = vdwg.mxu0
    %v3399 = vmul.f32 %v3340, 0.17677669
    %v3400 = vmul.f32 %v3343, 0.17677669
    %v3401 = vmul.f32 %v3393, 0.17677669
    %v3402 = vmul.f32 %v3396, 0.17677669
    %v3403 = vsel %vm2072, %v3399, -inf
    %3404 = vmax.xlane.f32.xlu0 %v3403
    %v3405 = vpop.xlane.xlu0 %3404
    %v3406 = vsel %vm2072, %v3400, -inf
    %3407 = vmax.xlane.f32.xlu0 %v3406
    %v3408 = vpop.xlane.xlu0 %3407
    %v3409 = vsel %vm2072, %v3401, -inf
    %3410 = vmax.xlane.f32.xlu0 %v3409
    %v3411 = vpop.xlane.xlu0 %3410
    %v3412 = vsel %vm2072, %v3402, -inf
    %3413 = vmax.xlane.f32.xlu0 %v3412
    %v3414 = vpop.xlane.xlu0 %3413
    %v3415 = vsub.f32 %v3399, %v3405
    %v3416 = vsub.f32 %v3400, %v3408
    %v3417 = vsub.f32 %v3401, %v3411
    %v3418 = vsub.f32 %v3402, %v3414
    %v3419 = vmul.f32 %v3415, 1.442695
    %v3420 = vpow.pop %v3419
    %v3421 = vmul.f32 %v3416, 1.442695
    %v3422 = vpow.pop %v3421
    %v3423 = vmul.f32 %v3417, 1.442695
    %v3424 = vpow.pop %v3423
    %v3425 = vmul.f32 %v3418, 1.442695
    %v3426 = vpow.pop %v3425
    %v3427 = vsel %vm2072, %v3420, 0.0
    %3428 = vadd.xlane.f32.xlu0 %v3427
    %v3429 = vpop.xlane.xlu0 %3428
    %v3430 = vsel %vm2072, %v3422, 0.0
    %3431 = vadd.xlane.f32.xlu0 %v3430
    %v3432 = vpop.xlane.xlu0 %3431
    %v3433 = vsel %vm2072, %v3424, 0.0
    %3434 = vadd.xlane.f32.xlu0 %v3433
    %v3435 = vpop.xlane.xlu0 %3434
    %v3436 = vsel %vm2072, %v3426, 0.0
    %3437 = vadd.xlane.f32.xlu0 %v3436
    %v3438 = vpop.xlane.xlu0 %3437
    %v3439 = vrcp.pop %v3429
    %v3440 = vmul.f32 %v3420, %v3439
    %v3441 = vrcp.pop %v3432
    %v3442 = vmul.f32 %v3422, %v3441
    %v3443 = vrcp.pop %v3435
    %v3444 = vmul.f32 %v3424, %v3443
    %v3445 = vrcp.pop %v3438
    %v3446 = vmul.f32 %v3426, %v3445
    %v3447 = vadd.f32 %v3181, %v3440
    %v3448 = vadd.f32 %v3182, %v3442
    %v3449 = vadd.f32 %v3183, %v3444
    %v3450 = vadd.f32 %v3184, %v3446
    %v3451 = vsel %vm2072, %v3440, 0.0
    %v3452 = vsel %vm2072, %v3442, 0.0
    %v3453 = vadd.f32 %v3451, %v3452
    %v3454 = vrot.slane %v3453, 4
    %v3455 = vadd.f32 %v3453, %v3454
    %v3456 = vrot.slane %v3455, 2
    %v3457 = vadd.f32 %v3455, %v3456
    %v3458 = vrot.slane %v3457, 1
    %v3459 = vadd.f32 %v3457, %v3458
    %v3460 = vsel %vm2072, %v3444, 0.0
    %v3461 = vsel %vm2072, %v3446, 0.0
    %v3462 = vadd.f32 %v3460, %v3461
    %v3463 = vrot.slane %v3462, 4
    %v3464 = vadd.f32 %v3462, %v3463
    %v3465 = vrot.slane %v3464, 2
    %v3466 = vadd.f32 %v3464, %v3465
    %v3467 = vrot.slane %v3466, 1
    %v3468 = vadd.f32 %v3466, %v3467
    %v3469 = vmul.f32 %v3459, 0.0625
    %v3470 = vmul.f32 %v3468, 0.0625
    %v3471 = vpack.c.bf16 %v3469, %v3469
    %v3472 = vpack.c.bf16 %v3470, %v3470
    %3474 = vrot.lane.b32.xlu0 %v1966, 96
    %v3475 = vpop.permute.xlu0 %3474
    %v3478 = vsel %vm2072, %v3471, 0
    %3480 = vmatprep.subr.bf16.mxu0 0
    %3481 = vmatpush1.bf16.msra.mxu0 %v3475
    %3482 = vmatprep.subr.bf16.mxu0 0
    %3483 = vmatpush1.bf16.msra.mxu0 0
    %3484 = vmatprep.subr.bf16.mxu0 0
    %3485 = vmatpush1.bf16.msra.mxu0 0
    %3486 = vmatprep.subr.bf16.mxu0 0
    %3487 = vmatpush1.bf16.msra.mxu0 0
    %3488 = vmatprep.subr.bf16.mxu0 0
    %3489 = vmatpush1.bf16.msra.mxu0 0
    %3490 = vmatprep.subr.bf16.mxu0 0
    %3491 = vmatpush1.bf16.msra.mxu0 0
    %3492 = vmatprep.subr.bf16.mxu0 0
    %3493 = vmatpush1.bf16.msra.mxu0 0
    %3494 = vmatprep.subr.bf16.mxu0 0
    %3495 = vmatpush1.bf16.msra.mxu0 0
    %3496 = vmatprep.subr.bf16.mxu0 0
    %3497 = vmatpush1.bf16.msra.mxu0 0
    %3498 = vmatprep.subr.bf16.mxu0 0
    %3499 = vmatpush1.bf16.msra.mxu0 0
    %3500 = vmatprep.subr.bf16.mxu0 0
    %3501 = vmatpush1.bf16.msra.mxu0 0
    %3502 = vmatprep.subr.bf16.mxu0 0
    %3503 = vmatpush1.bf16.msra.mxu0 0
    %3504 = vmatprep.subr.bf16.mxu0 0
    %3505 = vmatpush1.bf16.msra.mxu0 0
    %3506 = vmatprep.subr.bf16.mxu0 0
    %3507 = vmatpush1.bf16.msra.mxu0 0
    %3508 = vmatprep.subr.bf16.mxu0 0
    %3509 = vmatpush1.bf16.msra.mxu0 0
    %3510 = vmatprep.subr.bf16.mxu0 0
    %3511 = vmatpush1.bf16.msra.mxu0 0
    %3512 = vmatprep.mubr.bf16.mxu0 0
    %3513 = vmatmul.mubr.bf16.gmra.mrb[0].mxu0 %v3478
    %v3514 = vpop.f32.mrb[0].mxu0
    %v3515 = vadd.f32 0.0, %v3514
    %v3516 = vpop.f32.mrb[0].mxu0
    %v3517 = vpop.f32.mrb[0].mxu0
    %v3518 = vpop.f32.mrb[0].mxu0
    %3519 = vdwg.mxu0
    %3521 = vrot.lane.b32.xlu0 %v1972, 96
    %v3522 = vpop.permute.xlu0 %3521
    %v3525 = vsel %vm2072, %v3472, 0
    %3527 = vmatprep.subr.bf16.mxu0 0
    %3528 = vmatpush1.bf16.msra.mxu0 %v3522
    %3529 = vmatprep.subr.bf16.mxu0 0
    %3530 = vmatpush1.bf16.msra.mxu0 0
    %3531 = vmatprep.subr.bf16.mxu0 0
    %3532 = vmatpush1.bf16.msra.mxu0 0
    %3533 = vmatprep.subr.bf16.mxu0 0
    %3534 = vmatpush1.bf16.msra.mxu0 0
    %3535 = vmatprep.subr.bf16.mxu0 0
    %3536 = vmatpush1.bf16.msra.mxu0 0
    %3537 = vmatprep.subr.bf16.mxu0 0
    %3538 = vmatpush1.bf16.msra.mxu0 0
    %3539 = vmatprep.subr.bf16.mxu0 0
    %3540 = vmatpush1.bf16.msra.mxu0 0
    %3541 = vmatprep.subr.bf16.mxu0 0
    %3542 = vmatpush1.bf16.msra.mxu0 0
    %3543 = vmatprep.subr.bf16.mxu0 0
    %3544 = vmatpush1.bf16.msra.mxu0 0
    %3545 = vmatprep.subr.bf16.mxu0 0
    %3546 = vmatpush1.bf16.msra.mxu0 0
    %3547 = vmatprep.subr.bf16.mxu0 0
    %3548 = vmatpush1.bf16.msra.mxu0 0
    %3549 = vmatprep.subr.bf16.mxu0 0
    %3550 = vmatpush1.bf16.msra.mxu0 0
    %3551 = vmatprep.subr.bf16.mxu0 0
    %3552 = vmatpush1.bf16.msra.mxu0 0
    %3553 = vmatprep.subr.bf16.mxu0 0
    %3554 = vmatpush1.bf16.msra.mxu0 0
    %3555 = vmatprep.subr.bf16.mxu0 0
    %3556 = vmatpush1.bf16.msra.mxu0 0
    %3557 = vmatprep.subr.bf16.mxu0 0
    %3558 = vmatpush1.bf16.msra.mxu0 0
    %3559 = vmatprep.mubr.bf16.mxu0 0
    %3560 = vmatmul.mubr.bf16.gmra.mrb[0].mxu0 %v3525
    %v3561 = vpop.f32.mrb[0].mxu0
    %v3562 = vadd.f32 0.0, %v3561
    %v3563 = vpop.f32.mrb[0].mxu0
    %v3564 = vpop.f32.mrb[0].mxu0
    %v3565 = vpop.f32.mrb[0].mxu0
    %3566 = vdwg.mxu0
    %3567 = vrot.lane.b32.xlu0 %v1962, 64
    %v3568 = vpop.permute.xlu0 %3567
    %3569 = vrot.lane.b32.xlu0 %v1964, 64
    %v3570 = vpop.permute.xlu0 %3569
    %v3572 = vsel %vm1973, %v3568, 0
    %v3575 = vsel %vm1973, %v3570, 0
    %3577 = vmatprep.subr.bf16.mxu0 0
    %3578 = vmatpush1.bf16.xpose.msra.mxu0 %v3575
    %3579 = vmatprep.subr.bf16.mxu0 0
    %3580 = vmatpush1.bf16.xpose.msra.mxu0 0
    %3581 = vmatprep.subr.bf16.mxu0 0
    %3582 = vmatpush1.bf16.xpose.msra.mxu0 0
    %3583 = vmatprep.subr.bf16.mxu0 0
    %3584 = vmatpush1.bf16.xpose.msra.mxu0 0
    %3585 = vmatprep.subr.bf16.mxu0 0
    %3586 = vmatpush1.bf16.xpose.msra.mxu0 0
    %3587 = vmatprep.subr.bf16.mxu0 0
    %3588 = vmatpush1.bf16.xpose.msra.mxu0 0
    %3589 = vmatprep.subr.bf16.mxu0 0
    %3590 = vmatpush1.bf16.xpose.msra.mxu0 0
    %3591 = vmatprep.subr.bf16.mxu0 0
    %3592 = vmatpush1.bf16.xpose.msra.mxu0 0
    %3593 = vmatprep.subr.bf16.mxu0 0
    %3594 = vmatpush1.bf16.xpose.msra.mxu0 0
    %3595 = vmatprep.subr.bf16.mxu0 0
    %3596 = vmatpush1.bf16.xpose.msra.mxu0 0
    %3597 = vmatprep.subr.bf16.mxu0 0
    %3598 = vmatpush1.bf16.xpose.msra.mxu0 0
    %3599 = vmatprep.subr.bf16.mxu0 0
    %3600 = vmatpush1.bf16.xpose.msra.mxu0 0
    %3601 = vmatprep.subr.bf16.mxu0 0
    %3602 = vmatpush1.bf16.xpose.msra.mxu0 0
    %3603 = vmatprep.subr.bf16.mxu0 0
    %3604 = vmatpush1.bf16.xpose.msra.mxu0 0
    %3605 = vmatprep.subr.bf16.mxu0 0
    %3606 = vmatpush1.bf16.xpose.msra.mxu0 0
    %3607 = vmatprep.subr.bf16.mxu0 0
    %3608 = vmatpush1.bf16.xpose.msra.mxu0 0
    %3609 = vmatprep.mubr.bf16.mxu0 0
    %3610 = vmatmul.mubr.bf16.gmra.mrb[0].mxu0 %v3572
    %v3611 = vpop.f32.mrb[0].mxu0
    %v3612 = vadd.f32 0.0, %v3611
    %v3613 = vpop.f32.mrb[0].mxu0
    %v3614 = vpop.f32.mrb[0].mxu0
    %v3615 = vadd.f32 0.0, %v3614
    %v3616 = vpop.f32.mrb[0].mxu0
    %3617 = vdwg.mxu0
    %3618 = vrot.lane.b32.xlu0 %v1968, 64
    %v3619 = vpop.permute.xlu0 %3618
    %3620 = vrot.lane.b32.xlu0 %v1970, 64
    %v3621 = vpop.permute.xlu0 %3620
    %v3623 = vsel %vm1973, %v3619, 0
    %v3626 = vsel %vm1973, %v3621, 0
    %3628 = vmatprep.subr.bf16.mxu0 0
    %3629 = vmatpush1.bf16.xpose.msra.mxu0 %v3626
    %3630 = vmatprep.subr.bf16.mxu0 0
    %3631 = vmatpush1.bf16.xpose.msra.mxu0 0
    %3632 = vmatprep.subr.bf16.mxu0 0
    %3633 = vmatpush1.bf16.xpose.msra.mxu0 0
    %3634 = vmatprep.subr.bf16.mxu0 0
    %3635 = vmatpush1.bf16.xpose.msra.mxu0 0
    %3636 = vmatprep.subr.bf16.mxu0 0
    %3637 = vmatpush1.bf16.xpose.msra.mxu0 0
    %3638 = vmatprep.subr.bf16.mxu0 0
    %3639 = vmatpush1.bf16.xpose.msra.mxu0 0
    %3640 = vmatprep.subr.bf16.mxu0 0
    %3641 = vmatpush1.bf16.xpose.msra.mxu0 0
    %3642 = vmatprep.subr.bf16.mxu0 0
    %3643 = vmatpush1.bf16.xpose.msra.mxu0 0
    %3644 = vmatprep.subr.bf16.mxu0 0
    %3645 = vmatpush1.bf16.xpose.msra.mxu0 0
    %3646 = vmatprep.subr.bf16.mxu0 0
    %3647 = vmatpush1.bf16.xpose.msra.mxu0 0
    %3648 = vmatprep.subr.bf16.mxu0 0
    %3649 = vmatpush1.bf16.xpose.msra.mxu0 0
    %3650 = vmatprep.subr.bf16.mxu0 0
    %3651 = vmatpush1.bf16.xpose.msra.mxu0 0
    %3652 = vmatprep.subr.bf16.mxu0 0
    %3653 = vmatpush1.bf16.xpose.msra.mxu0 0
    %3654 = vmatprep.subr.bf16.mxu0 0
    %3655 = vmatpush1.bf16.xpose.msra.mxu0 0
    %3656 = vmatprep.subr.bf16.mxu0 0
    %3657 = vmatpush1.bf16.xpose.msra.mxu0 0
    %3658 = vmatprep.subr.bf16.mxu0 0
    %3659 = vmatpush1.bf16.xpose.msra.mxu0 0
    %3660 = vmatprep.mubr.bf16.mxu0 0
    %3661 = vmatmul.mubr.bf16.gmra.mrb[0].mxu0 %v3623
    %v3662 = vpop.f32.mrb[0].mxu0
    %v3663 = vadd.f32 0.0, %v3662
    %v3664 = vpop.f32.mrb[0].mxu0
    %v3665 = vpop.f32.mrb[0].mxu0
    %v3666 = vadd.f32 0.0, %v3665
    %v3667 = vpop.f32.mrb[0].mxu0
    %3668 = vdwg.mxu0
    %v3669 = vmul.f32 %v3612, 0.17677669
    %v3670 = vmul.f32 %v3615, 0.17677669
    %v3671 = vmul.f32 %v3663, 0.17677669
    %v3672 = vmul.f32 %v3666, 0.17677669
    %v3673 = vsel %vm2072, %v3669, -inf
    %3674 = vmax.xlane.f32.xlu0 %v3673
    %v3675 = vpop.xlane.xlu0 %3674
    %v3676 = vsel %vm2072, %v3670, -inf
    %3677 = vmax.xlane.f32.xlu0 %v3676
    %v3678 = vpop.xlane.xlu0 %3677
    %v3679 = vsel %vm2072, %v3671, -inf
    %3680 = vmax.xlane.f32.xlu0 %v3679
    %v3681 = vpop.xlane.xlu0 %3680
    %v3682 = vsel %vm2072, %v3672, -inf
    %3683 = vmax.xlane.f32.xlu0 %v3682
    %v3684 = vpop.xlane.xlu0 %3683
    %v3685 = vsub.f32 %v3669, %v3675
    %v3686 = vsub.f32 %v3670, %v3678
    %v3687 = vsub.f32 %v3671, %v3681
    %v3688 = vsub.f32 %v3672, %v3684
    %v3689 = vmul.f32 %v3685, 1.442695
    %v3690 = vpow.pop %v3689
    %v3691 = vmul.f32 %v3686, 1.442695
    %v3692 = vpow.pop %v3691
    %v3693 = vmul.f32 %v3687, 1.442695
    %v3694 = vpow.pop %v3693
    %v3695 = vmul.f32 %v3688, 1.442695
    %v3696 = vpow.pop %v3695
    %v3697 = vsel %vm2072, %v3690, 0.0
    %3698 = vadd.xlane.f32.xlu0 %v3697
    %v3699 = vpop.xlane.xlu0 %3698
    %v3700 = vsel %vm2072, %v3692, 0.0
    %3701 = vadd.xlane.f32.xlu0 %v3700
    %v3702 = vpop.xlane.xlu0 %3701
    %v3703 = vsel %vm2072, %v3694, 0.0
    %3704 = vadd.xlane.f32.xlu0 %v3703
    %v3705 = vpop.xlane.xlu0 %3704
    %v3706 = vsel %vm2072, %v3696, 0.0
    %3707 = vadd.xlane.f32.xlu0 %v3706
    %v3708 = vpop.xlane.xlu0 %3707
    %v3709 = vrcp.pop %v3699
    %v3710 = vmul.f32 %v3690, %v3709
    %v3711 = vrcp.pop %v3702
    %v3712 = vmul.f32 %v3692, %v3711
    %v3713 = vrcp.pop %v3705
    %v3714 = vmul.f32 %v3694, %v3713
    %v3715 = vrcp.pop %v3708
    %v3716 = vmul.f32 %v3696, %v3715
    %v3717 = vadd.f32 %v3447, %v3710
    %v3718 = vadd.f32 %v3448, %v3712
    %v3719 = vadd.f32 %v3449, %v3714
    %v3720 = vadd.f32 %v3450, %v3716
    %v3721 = vsel %vm2072, %v3710, 0.0
    %v3722 = vsel %vm2072, %v3712, 0.0
    %v3723 = vadd.f32 %v3721, %v3722
    %v3724 = vrot.slane %v3723, 4
    %v3725 = vadd.f32 %v3723, %v3724
    %v3726 = vrot.slane %v3725, 2
    %v3727 = vadd.f32 %v3725, %v3726
    %v3728 = vrot.slane %v3727, 1
    %v3729 = vadd.f32 %v3727, %v3728
    %v3730 = vsel %vm2072, %v3714, 0.0
    %v3731 = vsel %vm2072, %v3716, 0.0
    %v3732 = vadd.f32 %v3730, %v3731
    %v3733 = vrot.slane %v3732, 4
    %v3734 = vadd.f32 %v3732, %v3733
    %v3735 = vrot.slane %v3734, 2
    %v3736 = vadd.f32 %v3734, %v3735
    %v3737 = vrot.slane %v3736, 1
    %v3738 = vadd.f32 %v3736, %v3737
    %v3739 = vmul.f32 %v3729, 0.0625
    %v3740 = vmul.f32 %v3738, 0.0625
    %v3741 = vpack.c.bf16 %v3739, %v3739
    %v3742 = vpack.c.bf16 %v3740, %v3740
    %3743 = vrot.lane.b32.xlu0 %v1966, 64
    %v3744 = vpop.permute.xlu0 %3743
    %v3747 = vsel %vm2072, %v3741, 0
    %3749 = vmatprep.subr.bf16.mxu0 0
    %3750 = vmatpush1.bf16.msra.mxu0 %v3744
    %3751 = vmatprep.subr.bf16.mxu0 0
    %3752 = vmatpush1.bf16.msra.mxu0 0
    %3753 = vmatprep.subr.bf16.mxu0 0
    %3754 = vmatpush1.bf16.msra.mxu0 0
    %3755 = vmatprep.subr.bf16.mxu0 0
    %3756 = vmatpush1.bf16.msra.mxu0 0
    %3757 = vmatprep.subr.bf16.mxu0 0
    %3758 = vmatpush1.bf16.msra.mxu0 0
    %3759 = vmatprep.subr.bf16.mxu0 0
    %3760 = vmatpush1.bf16.msra.mxu0 0
    %3761 = vmatprep.subr.bf16.mxu0 0
    %3762 = vmatpush1.bf16.msra.mxu0 0
    %3763 = vmatprep.subr.bf16.mxu0 0
    %3764 = vmatpush1.bf16.msra.mxu0 0
    %3765 = vmatprep.subr.bf16.mxu0 0
    %3766 = vmatpush1.bf16.msra.mxu0 0
    %3767 = vmatprep.subr.bf16.mxu0 0
    %3768 = vmatpush1.bf16.msra.mxu0 0
    %3769 = vmatprep.subr.bf16.mxu0 0
    %3770 = vmatpush1.bf16.msra.mxu0 0
    %3771 = vmatprep.subr.bf16.mxu0 0
    %3772 = vmatpush1.bf16.msra.mxu0 0
    %3773 = vmatprep.subr.bf16.mxu0 0
    %3774 = vmatpush1.bf16.msra.mxu0 0
    %3775 = vmatprep.subr.bf16.mxu0 0
    %3776 = vmatpush1.bf16.msra.mxu0 0
    %3777 = vmatprep.subr.bf16.mxu0 0
    %3778 = vmatpush1.bf16.msra.mxu0 0
    %3779 = vmatprep.subr.bf16.mxu0 0
    %3780 = vmatpush1.bf16.msra.mxu0 0
    %3781 = vmatprep.mubr.bf16.mxu0 0
    %3782 = vmatmul.mubr.bf16.gmra.mrb[0].mxu0 %v3747
    %v3783 = vpop.f32.mrb[0].mxu0
    %v3784 = vadd.f32 0.0, %v3783
    %v3785 = vpop.f32.mrb[0].mxu0
    %v3786 = vpop.f32.mrb[0].mxu0
    %v3787 = vpop.f32.mrb[0].mxu0
    %3788 = vdwg.mxu0
    %3789 = vrot.lane.b32.xlu0 %v1972, 64
    %v3790 = vpop.permute.xlu0 %3789
    %v3793 = vsel %vm2072, %v3742, 0
    %3795 = vmatprep.subr.bf16.mxu0 0
    %3796 = vmatpush1.bf16.msra.mxu0 %v3790
    %3797 = vmatprep.subr.bf16.mxu0 0
    %3798 = vmatpush1.bf16.msra.mxu0 0
    %3799 = vmatprep.subr.bf16.mxu0 0
    %3800 = vmatpush1.bf16.msra.mxu0 0
    %3801 = vmatprep.subr.bf16.mxu0 0
    %3802 = vmatpush1.bf16.msra.mxu0 0
    %3803 = vmatprep.subr.bf16.mxu0 0
    %3804 = vmatpush1.bf16.msra.mxu0 0
    %3805 = vmatprep.subr.bf16.mxu0 0
    %3806 = vmatpush1.bf16.msra.mxu0 0
    %3807 = vmatprep.subr.bf16.mxu0 0
    %3808 = vmatpush1.bf16.msra.mxu0 0
    %3809 = vmatprep.subr.bf16.mxu0 0
    %3810 = vmatpush1.bf16.msra.mxu0 0
    %3811 = vmatprep.subr.bf16.mxu0 0
    %3812 = vmatpush1.bf16.msra.mxu0 0
    %3813 = vmatprep.subr.bf16.mxu0 0
    %3814 = vmatpush1.bf16.msra.mxu0 0
    %3815 = vmatprep.subr.bf16.mxu0 0
    %3816 = vmatpush1.bf16.msra.mxu0 0
    %3817 = vmatprep.subr.bf16.mxu0 0
    %3818 = vmatpush1.bf16.msra.mxu0 0
    %3819 = vmatprep.subr.bf16.mxu0 0
    %3820 = vmatpush1.bf16.msra.mxu0 0
    %3821 = vmatprep.subr.bf16.mxu0 0
    %3822 = vmatpush1.bf16.msra.mxu0 0
    %3823 = vmatprep.subr.bf16.mxu0 0
    %3824 = vmatpush1.bf16.msra.mxu0 0
    %3825 = vmatprep.subr.bf16.mxu0 0
    %3826 = vmatpush1.bf16.msra.mxu0 0
    %3827 = vmatprep.mubr.bf16.mxu0 0
    %3828 = vmatmul.mubr.bf16.gmra.mrb[0].mxu0 %v3793
    %v3829 = vpop.f32.mrb[0].mxu0
    %v3830 = vadd.f32 0.0, %v3829
    %v3831 = vpop.f32.mrb[0].mxu0
    %v3832 = vpop.f32.mrb[0].mxu0
    %v3833 = vpop.f32.mrb[0].mxu0
    %3834 = vdwg.mxu0
    %3835 = vrot.lane.b32.xlu0 %v1962, 32
    %v3836 = vpop.permute.xlu0 %3835
    %3837 = vrot.lane.b32.xlu0 %v1964, 32
    %v3838 = vpop.permute.xlu0 %3837
    %v3840 = vsel %vm1973, %v3836, 0
    %v3843 = vsel %vm1973, %v3838, 0
    %3845 = vmatprep.subr.bf16.mxu0 0
    %3846 = vmatpush1.bf16.xpose.msra.mxu0 %v3843
    %3847 = vmatprep.subr.bf16.mxu0 0
    %3848 = vmatpush1.bf16.xpose.msra.mxu0 0
    %3849 = vmatprep.subr.bf16.mxu0 0
    %3850 = vmatpush1.bf16.xpose.msra.mxu0 0
    %3851 = vmatprep.subr.bf16.mxu0 0
    %3852 = vmatpush1.bf16.xpose.msra.mxu0 0
    %3853 = vmatprep.subr.bf16.mxu0 0
    %3854 = vmatpush1.bf16.xpose.msra.mxu0 0
    %3855 = vmatprep.subr.bf16.mxu0 0
    %3856 = vmatpush1.bf16.xpose.msra.mxu0 0
    %3857 = vmatprep.subr.bf16.mxu0 0
    %3858 = vmatpush1.bf16.xpose.msra.mxu0 0
    %3859 = vmatprep.subr.bf16.mxu0 0
    %3860 = vmatpush1.bf16.xpose.msra.mxu0 0
    %3861 = vmatprep.subr.bf16.mxu0 0
    %3862 = vmatpush1.bf16.xpose.msra.mxu0 0
    %3863 = vmatprep.subr.bf16.mxu0 0
    %3864 = vmatpush1.bf16.xpose.msra.mxu0 0
    %3865 = vmatprep.subr.bf16.mxu0 0
    %3866 = vmatpush1.bf16.xpose.msra.mxu0 0
    %3867 = vmatprep.subr.bf16.mxu0 0
    %3868 = vmatpush1.bf16.xpose.msra.mxu0 0
    %3869 = vmatprep.subr.bf16.mxu0 0
    %3870 = vmatpush1.bf16.xpose.msra.mxu0 0
    %3871 = vmatprep.subr.bf16.mxu0 0
    %3872 = vmatpush1.bf16.xpose.msra.mxu0 0
    %3873 = vmatprep.subr.bf16.mxu0 0
    %3874 = vmatpush1.bf16.xpose.msra.mxu0 0
    %3875 = vmatprep.subr.bf16.mxu0 0
    %3876 = vmatpush1.bf16.xpose.msra.mxu0 0
    %3877 = vmatprep.mubr.bf16.mxu0 0
    %3878 = vmatmul.mubr.bf16.gmra.mrb[0].mxu0 %v3840
    %v3879 = vpop.f32.mrb[0].mxu0
    %v3880 = vadd.f32 0.0, %v3879
    %v3881 = vpop.f32.mrb[0].mxu0
    %v3882 = vpop.f32.mrb[0].mxu0
    %v3883 = vadd.f32 0.0, %v3882
    %v3884 = vpop.f32.mrb[0].mxu0
    %3885 = vdwg.mxu0
    %3886 = vrot.lane.b32.xlu0 %v1968, 32
    %v3887 = vpop.permute.xlu0 %3886
    %3888 = vrot.lane.b32.xlu0 %v1970, 32
    %v3889 = vpop.permute.xlu0 %3888
    %v3891 = vsel %vm1973, %v3887, 0
    %v3894 = vsel %vm1973, %v3889, 0
    %3896 = vmatprep.subr.bf16.mxu0 0
    %3897 = vmatpush1.bf16.xpose.msra.mxu0 %v3894
    %3898 = vmatprep.subr.bf16.mxu0 0
    %3899 = vmatpush1.bf16.xpose.msra.mxu0 0
    %3900 = vmatprep.subr.bf16.mxu0 0
    %3901 = vmatpush1.bf16.xpose.msra.mxu0 0
    %3902 = vmatprep.subr.bf16.mxu0 0
    %3903 = vmatpush1.bf16.xpose.msra.mxu0 0
    %3904 = vmatprep.subr.bf16.mxu0 0
    %3905 = vmatpush1.bf16.xpose.msra.mxu0 0
    %3906 = vmatprep.subr.bf16.mxu0 0
    %3907 = vmatpush1.bf16.xpose.msra.mxu0 0
    %3908 = vmatprep.subr.bf16.mxu0 0
    %3909 = vmatpush1.bf16.xpose.msra.mxu0 0
    %3910 = vmatprep.subr.bf16.mxu0 0
    %3911 = vmatpush1.bf16.xpose.msra.mxu0 0
    %3912 = vmatprep.subr.bf16.mxu0 0
    %3913 = vmatpush1.bf16.xpose.msra.mxu0 0
    %3914 = vmatprep.subr.bf16.mxu0 0
    %3915 = vmatpush1.bf16.xpose.msra.mxu0 0
    %3916 = vmatprep.subr.bf16.mxu0 0
    %3917 = vmatpush1.bf16.xpose.msra.mxu0 0
    %3918 = vmatprep.subr.bf16.mxu0 0
    %3919 = vmatpush1.bf16.xpose.msra.mxu0 0
    %3920 = vmatprep.subr.bf16.mxu0 0
    %3921 = vmatpush1.bf16.xpose.msra.mxu0 0
    %3922 = vmatprep.subr.bf16.mxu0 0
    %3923 = vmatpush1.bf16.xpose.msra.mxu0 0
    %3924 = vmatprep.subr.bf16.mxu0 0
    %3925 = vmatpush1.bf16.xpose.msra.mxu0 0
    %3926 = vmatprep.subr.bf16.mxu0 0
    %3927 = vmatpush1.bf16.xpose.msra.mxu0 0
    %3928 = vmatprep.mubr.bf16.mxu0 0
    %3929 = vmatmul.mubr.bf16.gmra.mrb[0].mxu0 %v3891
    %v3930 = vpop.f32.mrb[0].mxu0
    %v3931 = vadd.f32 0.0, %v3930
    %v3932 = vpop.f32.mrb[0].mxu0
    %v3933 = vpop.f32.mrb[0].mxu0
    %v3934 = vadd.f32 0.0, %v3933
    %v3935 = vpop.f32.mrb[0].mxu0
    %3936 = vdwg.mxu0
    %v3937 = vmul.f32 %v3880, 0.17677669
    %v3938 = vmul.f32 %v3883, 0.17677669
    %v3939 = vmul.f32 %v3931, 0.17677669
    %v3940 = vmul.f32 %v3934, 0.17677669
    %v3941 = vsel %vm2072, %v3937, -inf
    %3942 = vmax.xlane.f32.xlu0 %v3941
    %v3943 = vpop.xlane.xlu0 %3942
    %v3944 = vsel %vm2072, %v3938, -inf
    %3945 = vmax.xlane.f32.xlu0 %v3944
    %v3946 = vpop.xlane.xlu0 %3945
    %v3947 = vsel %vm2072, %v3939, -inf
    %3948 = vmax.xlane.f32.xlu0 %v3947
    %v3949 = vpop.xlane.xlu0 %3948
    %v3950 = vsel %vm2072, %v3940, -inf
    %3951 = vmax.xlane.f32.xlu0 %v3950
    %v3952 = vpop.xlane.xlu0 %3951
    %v3953 = vsub.f32 %v3937, %v3943
    %v3954 = vsub.f32 %v3938, %v3946
    %v3955 = vsub.f32 %v3939, %v3949
    %v3956 = vsub.f32 %v3940, %v3952
    %v3957 = vmul.f32 %v3953, 1.442695
    %v3958 = vpow.pop %v3957
    %v3959 = vmul.f32 %v3954, 1.442695
    %v3960 = vpow.pop %v3959
    %v3961 = vmul.f32 %v3955, 1.442695
    %v3962 = vpow.pop %v3961
    %v3963 = vmul.f32 %v3956, 1.442695
    %v3964 = vpow.pop %v3963
    %v3965 = vsel %vm2072, %v3958, 0.0
    %3966 = vadd.xlane.f32.xlu0 %v3965
    %v3967 = vpop.xlane.xlu0 %3966
    %v3968 = vsel %vm2072, %v3960, 0.0
    %3969 = vadd.xlane.f32.xlu0 %v3968
    %v3970 = vpop.xlane.xlu0 %3969
    %v3971 = vsel %vm2072, %v3962, 0.0
    %3972 = vadd.xlane.f32.xlu0 %v3971
    %v3973 = vpop.xlane.xlu0 %3972
    %v3974 = vsel %vm2072, %v3964, 0.0
    %3975 = vadd.xlane.f32.xlu0 %v3974
    %v3976 = vpop.xlane.xlu0 %3975
    %v3977 = vrcp.pop %v3967
    %v3978 = vmul.f32 %v3958, %v3977
    %v3979 = vrcp.pop %v3970
    %v3980 = vmul.f32 %v3960, %v3979
    %v3981 = vrcp.pop %v3973
    %v3982 = vmul.f32 %v3962, %v3981
    %v3983 = vrcp.pop %v3976
    %v3984 = vmul.f32 %v3964, %v3983
    %v3985 = vadd.f32 %v3717, %v3978
    %v3986 = vadd.f32 %v3718, %v3980
    %v3987 = vadd.f32 %v3719, %v3982
    %v3988 = vadd.f32 %v3720, %v3984
    %v3989 = vsel %vm2072, %v3978, 0.0
    %v3990 = vsel %vm2072, %v3980, 0.0
    %v3991 = vadd.f32 %v3989, %v3990
    %v3992 = vrot.slane %v3991, 4
    %v3993 = vadd.f32 %v3991, %v3992
    %v3994 = vrot.slane %v3993, 2
    %v3995 = vadd.f32 %v3993, %v3994
    %v3996 = vrot.slane %v3995, 1
    %v3997 = vadd.f32 %v3995, %v3996
    %v3998 = vsel %vm2072, %v3982, 0.0
    %v3999 = vsel %vm2072, %v3984, 0.0
    %v4000 = vadd.f32 %v3998, %v3999
    %v4001 = vrot.slane %v4000, 4
    %v4002 = vadd.f32 %v4000, %v4001
    %v4003 = vrot.slane %v4002, 2
    %v4004 = vadd.f32 %v4002, %v4003
    %v4005 = vrot.slane %v4004, 1
    %v4006 = vadd.f32 %v4004, %v4005
    %v4007 = vmul.f32 %v3997, 0.0625
    %v4008 = vmul.f32 %v4006, 0.0625
    %v4009 = vpack.c.bf16 %v4007, %v4007
    %v4010 = vpack.c.bf16 %v4008, %v4008
    %4011 = vrot.lane.b32.xlu0 %v1966, 32
    %v4012 = vpop.permute.xlu0 %4011
    %v4015 = vsel %vm2072, %v4009, 0
    %4017 = vmatprep.subr.bf16.mxu0 0
    %4018 = vmatpush1.bf16.msra.mxu0 %v4012
    %4019 = vmatprep.subr.bf16.mxu0 0
    %4020 = vmatpush1.bf16.msra.mxu0 0
    %4021 = vmatprep.subr.bf16.mxu0 0
    %4022 = vmatpush1.bf16.msra.mxu0 0
    %4023 = vmatprep.subr.bf16.mxu0 0
    %4024 = vmatpush1.bf16.msra.mxu0 0
    %4025 = vmatprep.subr.bf16.mxu0 0
    %4026 = vmatpush1.bf16.msra.mxu0 0
    %4027 = vmatprep.subr.bf16.mxu0 0
    %4028 = vmatpush1.bf16.msra.mxu0 0
    %4029 = vmatprep.subr.bf16.mxu0 0
    %4030 = vmatpush1.bf16.msra.mxu0 0
    %4031 = vmatprep.subr.bf16.mxu0 0
    %4032 = vmatpush1.bf16.msra.mxu0 0
    %4033 = vmatprep.subr.bf16.mxu0 0
    %4034 = vmatpush1.bf16.msra.mxu0 0
    %4035 = vmatprep.subr.bf16.mxu0 0
    %4036 = vmatpush1.bf16.msra.mxu0 0
    %4037 = vmatprep.subr.bf16.mxu0 0
    %4038 = vmatpush1.bf16.msra.mxu0 0
    %4039 = vmatprep.subr.bf16.mxu0 0
    %4040 = vmatpush1.bf16.msra.mxu0 0
    %4041 = vmatprep.subr.bf16.mxu0 0
    %4042 = vmatpush1.bf16.msra.mxu0 0
    %4043 = vmatprep.subr.bf16.mxu0 0
    %4044 = vmatpush1.bf16.msra.mxu0 0
    %4045 = vmatprep.subr.bf16.mxu0 0
    %4046 = vmatpush1.bf16.msra.mxu0 0
    %4047 = vmatprep.subr.bf16.mxu0 0
    %4048 = vmatpush1.bf16.msra.mxu0 0
    %4049 = vmatprep.mubr.bf16.mxu0 0
    %4050 = vmatmul.mubr.bf16.gmra.mrb[0].mxu0 %v4015
    %v4051 = vpop.f32.mrb[0].mxu0
    %v4052 = vadd.f32 0.0, %v4051
    %v4053 = vpop.f32.mrb[0].mxu0
    %v4054 = vpop.f32.mrb[0].mxu0
    %v4055 = vpop.f32.mrb[0].mxu0
    %4056 = vdwg.mxu0
    %4057 = vrot.lane.b32.xlu0 %v1972, 32
    %v4058 = vpop.permute.xlu0 %4057
    %v4061 = vsel %vm2072, %v4010, 0
    %4063 = vmatprep.subr.bf16.mxu0 0
    %4064 = vmatpush1.bf16.msra.mxu0 %v4058
    %4065 = vmatprep.subr.bf16.mxu0 0
    %4066 = vmatpush1.bf16.msra.mxu0 0
    %4067 = vmatprep.subr.bf16.mxu0 0
    %4068 = vmatpush1.bf16.msra.mxu0 0
    %4069 = vmatprep.subr.bf16.mxu0 0
    %4070 = vmatpush1.bf16.msra.mxu0 0
    %4071 = vmatprep.subr.bf16.mxu0 0
    %4072 = vmatpush1.bf16.msra.mxu0 0
    %4073 = vmatprep.subr.bf16.mxu0 0
    %4074 = vmatpush1.bf16.msra.mxu0 0
    %4075 = vmatprep.subr.bf16.mxu0 0
    %4076 = vmatpush1.bf16.msra.mxu0 0
    %4077 = vmatprep.subr.bf16.mxu0 0
    %4078 = vmatpush1.bf16.msra.mxu0 0
    %4079 = vmatprep.subr.bf16.mxu0 0
    %4080 = vmatpush1.bf16.msra.mxu0 0
    %4081 = vmatprep.subr.bf16.mxu0 0
    %4082 = vmatpush1.bf16.msra.mxu0 0
    %4083 = vmatprep.subr.bf16.mxu0 0
    %4084 = vmatpush1.bf16.msra.mxu0 0
    %4085 = vmatprep.subr.bf16.mxu0 0
    %4086 = vmatpush1.bf16.msra.mxu0 0
    %4087 = vmatprep.subr.bf16.mxu0 0
    %4088 = vmatpush1.bf16.msra.mxu0 0
    %4089 = vmatprep.subr.bf16.mxu0 0
    %4090 = vmatpush1.bf16.msra.mxu0 0
    %4091 = vmatprep.subr.bf16.mxu0 0
    %4092 = vmatpush1.bf16.msra.mxu0 0
    %4093 = vmatprep.subr.bf16.mxu0 0
    %4094 = vmatpush1.bf16.msra.mxu0 0
    %4095 = vmatprep.mubr.bf16.mxu0 0
    %4096 = vmatmul.mubr.bf16.gmra.mrb[0].mxu0 %v4061
    %v4097 = vpop.f32.mrb[0].mxu0
    %v4098 = vadd.f32 0.0, %v4097
    %v4099 = vpop.f32.mrb[0].mxu0
    %v4100 = vpop.f32.mrb[0].mxu0
    %v4101 = vpop.f32.mrb[0].mxu0
    %4102 = vdwg.mxu0
    %4105 = vrot.lane.b32.xlu0 %v2451, 32
    %v4106 = vpop.permute.xlu0 %4105
    %4107 = vrot.lane.b32.xlu0 %v2498, 32
    %v4108 = vpop.permute.xlu0 %4107
    %4113 = vrot.lane.b32.xlu0 %v2720, 64
    %v4114 = vpop.permute.xlu0 %4113
    %4115 = vrot.lane.b32.xlu0 %v2766, 64
    %v4116 = vpop.permute.xlu0 %4115
    %4121 = vrot.lane.b32.xlu0 %v2988, 96
    %v4122 = vpop.permute.xlu0 %4121
    %4123 = vrot.lane.b32.xlu0 %v3034, 96
    %v4124 = vpop.permute.xlu0 %4123
    %4129 = vrot.lane.b32.xlu0 %v3515, 32
    %v4130 = vpop.permute.xlu0 %4129
    %4131 = vrot.lane.b32.xlu0 %v3562, 32
    %v4132 = vpop.permute.xlu0 %4131
    %4137 = vrot.lane.b32.xlu0 %v3784, 64
    %v4138 = vpop.permute.xlu0 %4137
    %4139 = vrot.lane.b32.xlu0 %v3830, 64
    %v4140 = vpop.permute.xlu0 %4139
    %4145 = vrot.lane.b32.xlu0 %v4052, 96
    %v4146 = vpop.permute.xlu0 %4145
    %4147 = vrot.lane.b32.xlu0 %v4098, 96
    %v4148 = vpop.permute.xlu0 %4147
    %v4151 = vsel %vm1973, %v2181, %v4106
    %v4152 = vsel %vm1973, %v2224, %v4108
    %v4153 = vsel %vm387, %v4151, %v4114
    %v4154 = vsel %vm387, %v4152, %v4116
    %vm4155 = vcmask 785408
    %v4156 = vsel %vm4155, %v4153, %v4122
    %v4157 = vsel %vm4155, %v4154, %v4124
    %v4158 = vsel %vm1973, %v3245, %v4130
    %v4159 = vsel %vm1973, %v3288, %v4132
    %v4160 = vsel %vm387, %v4158, %v4138
    %v4161 = vsel %vm387, %v4159, %v4140
    %v4162 = vsel %vm4155, %v4160, %v4146
    %v4163 = vsel %vm4155, %v4161, %v4148
    %v4164 = vld [vmem:[%s9] sm:$0xff]
    %v4165 = vld [vmem:[%s9 + $0x14] sm:$0xff]
    %v4166 = vld [vmem:[%s9 + $0x28] sm:$0xff]
    %v4167 = vld [vmem:[%s9 + $0x3c] sm:$0xff]
    %v4168 = vld [vmem:[%s9 + $0x50] sm:$0xff]
    %v4169 = vld [vmem:[%s9 + $0x64] sm:$0xff]
    %v4170 = vld [vmem:[%s9 + $0x78] sm:$0xff]
    %v4171 = vld [vmem:[%s9 + $0x8c] sm:$0xff]
    %v4172 = vld [vmem:[%s9 + $0xa0] sm:$0xff]
    %v4173 = vld [vmem:[%s9 + $0xb4] sm:$0xff]
    %v4174 = vld [vmem:[%s9 + $0xc8] sm:$0xff]
    %v4175 = vld [vmem:[%s9 + $0xdc] sm:$0xff]
    %v4176 = vld [vmem:[%s9 + $0xf0] sm:$0xff]
    %v4177 = vld [vmem:[%s9 + $0x104] sm:$0xff]
    %v4178 = vld [vmem:[%s9 + $0x118] sm:$0xff]
    %v4179 = vld [vmem:[%s9 + $0x12c] sm:$0xff]
    %v4180 = vld [vmem:[%s9 + $0x140] sm:$0xff]
    %v4181 = vld [vmem:[%s9 + $0x154] sm:$0xff]
    %v4182 = vld [vmem:[%s9 + $0x168] sm:$0xff]
    %v4183 = vld [vmem:[%s9 + $0x17c] sm:$0xff]
    %v4184 = vld [vmem:[%s9 + $0x190] sm:$0xff]
    %v4185 = vld [vmem:[%s9 + $0x1a4] sm:$0xff]
    %v4186 = vld [vmem:[%s9 + $0x1b8] sm:$0xff]
    %v4187 = vld [vmem:[%s9 + $0x1cc] sm:$0xff]
    %v4188 = vld [vmem:[%s9 + $0x1e0] sm:$0xff]
    %v4189 = vld [vmem:[%s9 + $0x1f4] sm:$0xff]
    %v4190 = vld [vmem:[%s9 + $0x208] sm:$0xff]
    %v4191 = vld [vmem:[%s9 + $0x21c] sm:$0xff]
    %v4192 = vld [vmem:[%s9 + $0x230] sm:$0xff]
    %v4193 = vld [vmem:[%s9 + $0x244] sm:$0xff]
    %v4194 = vld [vmem:[%s9 + $0x258] sm:$0xff]
    %v4195 = vld [vmem:[%s9 + $0x26c] sm:$0xff]
    %v4196 = vld [vmem:[%s9 + $0x8] sm:$0xff]
    %v4197 = vld [vmem:[%s9 + $0x1c] sm:$0xff]
    %v4198 = vld [vmem:[%s9 + $0x30] sm:$0xff]
    %v4199 = vld [vmem:[%s9 + $0x44] sm:$0xff]
    %v4200 = vld [vmem:[%s9 + $0x58] sm:$0xff]
    %v4201 = vld [vmem:[%s9 + $0x6c] sm:$0xff]
    %v4202 = vld [vmem:[%s9 + $0x80] sm:$0xff]
    %v4203 = vld [vmem:[%s9 + $0x94] sm:$0xff]
    %v4204 = vld [vmem:[%s9 + $0xa8] sm:$0xff]
    %v4205 = vld [vmem:[%s9 + $0xbc] sm:$0xff]
    %v4206 = vld [vmem:[%s9 + $0xd0] sm:$0xff]
    %v4207 = vld [vmem:[%s9 + $0xe4] sm:$0xff]
    %v4208 = vld [vmem:[%s9 + $0xf8] sm:$0xff]
    %v4209 = vld [vmem:[%s9 + $0x10c] sm:$0xff]
    %v4210 = vld [vmem:[%s9 + $0x120] sm:$0xff]
    %v4211 = vld [vmem:[%s9 + $0x134] sm:$0xff]
    %v4212 = vld [vmem:[%s9 + $0x148] sm:$0xff]
    %v4213 = vld [vmem:[%s9 + $0x15c] sm:$0xff]
    %v4214 = vld [vmem:[%s9 + $0x170] sm:$0xff]
    %v4215 = vld [vmem:[%s9 + $0x184] sm:$0xff]
    %v4216 = vld [vmem:[%s9 + $0x198] sm:$0xff]
    %v4217 = vld [vmem:[%s9 + $0x1ac] sm:$0xff]
    %v4218 = vld [vmem:[%s9 + $0x1c0] sm:$0xff]
    %v4219 = vld [vmem:[%s9 + $0x1d4] sm:$0xff]
    %v4220 = vld [vmem:[%s9 + $0x1e8] sm:$0xff]
    %v4221 = vld [vmem:[%s9 + $0x1fc] sm:$0xff]
    %v4222 = vld [vmem:[%s9 + $0x210] sm:$0xff]
    %v4223 = vld [vmem:[%s9 + $0x224] sm:$0xff]
    %v4224 = vld [vmem:[%s9 + $0x238] sm:$0xff]
    %v4225 = vld [vmem:[%s9 + $0x24c] sm:$0xff]
    %v4226 = vld [vmem:[%s9 + $0x260] sm:$0xff]
    %v4227 = vld [vmem:[%s9 + $0x274] sm:$0xff]
    %v4228 = vld [vmem:[%s9 + $0x10] sm:$0xf]
    %v4229 = vld [vmem:[%s9 + $0x24] sm:$0xf]
    %v4230 = vld [vmem:[%s9 + $0x38] sm:$0xf]
    %v4231 = vld [vmem:[%s9 + $0x4c] sm:$0xf]
    %v4232 = vld [vmem:[%s9 + $0x60] sm:$0xf]
    %v4233 = vld [vmem:[%s9 + $0x74] sm:$0xf]
    %v4234 = vld [vmem:[%s9 + $0x88] sm:$0xf]
    %v4235 = vld [vmem:[%s9 + $0x9c] sm:$0xf]
    %v4236 = vld [vmem:[%s9 + $0xb0] sm:$0xf]
    %v4237 = vld [vmem:[%s9 + $0xc4] sm:$0xf]
    %v4238 = vld [vmem:[%s9 + $0xd8] sm:$0xf]
    %v4239 = vld [vmem:[%s9 + $0xec] sm:$0xf]
    %v4240 = vld [vmem:[%s9 + $0x100] sm:$0xf]
    %v4241 = vld [vmem:[%s9 + $0x114] sm:$0xf]
    %v4242 = vld [vmem:[%s9 + $0x128] sm:$0xf]
    %v4243 = vld [vmem:[%s9 + $0x13c] sm:$0xf]
    %v4244 = vld [vmem:[%s9 + $0x150] sm:$0xf]
    %v4245 = vld [vmem:[%s9 + $0x164] sm:$0xf]
    %v4246 = vld [vmem:[%s9 + $0x178] sm:$0xf]
    %v4247 = vld [vmem:[%s9 + $0x18c] sm:$0xf]
    %v4248 = vld [vmem:[%s9 + $0x1a0] sm:$0xf]
    %v4249 = vld [vmem:[%s9 + $0x1b4] sm:$0xf]
    %v4250 = vld [vmem:[%s9 + $0x1c8] sm:$0xf]
    %v4251 = vld [vmem:[%s9 + $0x1dc] sm:$0xf]
    %v4252 = vld [vmem:[%s9 + $0x1f0] sm:$0xf]
    %v4253 = vld [vmem:[%s9 + $0x204] sm:$0xf]
    %v4254 = vld [vmem:[%s9 + $0x218] sm:$0xf]
    %v4255 = vld [vmem:[%s9 + $0x22c] sm:$0xf]
    %v4256 = vld [vmem:[%s9 + $0x240] sm:$0xf]
    %v4257 = vld [vmem:[%s9 + $0x254] sm:$0xf]
    %v4258 = vld [vmem:[%s9 + $0x268] sm:$0xf]
    %v4259 = vld [vmem:[%s9 + $0x27c] sm:$0xf]
    %v4260 = vld [vmem:[%s10] sm:$0x3]
    %v4261 = vld [vmem:[%s10 + $0x2] sm:$0x3]
    %v4262 = vld [vmem:[%s10 + $0x4] sm:$0x1]
    %v4263 = vpack.c.bf16 %v4156, %v4156
    %v4264 = vpack.c.bf16 %v4162, %v4162
    %v4265 = vpack.c.bf16 %v4157, %v4157
    %v4266 = vpack.c.bf16 %v4163, %v4163
    %v4268 = vlaneseq
    %v4269 = vshrl.u32 %v4268, 7
    %v4270 = vsub.s32 0, %v4269
    %v4271 = vrot.slane %v4260, %v4270
    %v4272 = vlaneseq
    %v4273 = vshrl.u32 %v4272, 7
    %v4274 = vsub.s32 1, %v4273
    %v4275 = vrot.slane %v4260, %v4274
    %v4282 = vunpack.c.l.b16 %v4263
    %v4283 = vunpack.c.l.b16 %v4264
    %v4284 = vunpack.c.l.b16 %v4265
    %v4285 = vunpack.c.l.b16 %v4266
    %v4286 = vrot.slane %v4284, 7
    %vm4287 = vcmask 1041409
    %v4288 = vsel %vm4287, %v4286, %v4282
    %v4289 = vrot.slane %v4285, 7
    %v4290 = vsel %vm4287, %v4289, %v4283
    %v4291 = vpack.c.b16 %v4288, %v4288
    %v4292 = vpack.c.b16 %v4290, %v4290
    %v4327 = vunpack.c.l.b16 %v4164
    %v4328 = vunpack.c.h.b16 %v4164
    %v4329 = vunpack.c.l.b16 %v4165
    %v4330 = vunpack.c.h.b16 %v4165
    %v4331 = vunpack.c.l.b16 %v4166
    %v4332 = vunpack.c.h.b16 %v4166
    %v4333 = vunpack.c.l.b16 %v4167
    %v4334 = vunpack.c.h.b16 %v4167
    %v4335 = vunpack.c.l.b16 %v4168
    %v4336 = vunpack.c.h.b16 %v4168
    %v4337 = vunpack.c.l.b16 %v4169
    %v4338 = vunpack.c.h.b16 %v4169
    %v4339 = vunpack.c.l.b16 %v4170
    %v4340 = vunpack.c.h.b16 %v4170
    %v4341 = vunpack.c.l.b16 %v4171
    %v4342 = vunpack.c.h.b16 %v4171
    %v4343 = vunpack.c.l.b16 %v4172
    %v4344 = vunpack.c.h.b16 %v4172
    %v4345 = vunpack.c.l.b16 %v4173
    %v4346 = vunpack.c.h.b16 %v4173
    %v4347 = vunpack.c.l.b16 %v4174
    %v4348 = vunpack.c.h.b16 %v4174
    %v4349 = vunpack.c.l.b16 %v4175
    %v4350 = vunpack.c.h.b16 %v4175
    %v4351 = vunpack.c.l.b16 %v4176
    %v4352 = vunpack.c.h.b16 %v4176
    %v4353 = vunpack.c.l.b16 %v4177
    %v4354 = vunpack.c.h.b16 %v4177
    %v4355 = vunpack.c.l.b16 %v4178
    %v4356 = vunpack.c.h.b16 %v4178
    %v4357 = vunpack.c.l.b16 %v4179
    %v4358 = vunpack.c.h.b16 %v4179
    %v4359 = vunpack.c.l.b16 %v4180
    %v4360 = vunpack.c.h.b16 %v4180
    %v4361 = vunpack.c.l.b16 %v4181
    %v4362 = vunpack.c.h.b16 %v4181
    %v4363 = vunpack.c.l.b16 %v4182
    %v4364 = vunpack.c.h.b16 %v4182
    %v4365 = vunpack.c.l.b16 %v4183
    %v4366 = vunpack.c.h.b16 %v4183
    %v4367 = vunpack.c.l.b16 %v4184
    %v4368 = vunpack.c.h.b16 %v4184
    %v4369 = vunpack.c.l.b16 %v4185
    %v4370 = vunpack.c.h.b16 %v4185
    %v4371 = vunpack.c.l.b16 %v4186
    %v4372 = vunpack.c.h.b16 %v4186
    %v4373 = vunpack.c.l.b16 %v4187
    %v4374 = vunpack.c.h.b16 %v4187
    %v4375 = vunpack.c.l.b16 %v4188
    %v4376 = vunpack.c.h.b16 %v4188
    %v4377 = vunpack.c.l.b16 %v4189
    %v4378 = vunpack.c.h.b16 %v4189
    %v4379 = vunpack.c.l.b16 %v4190
    %v4380 = vunpack.c.h.b16 %v4190
    %v4381 = vunpack.c.l.b16 %v4191
    %v4382 = vunpack.c.h.b16 %v4191
    %v4383 = vunpack.c.l.b16 %v4192
    %v4384 = vunpack.c.h.b16 %v4192
    %v4385 = vunpack.c.l.b16 %v4193
    %v4386 = vunpack.c.h.b16 %v4193
    %v4387 = vunpack.c.l.b16 %v4194
    %v4388 = vunpack.c.h.b16 %v4194
    %v4389 = vunpack.c.l.b16 %v4195
    %v4390 = vunpack.c.h.b16 %v4195
    %v4391 = vpack.c.b16 %v4329, %v4327
    %v4392 = vpack.c.b16 %v4330, %v4328
    %v4393 = vpack.c.b16 %v4333, %v4331
    %v4394 = vpack.c.b16 %v4334, %v4332
    %v4395 = vpack.c.b16 %v4337, %v4335
    %v4396 = vpack.c.b16 %v4338, %v4336
    %v4397 = vpack.c.b16 %v4341, %v4339
    %v4398 = vpack.c.b16 %v4342, %v4340
    %v4399 = vpack.c.b16 %v4345, %v4343
    %v4400 = vpack.c.b16 %v4346, %v4344
    %v4401 = vpack.c.b16 %v4349, %v4347
    %v4402 = vpack.c.b16 %v4350, %v4348
    %v4403 = vpack.c.b16 %v4353, %v4351
    %v4404 = vpack.c.b16 %v4354, %v4352
    %v4405 = vpack.c.b16 %v4357, %v4355
    %v4406 = vpack.c.b16 %v4358, %v4356
    %v4407 = vpack.c.b16 %v4361, %v4359
    %v4408 = vpack.c.b16 %v4362, %v4360
    %v4409 = vpack.c.b16 %v4365, %v4363
    %v4410 = vpack.c.b16 %v4366, %v4364
    %v4411 = vpack.c.b16 %v4369, %v4367
    %v4412 = vpack.c.b16 %v4370, %v4368
    %v4413 = vpack.c.b16 %v4373, %v4371
    %v4414 = vpack.c.b16 %v4374, %v4372
    %v4415 = vpack.c.b16 %v4377, %v4375
    %v4416 = vpack.c.b16 %v4378, %v4376
    %v4417 = vpack.c.b16 %v4381, %v4379
    %v4418 = vpack.c.b16 %v4382, %v4380
    %v4419 = vpack.c.b16 %v4385, %v4383
    %v4420 = vpack.c.b16 %v4386, %v4384
    %v4421 = vpack.c.b16 %v4389, %v4387
    %v4422 = vpack.c.b16 %v4390, %v4388
    %4455 = vmatprep.subr.bf16.mxu0 %v4392
    %4456 = vmatpush1.bf16.msra.mxu0 %v4391
    %4457 = vmatprep.subr.bf16.mxu0 %v4394
    %4458 = vmatpush1.bf16.msra.mxu0 %v4393
    %4459 = vmatprep.subr.bf16.mxu0 %v4396
    %4460 = vmatpush1.bf16.msra.mxu0 %v4395
    %4461 = vmatprep.subr.bf16.mxu0 %v4398
    %4462 = vmatpush1.bf16.msra.mxu0 %v4397
    %4463 = vmatprep.subr.bf16.mxu0 %v4400
    %4464 = vmatpush1.bf16.msra.mxu0 %v4399
    %4465 = vmatprep.subr.bf16.mxu0 %v4402
    %4466 = vmatpush1.bf16.msra.mxu0 %v4401
    %4467 = vmatprep.subr.bf16.mxu0 %v4404
    %4468 = vmatpush1.bf16.msra.mxu0 %v4403
    %4469 = vmatprep.subr.bf16.mxu0 %v4406
    %4470 = vmatpush1.bf16.msra.mxu0 %v4405
    %4471 = vmatprep.subr.bf16.mxu0 %v4408
    %4472 = vmatpush1.bf16.msra.mxu0 %v4407
    %4473 = vmatprep.subr.bf16.mxu0 %v4410
    %4474 = vmatpush1.bf16.msra.mxu0 %v4409
    %4475 = vmatprep.subr.bf16.mxu0 %v4412
    %4476 = vmatpush1.bf16.msra.mxu0 %v4411
    %4477 = vmatprep.subr.bf16.mxu0 %v4414
    %4478 = vmatpush1.bf16.msra.mxu0 %v4413
    %4479 = vmatprep.subr.bf16.mxu0 %v4416
    %4480 = vmatpush1.bf16.msra.mxu0 %v4415
    %4481 = vmatprep.subr.bf16.mxu0 %v4418
    %4482 = vmatpush1.bf16.msra.mxu0 %v4417
    %4483 = vmatprep.subr.bf16.mxu0 %v4420
    %4484 = vmatpush1.bf16.msra.mxu0 %v4419
    %4485 = vmatprep.subr.bf16.mxu0 %v4422
    %4486 = vmatpush1.bf16.msra.mxu0 %v4421
    %4487 = vmatprep.mubr.bf16.mxu0 %v4292
    %4488 = vmatmul.mubr.bf16.gmra.mrb[0].mxu0 %v4291
    %v4489 = vpop.f32.mrb[0].mxu0
    %v4490 = vadd.f32 %v4271, %v4489
    %v4491 = vpop.f32.mrb[0].mxu0
    %v4492 = vadd.f32 %v4275, %v4491
    %v4493 = vpop.f32.mrb[0].mxu0
    %v4494 = vpop.f32.mrb[0].mxu0
    %4495 = vdwg.mxu0
    %v4498 = vrot.slane %v4490, 1
    %v4499 = vrot.slane %v4492, 1
    %v4504 = vadd.f32 %v1186, %v4490
    %v4505 = vadd.f32 %v1187, %v4492
    %v4506 = vadd.f32 %v1188, %v4498
    %v4507 = vadd.f32 %v1189, %v4499
    %v4508 = vpack.c.bf16 %v4504, %v4504
    %v4509 = vpack.c.bf16 %v4505, %v4505
    %v4510 = vpack.c.bf16 %v4506, %v4506
    %v4511 = vpack.c.bf16 %v4507, %v4507
    %v4513 = vlaneseq
    %v4514 = vshrl.u32 %v4513, 7
    %v4515 = vsub.s32 0, %v4514
    %v4516 = vrot.slane %v4261, %v4515
    %v4517 = vlaneseq
    %v4518 = vshrl.u32 %v4517, 7
    %v4519 = vsub.s32 1, %v4518
    %v4520 = vrot.slane %v4261, %v4519
    %v4527 = vunpack.c.l.b16 %v4508
    %v4528 = vunpack.c.l.b16 %v4509
    %v4529 = vunpack.c.l.b16 %v4510
    %v4530 = vunpack.c.l.b16 %v4511
    %v4531 = vrot.slane %v4529, 7
    %v4532 = vsel %vm4287, %v4531, %v4527
    %v4533 = vrot.slane %v4530, 7
    %v4534 = vsel %vm4287, %v4533, %v4528
    %v4535 = vpack.c.b16 %v4532, %v4532
    %v4536 = vpack.c.b16 %v4534, %v4534
    %v4571 = vunpack.c.l.b16 %v4196
    %v4572 = vunpack.c.h.b16 %v4196
    %v4573 = vunpack.c.l.b16 %v4197
    %v4574 = vunpack.c.h.b16 %v4197
    %v4575 = vunpack.c.l.b16 %v4198
    %v4576 = vunpack.c.h.b16 %v4198
    %v4577 = vunpack.c.l.b16 %v4199
    %v4578 = vunpack.c.h.b16 %v4199
    %v4579 = vunpack.c.l.b16 %v4200
    %v4580 = vunpack.c.h.b16 %v4200
    %v4581 = vunpack.c.l.b16 %v4201
    %v4582 = vunpack.c.h.b16 %v4201
    %v4583 = vunpack.c.l.b16 %v4202
    %v4584 = vunpack.c.h.b16 %v4202
    %v4585 = vunpack.c.l.b16 %v4203
    %v4586 = vunpack.c.h.b16 %v4203
    %v4587 = vunpack.c.l.b16 %v4204
    %v4588 = vunpack.c.h.b16 %v4204
    %v4589 = vunpack.c.l.b16 %v4205
    %v4590 = vunpack.c.h.b16 %v4205
    %v4591 = vunpack.c.l.b16 %v4206
    %v4592 = vunpack.c.h.b16 %v4206
    %v4593 = vunpack.c.l.b16 %v4207
    %v4594 = vunpack.c.h.b16 %v4207
    %v4595 = vunpack.c.l.b16 %v4208
    %v4596 = vunpack.c.h.b16 %v4208
    %v4597 = vunpack.c.l.b16 %v4209
    %v4598 = vunpack.c.h.b16 %v4209
    %v4599 = vunpack.c.l.b16 %v4210
    %v4600 = vunpack.c.h.b16 %v4210
    %v4601 = vunpack.c.l.b16 %v4211
    %v4602 = vunpack.c.h.b16 %v4211
    %v4603 = vunpack.c.l.b16 %v4212
    %v4604 = vunpack.c.h.b16 %v4212
    %v4605 = vunpack.c.l.b16 %v4213
    %v4606 = vunpack.c.h.b16 %v4213
    %v4607 = vunpack.c.l.b16 %v4214
    %v4608 = vunpack.c.h.b16 %v4214
    %v4609 = vunpack.c.l.b16 %v4215
    %v4610 = vunpack.c.h.b16 %v4215
    %v4611 = vunpack.c.l.b16 %v4216
    %v4612 = vunpack.c.h.b16 %v4216
    %v4613 = vunpack.c.l.b16 %v4217
    %v4614 = vunpack.c.h.b16 %v4217
    %v4615 = vunpack.c.l.b16 %v4218
    %v4616 = vunpack.c.h.b16 %v4218
    %v4617 = vunpack.c.l.b16 %v4219
    %v4618 = vunpack.c.h.b16 %v4219
    %v4619 = vunpack.c.l.b16 %v4220
    %v4620 = vunpack.c.h.b16 %v4220
    %v4621 = vunpack.c.l.b16 %v4221
    %v4622 = vunpack.c.h.b16 %v4221
    %v4623 = vunpack.c.l.b16 %v4222
    %v4624 = vunpack.c.h.b16 %v4222
    %v4625 = vunpack.c.l.b16 %v4223
    %v4626 = vunpack.c.h.b16 %v4223
    %v4627 = vunpack.c.l.b16 %v4224
    %v4628 = vunpack.c.h.b16 %v4224
    %v4629 = vunpack.c.l.b16 %v4225
    %v4630 = vunpack.c.h.b16 %v4225
    %v4631 = vunpack.c.l.b16 %v4226
    %v4632 = vunpack.c.h.b16 %v4226
    %v4633 = vunpack.c.l.b16 %v4227
    %v4634 = vunpack.c.h.b16 %v4227
    %v4635 = vpack.c.b16 %v4573, %v4571
    %v4636 = vpack.c.b16 %v4574, %v4572
    %v4637 = vpack.c.b16 %v4577, %v4575
    %v4638 = vpack.c.b16 %v4578, %v4576
    %v4639 = vpack.c.b16 %v4581, %v4579
    %v4640 = vpack.c.b16 %v4582, %v4580
    %v4641 = vpack.c.b16 %v4585, %v4583
    %v4642 = vpack.c.b16 %v4586, %v4584
    %v4643 = vpack.c.b16 %v4589, %v4587
    %v4644 = vpack.c.b16 %v4590, %v4588
    %v4645 = vpack.c.b16 %v4593, %v4591
    %v4646 = vpack.c.b16 %v4594, %v4592
    %v4647 = vpack.c.b16 %v4597, %v4595
    %v4648 = vpack.c.b16 %v4598, %v4596
    %v4649 = vpack.c.b16 %v4601, %v4599
    %v4650 = vpack.c.b16 %v4602, %v4600
    %v4651 = vpack.c.b16 %v4605, %v4603
    %v4652 = vpack.c.b16 %v4606, %v4604
    %v4653 = vpack.c.b16 %v4609, %v4607
    %v4654 = vpack.c.b16 %v4610, %v4608
    %v4655 = vpack.c.b16 %v4613, %v4611
    %v4656 = vpack.c.b16 %v4614, %v4612
    %v4657 = vpack.c.b16 %v4617, %v4615
    %v4658 = vpack.c.b16 %v4618, %v4616
    %v4659 = vpack.c.b16 %v4621, %v4619
    %v4660 = vpack.c.b16 %v4622, %v4620
    %v4661 = vpack.c.b16 %v4625, %v4623
    %v4662 = vpack.c.b16 %v4626, %v4624
    %v4663 = vpack.c.b16 %v4629, %v4627
    %v4664 = vpack.c.b16 %v4630, %v4628
    %v4665 = vpack.c.b16 %v4633, %v4631
    %v4666 = vpack.c.b16 %v4634, %v4632
    %4699 = vmatprep.subr.bf16.mxu0 %v4636
    %4700 = vmatpush1.bf16.msra.mxu0 %v4635
    %4701 = vmatprep.subr.bf16.mxu0 %v4638
    %4702 = vmatpush1.bf16.msra.mxu0 %v4637
    %4703 = vmatprep.subr.bf16.mxu0 %v4640
    %4704 = vmatpush1.bf16.msra.mxu0 %v4639
    %4705 = vmatprep.subr.bf16.mxu0 %v4642
    %4706 = vmatpush1.bf16.msra.mxu0 %v4641
    %4707 = vmatprep.subr.bf16.mxu0 %v4644
    %4708 = vmatpush1.bf16.msra.mxu0 %v4643
    %4709 = vmatprep.subr.bf16.mxu0 %v4646
    %4710 = vmatpush1.bf16.msra.mxu0 %v4645
    %4711 = vmatprep.subr.bf16.mxu0 %v4648
    %4712 = vmatpush1.bf16.msra.mxu0 %v4647
    %4713 = vmatprep.subr.bf16.mxu0 %v4650
    %4714 = vmatpush1.bf16.msra.mxu0 %v4649
    %4715 = vmatprep.subr.bf16.mxu0 %v4652
    %4716 = vmatpush1.bf16.msra.mxu0 %v4651
    %4717 = vmatprep.subr.bf16.mxu0 %v4654
    %4718 = vmatpush1.bf16.msra.mxu0 %v4653
    %4719 = vmatprep.subr.bf16.mxu0 %v4656
    %4720 = vmatpush1.bf16.msra.mxu0 %v4655
    %4721 = vmatprep.subr.bf16.mxu0 %v4658
    %4722 = vmatpush1.bf16.msra.mxu0 %v4657
    %4723 = vmatprep.subr.bf16.mxu0 %v4660
    %4724 = vmatpush1.bf16.msra.mxu0 %v4659
    %4725 = vmatprep.subr.bf16.mxu0 %v4662
    %4726 = vmatpush1.bf16.msra.mxu0 %v4661
    %4727 = vmatprep.subr.bf16.mxu0 %v4664
    %4728 = vmatpush1.bf16.msra.mxu0 %v4663
    %4729 = vmatprep.subr.bf16.mxu0 %v4666
    %4730 = vmatpush1.bf16.msra.mxu0 %v4665
    %4731 = vmatprep.mubr.bf16.mxu0 %v4536
    %4732 = vmatmul.mubr.bf16.gmra.mrb[0].mxu0 %v4535
    %v4733 = vpop.f32.mrb[0].mxu0
    %v4734 = vadd.f32 %v4516, %v4733
    %v4735 = vpop.f32.mrb[0].mxu0
    %v4736 = vadd.f32 %v4520, %v4735
    %v4737 = vpop.f32.mrb[0].mxu0
    %v4738 = vpop.f32.mrb[0].mxu0
    %4739 = vdwg.mxu0
    %v4740 = vmax.f32 %v4734, 0.0
    %v4741 = vmax.f32 %v4736, 0.0
    %v4742 = vpack.c.bf16 %v4740, %v4740
    %v4743 = vpack.c.bf16 %v4741, %v4741
    %v4745 = vlaneseq
    %v4746 = vshrl.u32 %v4745, 7
    %v4747 = vsub.s32 0, %v4746
    %v4748 = vrot.slane %v4262, %v4747
    %v4782 = vunpack.c.l.b16 %v4228
    %v4783 = vunpack.c.l.b16 %v4229
    %v4784 = vunpack.c.l.b16 %v4230
    %v4785 = vunpack.c.l.b16 %v4231
    %v4786 = vunpack.c.l.b16 %v4232
    %v4787 = vunpack.c.l.b16 %v4233
    %v4788 = vunpack.c.l.b16 %v4234
    %v4789 = vunpack.c.l.b16 %v4235
    %v4790 = vunpack.c.l.b16 %v4236
    %v4791 = vunpack.c.l.b16 %v4237
    %v4792 = vunpack.c.l.b16 %v4238
    %v4793 = vunpack.c.l.b16 %v4239
    %v4794 = vunpack.c.l.b16 %v4240
    %v4795 = vunpack.c.l.b16 %v4241
    %v4796 = vunpack.c.l.b16 %v4242
    %v4797 = vunpack.c.l.b16 %v4243
    %v4798 = vunpack.c.l.b16 %v4244
    %v4799 = vunpack.c.l.b16 %v4245
    %v4800 = vunpack.c.l.b16 %v4246
    %v4801 = vunpack.c.l.b16 %v4247
    %v4802 = vunpack.c.l.b16 %v4248
    %v4803 = vunpack.c.l.b16 %v4249
    %v4804 = vunpack.c.l.b16 %v4250
    %v4805 = vunpack.c.l.b16 %v4251
    %v4806 = vunpack.c.l.b16 %v4252
    %v4807 = vunpack.c.l.b16 %v4253
    %v4808 = vunpack.c.l.b16 %v4254
    %v4809 = vunpack.c.l.b16 %v4255
    %v4810 = vunpack.c.l.b16 %v4256
    %v4811 = vunpack.c.l.b16 %v4257
    %v4812 = vunpack.c.l.b16 %v4258
    %v4813 = vunpack.c.l.b16 %v4259
    %v4814 = vpack.c.b16 %v4783, %v4782
    %v4815 = vpack.c.b16 %v4785, %v4784
    %v4816 = vpack.c.b16 %v4787, %v4786
    %v4817 = vpack.c.b16 %v4789, %v4788
    %v4818 = vpack.c.b16 %v4791, %v4790
    %v4819 = vpack.c.b16 %v4793, %v4792
    %v4820 = vpack.c.b16 %v4795, %v4794
    %v4821 = vpack.c.b16 %v4797, %v4796
    %v4822 = vpack.c.b16 %v4799, %v4798
    %v4823 = vpack.c.b16 %v4801, %v4800
    %v4824 = vpack.c.b16 %v4803, %v4802
    %v4825 = vpack.c.b16 %v4805, %v4804
    %v4826 = vpack.c.b16 %v4807, %v4806
    %v4827 = vpack.c.b16 %v4809, %v4808
    %v4828 = vpack.c.b16 %v4811, %v4810
    %v4829 = vpack.c.b16 %v4813, %v4812
    %4846 = vmatprep.subr.bf16.mxu0 0
    %4847 = vmatpush1.bf16.msra.mxu0 %v4814
    %4848 = vmatprep.subr.bf16.mxu0 0
    %4849 = vmatpush1.bf16.msra.mxu0 %v4815
    %4850 = vmatprep.subr.bf16.mxu0 0
    %4851 = vmatpush1.bf16.msra.mxu0 %v4816
    %4852 = vmatprep.subr.bf16.mxu0 0
    %4853 = vmatpush1.bf16.msra.mxu0 %v4817
    %4854 = vmatprep.subr.bf16.mxu0 0
    %4855 = vmatpush1.bf16.msra.mxu0 %v4818
    %4856 = vmatprep.subr.bf16.mxu0 0
    %4857 = vmatpush1.bf16.msra.mxu0 %v4819
    %4858 = vmatprep.subr.bf16.mxu0 0
    %4859 = vmatpush1.bf16.msra.mxu0 %v4820
    %4860 = vmatprep.subr.bf16.mxu0 0
    %4861 = vmatpush1.bf16.msra.mxu0 %v4821
    %4862 = vmatprep.subr.bf16.mxu0 0
    %4863 = vmatpush1.bf16.msra.mxu0 %v4822
    %4864 = vmatprep.subr.bf16.mxu0 0
    %4865 = vmatpush1.bf16.msra.mxu0 %v4823
    %4866 = vmatprep.subr.bf16.mxu0 0
    %4867 = vmatpush1.bf16.msra.mxu0 %v4824
    %4868 = vmatprep.subr.bf16.mxu0 0
    %4869 = vmatpush1.bf16.msra.mxu0 %v4825
    %4870 = vmatprep.subr.bf16.mxu0 0
    %4871 = vmatpush1.bf16.msra.mxu0 %v4826
    %4872 = vmatprep.subr.bf16.mxu0 0
    %4873 = vmatpush1.bf16.msra.mxu0 %v4827
    %4874 = vmatprep.subr.bf16.mxu0 0
    %4875 = vmatpush1.bf16.msra.mxu0 %v4828
    %4876 = vmatprep.subr.bf16.mxu0 0
    %4877 = vmatpush1.bf16.msra.mxu0 %v4829
    %4878 = vmatprep.mubr.bf16.mxu0 %v4743
    %4879 = vmatmul.mubr.bf16.gmra.mrb[0].mxu0 %v4742
    %v4880 = vpop.f32.mrb[0].mxu0
    %v4881 = vadd.f32 %v4748, %v4880
    %v4882 = vpop.f32.mrb[0].mxu0
    %v4883 = vpop.f32.mrb[0].mxu0
    %v4884 = vpop.f32.mrb[0].mxu0
    %4885 = vdwg.mxu0
    %4886 = vst [vmem:[#allocation2] sm:$0x3] %v4881
    %v4887 = vmul.f32 %v3985, 0.125
    %v4888 = vmul.f32 %v3986, 0.125
    %v4889 = vmul.f32 %v3987, 0.125
    %v4890 = vmul.f32 %v3988, 0.125
    %4891 = vst.msk [vmem:[#allocation4] sm:$0xff] %vm2072, %v4887
    %4892 = vst.msk [vmem:[#allocation4 + $0x8] sm:$0xff] %vm2072, %v4888
    %4893 = vst.msk [vmem:[#allocation4 + $0x10] sm:$0xff] %vm2072, %v4889
    %4894 = vst.msk [vmem:[#allocation4 + $0x18] sm:$0xff] %vm2072, %v4890
    // Predicated region
    $region46: #{financial_cnn_forward.1} parent=1 // pred_check
      _
    $region47: #{financial_cnn_forward.1} parent=1 // pred_check_branch
      %4896 = sbr.rel (0) target = $region49
    $region48: #{financial_cnn_forward.1} parent=1 // pred_region
      %s4898 = ssub.s32 32, 32
      %4899 = vsyncadd [#allocation3], %s4898
      %s4901 = sshll.u32 [#allocation2], 4
      %s4902 = int_to_ptr.vmem [resolvable:$true] %s4901
      %4904 = dma.vmem_to_hbm [thread:$0]  %s4902, 32, %s11, [#allocation3]
    $region49: #{financial_cnn_forward.1} parent=1 // pred_fallthru
      _
    // Predicated region
    $region50: #{financial_cnn_forward.1} parent=1 // pred_check
      _
    $region51: #{financial_cnn_forward.1} parent=1 // pred_check_branch
      %4906 = sbr.rel (0) target = $region53
    $region52: #{financial_cnn_forward.1} parent=1 // pred_region
      %s4908 = ssub.s32 512, 512
      %4909 = vsyncadd [#allocation5], %s4908
      %s4910 = sshll.u32 [#allocation4], 4
      %s4911 = int_to_ptr.vmem [resolvable:$true] %s4910
      %4916 = dma.vmem_to_hbm [thread:$0]  %s4911, 512, %s12, [#allocation5], 128, 128, 8
    $region53: #{financial_cnn_forward.1} parent=1 // pred_fallthru
      _
    // Predicated region
    $region54: #{financial_cnn_forward.1} parent=1 // pred_check
      _
    $region55: #{financial_cnn_forward.1} parent=1 // pred_check_branch
      %4918 = sbr.rel (0) target = $region57
    $region56: #{financial_cnn_forward.1} parent=1 // pred_region
      %4919 = dma.done [#allocation3], 32
    $region57: #{financial_cnn_forward.1} parent=1 // pred_fallthru
      _
    // Predicated region
    $region58: #{financial_cnn_forward.1} parent=1 // pred_check
      _
    $region59: #{financial_cnn_forward.1} parent=1 // pred_check_branch
      %4921 = sbr.rel (0) target = $region61
    $region60: #{financial_cnn_forward.1} parent=1 // pred_region
      %4922 = dma.done [#allocation5], 512
    $region61: #{financial_cnn_forward.1} parent=1 // pred_fallthru
      _
    %4923 = vsyncpa [#allocation3], 1
    %4924 = vsyncpa [#allocation5], 1

</llo_original>
